<compile_context>
chip_gen: v7x
topology: tpu7x:2x2x1
jax: 0.10.0
libtpu: 0.0.40
codegen_flags: <defaults>
</compile_context>

<pallas_src>
import jax
import jax.numpy as jnp
from jax.experimental import pallas as pl
from jax.experimental.pallas import tpu as pltpu

_PAD_OFF = 128       # lane offset of the image inside the halo scratch (aligned)
_LRELU_SLOPE = 0.1   # nn.LeakyReLU(0.1) in the module


# ----------------------------------------------------------------------------
# In-kernel building blocks
# ----------------------------------------------------------------------------
def _conv3x3(x, w_parts, scale, bias, *, H, W, mask_l, mask_r, xpf_ref):
    """3x3 conv (padding=1) + folded-BN affine + LeakyReLU, pixels-on-lane.

    x       : (Cin, H*W) f32 value
    w_parts : tuple of 3 values, w_parts[dy] has shape (Cout, 3*Cin) with
              column = dx*Cin + ci
    scale   : (Cout, 1) folded BN scale;  bias: (Cout, 1) folded bias
    mask_l/r: (1, H*W) bool masks for the horizontal wrap of the flat layout
    xpf_ref : VMEM halo scratch (pre-zeroed once per kernel invocation)
    returns : (Cout, H*W) f32
    """
    C = x.shape[0]
    HW = H * W

    # Drop the image into the zero halo; re-zero only the small trailing strip
    # that a previous (larger) image may have dirtied.  The leading halo
    # [_PAD_OFF - W - 1, _PAD_OFF) is never written, so it stays zero.
    xpf_ref[0:C, _PAD_OFF:_PAD_OFF + HW] = x
    xpf_ref[0:C, _PAD_OFF + HW:_PAD_OFF + HW + W + 1] = (
        jnp.zeros((C, W + 1), jnp.float32))

    acc = None
    for dy in range(3):
        taps = []
        for dx in range(3):
            off = _PAD_OFF + (dy - 1) * W + (dx - 1)
            t = xpf_ref[0:C, off:off + HW]          # static lane-shifted slice
            if dx == 0:
                t = jnp.where(mask_l, t, 0.0)
            elif dx == 2:
                t = jnp.where(mask_r, t, 0.0)
            taps.append(t)
        p_dy = jnp.concatenate(taps, axis=0)        # (3*Cin, H*W)
        part = jnp.dot(w_parts[dy], p_dy, preferred_element_type=jnp.float32)
        acc = part if acc is None else acc + part

    y = acc * scale + bias                          # folded BatchNorm
    return jnp.where(y > 0, y, _LRELU_SLOPE * y)    # LeakyReLU(0.1)


def _make_kernel(scale_dims):
    """Fused YOLO-head kernel for the given per-scale (H, W) list."""
    n = len(scale_dims)

    def kernel(*refs):
        feats = refs[0:n]
        (dw1, ds1, db1, dw2, db2,
         sw1, ss1, sb1, sw2, ss2, sb2, sw3, sb3) = refs[n:n + 13]
        interps = refs[n + 13:2 * n + 12]
        det_outs = refs[2 * n + 12:3 * n + 12]
        seg_out = refs[3 * n + 12]
        xpf = refs[3 * n + 13]

        # Zero the whole halo scratch once per batch element.
        xpf[...] = jnp.zeros_like(xpf)

        # Hoist all weight / affine loads: VMEM -> vregs once, reused by every
        # scale (the detection head shares weights across scales).
        DW1 = tuple(dw1[d] for d in range(3))
        DS1, DB1 = ds1[...], db1[...]
        DW2, DB2 = dw2[...], db2[...]
        SW1 = tuple(sw1[d] for d in range(3))
        SS1, SB1 = ss1[...], sb1[...]
        SW2 = tuple(sw2[d] for d in range(3))
        SS2, SB2 = ss2[...], sb2[...]
        SW3, SB3 = sw3[...], sb3[...]

        # Border masks of the flattened layout, built once per resolution.
        mask_cache = {}

        def masks(H, W):
            if (H, W) not in mask_cache:
                lane = jax.lax.broadcasted_iota(jnp.int32, (1, H * W), 1)
                col = lane % W
                mask_cache[(H, W)] = (col > 0, col < (W - 1))
            return mask_cache[(H, W)]

        # ---------------- detection head (shared weights, every scale) -------
        for idx, (H, W) in enumerate(scale_dims):
            ml, mr = masks(H, W)
            x = feats[idx][...]
            h = _conv3x3(x, DW1, DS1, DB1, H=H, W=W,
                         mask_l=ml, mask_r=mr, xpf_ref=xpf)
            y = jnp.dot(DW2, h, preferred_element_type=jnp.float32) + DB2
            det_outs[idx][...] = y.astype(det_outs[idx].dtype)

        # ---------------- segmentation head ----------------------------------
        H0, W0 = scale_dims[0]
        pieces = [feats[0][...]]
        for idx in range(1, n):
            # bilinear upsample (align_corners=False) as an MXU matmul
            up = jnp.dot(feats[idx][...], interps[idx - 1][...],
                         preferred_element_type=jnp.float32)
            pieces.append(up)
        seg_in = jnp.concatenate(pieces, axis=0)            # (4*in_dim, H0*W0)

        ml0, mr0 = masks(H0, W0)
        s1 = _conv3x3(seg_in, SW1, SS1, SB1, H=H0, W=W0,
                      mask_l=ml0, mask_r=mr0, xpf_ref=xpf)
        s2 = _conv3x3(s1, SW2, SS2, SB2, H=H0, W=W0,
                      mask_l=ml0, mask_r=mr0, xpf_ref=xpf)
        y = jnp.dot(SW3, s2, preferred_element_type=jnp.float32) + SB3
        seg_out[...] = y.astype(seg_out.dtype)

    return kernel


# ----------------------------------------------------------------------------
# Wrapper-side constant construction (pure JAX, tiny)
# ----------------------------------------------------------------------------
def _interp_rows(out_size, in_size):
    """Row weights of F.interpolate(mode='bilinear', align_corners=False)."""
    o = jnp.arange(out_size, dtype=jnp.float32)
    src = jnp.clip((o + 0.5) * (in_size / out_size) - 0.5, 0.0, in_size - 1.0)
    i0 = jnp.floor(src).astype(jnp.int32)
    i1 = jnp.minimum(i0 + 1, in_size - 1)
    f = src - i0.astype(jnp.float32)
    return (jax.nn.one_hot(i0, in_size, dtype=jnp.float32) * (1.0 - f)[:, None]
            + jax.nn.one_hot(i1, in_size, dtype=jnp.float32) * f[:, None])


def _interp_matrix_t(h_in, w_in, h_out, w_out):
    ah = _interp_rows(h_out, h_in)            # (h_out, h_in)
    aw = _interp_rows(w_out, w_in)            # (w_out, w_in)
    m = jnp.kron(ah, aw)                      # (h_out*w_out, h_in*w_in)
    return m.T                                # x_flat(C, HinWin) @ m.T -> (C, HoutWout)


def _fold_bn(conv_b, gamma, beta, mean, var, eps=1e-5):
    s = gamma / jnp.sqrt(var + eps)
    b = s * (conv_b - mean) + beta
    return (s.reshape(-1, 1).astype(jnp.float32),
            b.reshape(-1, 1).astype(jnp.float32))


def _w3x3(w):
    # PyTorch OIHW (Cout, Cin, 3, 3) -> (3, Cout, 3*Cin),
    # out[dy, co, dx*Cin + ci] = w[co, ci, dy, dx]
    co, ci = w.shape[0], w.shape[1]
    return jnp.transpose(w, (2, 0, 3, 1)).reshape(3, co, 3 * ci).astype(jnp.float32)


def _w1x1(w):
    # PyTorch (Cout, Cin, 1, 1) -> (Cout, Cin)
    return w.reshape(w.shape[0], w.shape[1]).astype(jnp.float32)


def _prepare_params(p):
    out = {}
    out["det_w1"] = _w3x3(p["det_conv1_w"])
    out["det_scale1"], out["det_bias1"] = _fold_bn(p["det_conv1_b"], *p["det_bn1"])
    out["det_w2"] = _w1x1(p["det_conv2_w"])
    out["det_b2"] = p["det_conv2_b"].reshape(-1, 1).astype(jnp.float32)
    out["seg_w1"] = _w3x3(p["seg_conv1_w"])
    out["seg_scale1"], out["seg_bias1"] = _fold_bn(p["seg_conv1_b"], *p["seg_bn1"])
    out["seg_w2"] = _w3x3(p["seg_conv2_w"])
    out["seg_scale2"], out["seg_bias2"] = _fold_bn(p["seg_conv2_b"], *p["seg_bn2"])
    out["seg_w3"] = _w1x1(p["seg_conv3_w"])
    out["seg_b3"] = p["seg_conv3_b"].reshape(-1, 1).astype(jnp.float32)
    return out


# ----------------------------------------------------------------------------
# YOLOHead forward (single fused pallas_call)
# ----------------------------------------------------------------------------
def yolo_head_forward(features, params, num_classes, anchors_per_scale):
    scales = list(features.keys())
    assert scales[0] == "p1", "p1 (segmentation target) must be the first scale"
    n = len(scales)
    num_outputs = 5 + num_classes + 1
    det_ch = anchors_per_scale * num_outputs

    B, in_dim = features[scales[0]].shape[:2]
    dims = [tuple(features[s].shape[2:]) for s in scales]      # [(H, W), ...]
    H0, W0 = dims[0]
    assert _PAD_OFF >= max(w for (_, w) in dims) + 1

    # NCHW -> (B, C, H*W): a free reshape, no transpose; pixels land on lanes.
    flat = [features[s].reshape(B, in_dim, h * w)
            for s, (h, w) in zip(scales, dims)]
    interps = [_interp_matrix_t(h, w, H0, W0) for (h, w) in dims[1:]]
    prm = _prepare_params(params)

    weight_args = [prm["det_w1"], prm["det_scale1"], prm["det_bias1"],
                   prm["det_w2"], prm["det_b2"],
                   prm["seg_w1"], prm["seg_scale1"], prm["seg_bias1"],
                   prm["seg_w2"], prm["seg_scale2"], prm["seg_bias2"],
                   prm["seg_w3"], prm["seg_b3"]]
    inputs = flat + weight_args + interps

    def batched_spec(c, hw):
        return pl.BlockSpec((None, c, hw), lambda b: (b, 0, 0))

    def const_spec(arr):
        nd = arr.ndim
        return pl.BlockSpec(arr.shape, lambda b, nd=nd: (0,) * nd)

    in_specs = ([batched_spec(in_dim, h * w) for (h, w) in dims]
                + [const_spec(a) for a in weight_args + interps])

    out_shape = tuple(
        [jax.ShapeDtypeStruct((B, det_ch, h * w), jnp.float32)
         for (h, w) in dims]
        + [jax.ShapeDtypeStruct((B, num_classes, H0 * W0), jnp.float32)])
    out_specs = tuple(
        [batched_spec(det_ch, h * w) for (h, w) in dims]
        + [batched_spec(num_classes, H0 * W0)])

    # Halo scratch: enough sublanes for the 4*in_dim seg concat, enough lanes
    # for the largest scale plus its halo window.
    c_max = -(-max(n * in_dim, in_dim) // 8) * 8
    lanes_needed = max(_PAD_OFF + h * w + w + 1 for (h, w) in dims)
    lanes = -(-lanes_needed // 128) * 128

    outs = pl.pallas_call(
        _make_kernel(dims),
        grid=(B,),
        in_specs=in_specs,
        out_specs=out_specs,
        out_shape=out_shape,
        scratch_shapes=[pltpu.VMEM((c_max, lanes), jnp.float32)],
        compiler_params=pltpu.CompilerParams(
            dimension_semantics=("parallel",)),   # batch blocks -> both v7x TCs
    )(*inputs)

    detection_outputs = {}
    for s, (h, w), d in zip(scales, dims, outs[:n]):
        # Matches PyTorch: view(B, A, num_outputs, H, W).permute(0, 3, 4, 1, 2)
        d = d.reshape(B, anchors_per_scale, num_outputs, h, w)
        detection_outputs[s] = jnp.transpose(d, (0, 3, 4, 1, 2))
    seg_output = outs[n].reshape(B, num_classes, H0, W0)       # already NCHW
    return detection_outputs, seg_output


# ----------------------------------------------------------------------------
# Deterministic synthetic parameters (PyTorch layouts: OIHW conv weights)
# ----------------------------------------------------------------------------
def make_params(key, in_dim, num_classes, anchors_per_scale):
    num_outputs = 5 + num_classes + 1
    det_out = anchors_per_scale * num_outputs
    keys = jax.random.split(key, 32)
    ki = iter(keys)

    def w(shape):
        return jax.random.normal(next(ki), shape, jnp.float32) * 0.1

    def bn(c):
        return (jax.random.uniform(next(ki), (c,), jnp.float32, 0.5, 1.5),   # gamma
                jax.random.normal(next(ki), (c,), jnp.float32) * 0.1,        # beta
                jax.random.normal(next(ki), (c,), jnp.float32) * 0.1,        # mean
                jax.random.uniform(next(ki), (c,), jnp.float32, 0.5, 1.5))   # var

    return {
        "det_conv1_w": w((in_dim, in_dim, 3, 3)),
        "det_conv1_b": w((in_dim,)),
        "det_bn1": bn(in_dim),
        "det_conv2_w": w((det_out, in_dim, 1, 1)),
        "det_conv2_b": w((det_out,)),
        "seg_conv1_w": w((in_dim, 4 * in_dim, 3, 3)),
        "seg_conv1_b": w((in_dim,)),
        "seg_bn1": bn(in_dim),
        "seg_conv2_w": w((in_dim // 2, in_dim, 3, 3)),
        "seg_conv2_b": w((in_dim // 2,)),
        "seg_bn2": bn(in_dim // 2),
        "seg_conv3_w": w((num_classes, in_dim // 2, 1, 1)),
        "seg_conv3_b": w((num_classes,)),
    }


# ----------------------------------------------------------------------------
# main
# ----------------------------------------------------------------------------
if __name__ == "__main__":
    B = 2
    in_dim = 8
    num_classes = 4
    anchors_per_scale = 3
    num_outputs = 5 + num_classes + 1

    key = jax.random.PRNGKey(0)
    k_p, k1, k2, k3, k4 = jax.random.split(key, 5)

    # FPN features (NCHW, like PyTorch). 4 scales so seg concat has 4*in_dim ch.
    features = {
        "p1": jax.random.normal(k1, (B, in_dim, 16, 16), jnp.float32),
        "p2": jax.random.normal(k2, (B, in_dim, 8, 8), jnp.float32),
        "p3": jax.random.normal(k3, (B, in_dim, 4, 4), jnp.float32),
        "p4": jax.random.normal(k4, (B, in_dim, 2, 2), jnp.float32),
    }
    params = make_params(k_p, in_dim, num_classes, anchors_per_scale)

    det_out, seg_out = yolo_head_forward(features, params, num_classes,
                                         anchors_per_scale)
    jax.block_until_ready(seg_out)
    for v in det_out.values():
        jax.block_until_ready(v)

    # Shape sanity checks vs PyTorch semantics.
    assert det_out["p1"].shape == (B, 16, 16, anchors_per_scale, num_outputs)
    assert det_out["p4"].shape == (B, 2, 2, anchors_per_scale, num_outputs)
    assert seg_out.shape == (B, num_classes, 16, 16)

    print("KERNEL_OK")
</pallas_src>

<mosaic_0001>
module attributes {stable_mosaic.version = 11 : i64} {
  func.func @kernel(%arg0: i32, %arg1: memref<1x8x256xf32, #tpu.memory_space<vmem>>, %arg2: memref<1x8x64xf32, #tpu.memory_space<vmem>>, %arg3: memref<1x8x16xf32, #tpu.memory_space<vmem>>, %arg4: memref<1x8x4xf32, #tpu.memory_space<vmem>>, %arg5: memref<3x8x24xf32, #tpu.memory_space<vmem>>, %arg6: memref<8x1xf32, #tpu.memory_space<vmem>>, %arg7: memref<8x1xf32, #tpu.memory_space<vmem>>, %arg8: memref<30x8xf32, #tpu.memory_space<vmem>>, %arg9: memref<30x1xf32, #tpu.memory_space<vmem>>, %arg10: memref<3x8x96xf32, #tpu.memory_space<vmem>>, %arg11: memref<8x1xf32, #tpu.memory_space<vmem>>, %arg12: memref<8x1xf32, #tpu.memory_space<vmem>>, %arg13: memref<3x4x24xf32, #tpu.memory_space<vmem>>, %arg14: memref<4x1xf32, #tpu.memory_space<vmem>>, %arg15: memref<4x1xf32, #tpu.memory_space<vmem>>, %arg16: memref<4x4xf32, #tpu.memory_space<vmem>>, %arg17: memref<4x1xf32, #tpu.memory_space<vmem>>, %arg18: memref<64x256xf32, #tpu.memory_space<vmem>>, %arg19: memref<16x256xf32, #tpu.memory_space<vmem>>, %arg20: memref<4x256xf32, #tpu.memory_space<vmem>>, %arg21: memref<1x30x256xf32, #tpu.memory_space<vmem>>, %arg22: memref<1x30x64xf32, #tpu.memory_space<vmem>>, %arg23: memref<1x30x16xf32, #tpu.memory_space<vmem>>, %arg24: memref<1x30x4xf32, #tpu.memory_space<vmem>>, %arg25: memref<1x4x256xf32, #tpu.memory_space<vmem>>, %arg26: memref<32x512xf32, #tpu.memory_space<vmem>>) attributes {dimension_semantics = [#tpu.dimension_semantics<parallel>], iteration_bounds = array<i64: 2>, scalar_prefetch = 0 : i64, scratch_operands = 1 : i64, tpu.core_type = #tpu.core_type<tc>, window_params = [{transform_indices = @transform_0, window_bounds = array<i64: 1, 8, 256>}, {transform_indices = @transform_1, window_bounds = array<i64: 1, 8, 64>}, {transform_indices = @transform_2, window_bounds = array<i64: 1, 8, 16>}, {transform_indices = @transform_3, window_bounds = array<i64: 1, 8, 4>}, {pipeline_mode = #tpu.pipeline_mode<synchronous>, transform_indices = @transform_4, window_bounds = array<i64: 3, 8, 24>}, {pipeline_mode = #tpu.pipeline_mode<synchronous>, transform_indices = @transform_5, window_bounds = array<i64: 8, 1>}, {pipeline_mode = #tpu.pipeline_mode<synchronous>, transform_indices = @transform_6, window_bounds = array<i64: 8, 1>}, {pipeline_mode = #tpu.pipeline_mode<synchronous>, transform_indices = @transform_7, window_bounds = array<i64: 30, 8>}, {pipeline_mode = #tpu.pipeline_mode<synchronous>, transform_indices = @transform_8, window_bounds = array<i64: 30, 1>}, {pipeline_mode = #tpu.pipeline_mode<synchronous>, transform_indices = @transform_9, window_bounds = array<i64: 3, 8, 96>}, {pipeline_mode = #tpu.pipeline_mode<synchronous>, transform_indices = @transform_10, window_bounds = array<i64: 8, 1>}, {pipeline_mode = #tpu.pipeline_mode<synchronous>, transform_indices = @transform_11, window_bounds = array<i64: 8, 1>}, {pipeline_mode = #tpu.pipeline_mode<synchronous>, transform_indices = @transform_12, window_bounds = array<i64: 3, 4, 24>}, {pipeline_mode = #tpu.pipeline_mode<synchronous>, transform_indices = @transform_13, window_bounds = array<i64: 4, 1>}, {pipeline_mode = #tpu.pipeline_mode<synchronous>, transform_indices = @transform_14, window_bounds = array<i64: 4, 1>}, {pipeline_mode = #tpu.pipeline_mode<synchronous>, transform_indices = @transform_15, window_bounds = array<i64: 4, 4>}, {pipeline_mode = #tpu.pipeline_mode<synchronous>, transform_indices = @transform_16, window_bounds = array<i64: 4, 1>}, {pipeline_mode = #tpu.pipeline_mode<synchronous>, transform_indices = @transform_17, window_bounds = array<i64: 64, 256>}, {pipeline_mode = #tpu.pipeline_mode<synchronous>, transform_indices = @transform_18, window_bounds = array<i64: 16, 256>}, {pipeline_mode = #tpu.pipeline_mode<synchronous>, transform_indices = @transform_19, window_bounds = array<i64: 4, 256>}, {transform_indices = @transform_20, window_bounds = array<i64: 1, 30, 256>}, {transform_indices = @transform_21, window_bounds = array<i64: 1, 30, 64>}, {transform_indices = @transform_22, window_bounds = array<i64: 1, 30, 16>}, {transform_indices = @transform_23, window_bounds = array<i64: 1, 30, 4>}, {transform_indices = @transform_24, window_bounds = array<i64: 1, 4, 256>}]} {
    %cst = arith.constant 0.000000e+00 : f32
    %0 = vector.broadcast %cst : f32 to vector<32x512xf32>
    %c0 = arith.constant 0 : index
    %c0_0 = arith.constant 0 : index
    %1 = vector.load %arg26[%c0, %c0_0] : memref<32x512xf32, #tpu.memory_space<vmem>>, vector<32x512xf32>
    tpu.vector_store %arg26[%c0, %c0_0], %0 {strides = array<i32>} : memref<32x512xf32, #tpu.memory_space<vmem>>, vector<32x512xf32>,
    %c0_1 = arith.constant 0 : index
    %c0_2 = arith.constant 0 : index
    %c0_3 = arith.constant 0 : index
    %2 = vector.load %arg5[%c0_1, %c0_2, %c0_3] : memref<3x8x24xf32, #tpu.memory_space<vmem>>, vector<1x8x24xf32>
    %3 = vector.shape_cast %2 : vector<1x8x24xf32> to vector<8x24xf32>
    %c1 = arith.constant 1 : index
    %c0_4 = arith.constant 0 : index
    %c0_5 = arith.constant 0 : index
    %4 = vector.load %arg5[%c1, %c0_4, %c0_5] : memref<3x8x24xf32, #tpu.memory_space<vmem>>, vector<1x8x24xf32>
    %5 = vector.shape_cast %4 : vector<1x8x24xf32> to vector<8x24xf32>
    %c2 = arith.constant 2 : index
    %c0_6 = arith.constant 0 : index
    %c0_7 = arith.constant 0 : index
    %6 = vector.load %arg5[%c2, %c0_6, %c0_7] : memref<3x8x24xf32, #tpu.memory_space<vmem>>, vector<1x8x24xf32>
    %7 = vector.shape_cast %6 : vector<1x8x24xf32> to vector<8x24xf32>
    %c0_8 = arith.constant 0 : index
    %c0_9 = arith.constant 0 : index
    %8 = vector.load %arg6[%c0_8, %c0_9] : memref<8x1xf32, #tpu.memory_space<vmem>>, vector<8x1xf32>
    %c0_10 = arith.constant 0 : index
    %c0_11 = arith.constant 0 : index
    %9 = vector.load %arg7[%c0_10, %c0_11] : memref<8x1xf32, #tpu.memory_space<vmem>>, vector<8x1xf32>
    %c0_12 = arith.constant 0 : index
    %c0_13 = arith.constant 0 : index
    %10 = vector.load %arg8[%c0_12, %c0_13] : memref<30x8xf32, #tpu.memory_space<vmem>>, vector<30x8xf32>
    %c0_14 = arith.constant 0 : index
    %c0_15 = arith.constant 0 : index
    %11 = vector.load %arg9[%c0_14, %c0_15] : memref<30x1xf32, #tpu.memory_space<vmem>>, vector<30x1xf32>
    %c0_16 = arith.constant 0 : index
    %c0_17 = arith.constant 0 : index
    %c0_18 = arith.constant 0 : index
    %12 = vector.load %arg10[%c0_16, %c0_17, %c0_18] : memref<3x8x96xf32, #tpu.memory_space<vmem>>, vector<1x8x96xf32>
    %13 = vector.shape_cast %12 : vector<1x8x96xf32> to vector<8x96xf32>
    %c1_19 = arith.constant 1 : index
    %c0_20 = arith.constant 0 : index
    %c0_21 = arith.constant 0 : index
    %14 = vector.load %arg10[%c1_19, %c0_20, %c0_21] : memref<3x8x96xf32, #tpu.memory_space<vmem>>, vector<1x8x96xf32>
    %15 = vector.shape_cast %14 : vector<1x8x96xf32> to vector<8x96xf32>
    %c2_22 = arith.constant 2 : index
    %c0_23 = arith.constant 0 : index
    %c0_24 = arith.constant 0 : index
    %16 = vector.load %arg10[%c2_22, %c0_23, %c0_24] : memref<3x8x96xf32, #tpu.memory_space<vmem>>, vector<1x8x96xf32>
    %17 = vector.shape_cast %16 : vector<1x8x96xf32> to vector<8x96xf32>
    %c0_25 = arith.constant 0 : index
    %c0_26 = arith.constant 0 : index
    %18 = vector.load %arg11[%c0_25, %c0_26] : memref<8x1xf32, #tpu.memory_space<vmem>>, vector<8x1xf32>
    %c0_27 = arith.constant 0 : index
    %c0_28 = arith.constant 0 : index
    %19 = vector.load %arg12[%c0_27, %c0_28] : memref<8x1xf32, #tpu.memory_space<vmem>>, vector<8x1xf32>
    %c0_29 = arith.constant 0 : index
    %c0_30 = arith.constant 0 : index
    %c0_31 = arith.constant 0 : index
    %20 = vector.load %arg13[%c0_29, %c0_30, %c0_31] : memref<3x4x24xf32, #tpu.memory_space<vmem>>, vector<1x4x24xf32>
    %21 = vector.shape_cast %20 : vector<1x4x24xf32> to vector<4x24xf32>
    %c1_32 = arith.constant 1 : index
    %c0_33 = arith.constant 0 : index
    %c0_34 = arith.constant 0 : index
    %22 = vector.load %arg13[%c1_32, %c0_33, %c0_34] : memref<3x4x24xf32, #tpu.memory_space<vmem>>, vector<1x4x24xf32>
    %23 = vector.shape_cast %22 : vector<1x4x24xf32> to vector<4x24xf32>
    %c2_35 = arith.constant 2 : index
    %c0_36 = arith.constant 0 : index
    %c0_37 = arith.constant 0 : index
    %24 = vector.load %arg13[%c2_35, %c0_36, %c0_37] : memref<3x4x24xf32, #tpu.memory_space<vmem>>, vector<1x4x24xf32>
    %25 = vector.shape_cast %24 : vector<1x4x24xf32> to vector<4x24xf32>
    %c0_38 = arith.constant 0 : index
    %c0_39 = arith.constant 0 : index
    %26 = vector.load %arg14[%c0_38, %c0_39] : memref<4x1xf32, #tpu.memory_space<vmem>>, vector<4x1xf32>
    %c0_40 = arith.constant 0 : index
    %c0_41 = arith.constant 0 : index
    %27 = vector.load %arg15[%c0_40, %c0_41] : memref<4x1xf32, #tpu.memory_space<vmem>>, vector<4x1xf32>
    %c0_42 = arith.constant 0 : index
    %c0_43 = arith.constant 0 : index
    %28 = vector.load %arg16[%c0_42, %c0_43] : memref<4x4xf32, #tpu.memory_space<vmem>>, vector<4x4xf32>
    %c0_44 = arith.constant 0 : index
    %c0_45 = arith.constant 0 : index
    %29 = vector.load %arg17[%c0_44, %c0_45] : memref<4x1xf32, #tpu.memory_space<vmem>>, vector<4x1xf32>
    %30 = tpu.iota {dimensions = array<i32: 1>} : vector<1x256xi32>
    %c16_i32 = arith.constant 16 : i32
    %c0_i32 = arith.constant 0 : i32
    %31 = arith.cmpi eq, %c16_i32, %c0_i32 : i32
    %c1_i32 = arith.constant 1 : i32
    %32 = arith.select %31, %c1_i32, %c16_i32 : i32
    %33 = vector.broadcast %32 : i32 to vector<1x256xi32>
    %34 = arith.remsi %30, %33 : vector<1x256xi32>
    %c0_i32_46 = arith.constant 0 : i32
    %35 = vector.broadcast %c0_i32_46 : i32 to vector<1x256xi32>
    %36 = arith.cmpi ne, %34, %35 : vector<1x256xi32>
    %c0_i32_47 = arith.constant 0 : i32
    %37 = vector.broadcast %c0_i32_47 : i32 to vector<1x256xi32>
    %38 = arith.cmpi slt, %34, %37 : vector<1x256xi32>
    %c0_i32_48 = arith.constant 0 : i32
    %39 = arith.cmpi slt, %32, %c0_i32_48 : i32
    %40 = vector.broadcast %39 : i1 to vector<1x256xi1>
    %41 = vector.broadcast %40 : vector<1x256xi1> to vector<1x256xi1>
    %42 = arith.xori %38, %41 : vector<1x256xi1>
    %43 = arith.andi %42, %36 : vector<1x256xi1>
    %44 = vector.broadcast %32 : i32 to vector<1x256xi32>
    %45 = arith.addi %34, %44 : vector<1x256xi32>
    %46 = arith.select %43, %45, %34 : vector<1x256xi1>, vector<1x256xi32>
    %c0_i32_49 = arith.constant 0 : i32
    %47 = vector.broadcast %c0_i32_49 : i32 to vector<1x256xi32>
    %48 = arith.cmpi sgt, %46, %47 : vector<1x256xi32>
    %c15_i32 = arith.constant 15 : i32
    %49 = vector.broadcast %c15_i32 : i32 to vector<1x256xi32>
    %50 = arith.cmpi slt, %46, %49 : vector<1x256xi32>
    %c0_50 = arith.constant 0 : index
    %c0_51 = arith.constant 0 : index
    %c0_52 = arith.constant 0 : index
    %51 = vector.load %arg1[%c0_50, %c0_51, %c0_52] : memref<1x8x256xf32, #tpu.memory_space<vmem>>, vector<1x8x256xf32>
    %52 = vector.shape_cast %51 : vector<1x8x256xf32> to vector<8x256xf32>
    %c0_53 = arith.constant 0 : index
    %c128 = arith.constant 128 : index
    %53 = vector.load %arg26[%c0_53, %c128] : memref<32x512xf32, #tpu.memory_space<vmem>>, vector<8x256xf32>
    tpu.vector_store %arg26[%c0_53, %c128], %52 {strides = array<i32>} : memref<32x512xf32, #tpu.memory_space<vmem>>, vector<8x256xf32>,
    %cst_54 = arith.constant 0.000000e+00 : f32
    %54 = vector.broadcast %cst_54 : f32 to vector<8x17xf32>
    %c0_55 = arith.constant 0 : index
    %c384 = arith.constant 384 : index
    %55 = vector.load %arg26[%c0_55, %c384] : memref<32x512xf32, #tpu.memory_space<vmem>>, vector<8x17xf32>
    tpu.vector_store %arg26[%c0_55, %c384], %54 {strides = array<i32>} : memref<32x512xf32, #tpu.memory_space<vmem>>, vector<8x17xf32>,
    %c0_56 = arith.constant 0 : index
    %c111 = arith.constant 111 : index
    %56 = vector.load %arg26[%c0_56, %c111] : memref<32x512xf32, #tpu.memory_space<vmem>>, vector<8x256xf32>
    %cst_57 = arith.constant 0.000000e+00 : f32
    %57 = vector.shape_cast %48 : vector<1x256xi1> to vector<1x256xi1>
    %58 = vector.broadcast %57 : vector<1x256xi1> to vector<8x256xi1>
    %59 = vector.broadcast %cst_57 : f32 to vector<8x256xf32>
    %60 = arith.select %58, %56, %59 : vector<8x256xi1>, vector<8x256xf32>
    %c0_58 = arith.constant 0 : index
    %c112 = arith.constant 112 : index
    %61 = vector.load %arg26[%c0_58, %c112] : memref<32x512xf32, #tpu.memory_space<vmem>>, vector<8x256xf32>
    %c0_59 = arith.constant 0 : index
    %c113 = arith.constant 113 : index
    %62 = vector.load %arg26[%c0_59, %c113] : memref<32x512xf32, #tpu.memory_space<vmem>>, vector<8x256xf32>
    %cst_60 = arith.constant 0.000000e+00 : f32
    %63 = vector.shape_cast %50 : vector<1x256xi1> to vector<1x256xi1>
    %64 = vector.broadcast %63 : vector<1x256xi1> to vector<8x256xi1>
    %65 = vector.broadcast %cst_60 : f32 to vector<8x256xf32>
    %66 = arith.select %64, %62, %65 : vector<8x256xi1>, vector<8x256xf32>
    %67 = tpu.concatenate %60, %61, %66 in 0 : vector<8x256xf32>, vector<8x256xf32>, vector<8x256xf32> -> vector<24x256xf32>
    %cst_61 = arith.constant dense<0.000000e+00> : vector<8x256xf32>
    %68 = tpu.matmul %3, %67, %cst_61 {dimension_numbers = #tpu.dot_dimension_numbers<[1], [0], [0], [1], [0, 0, 1, 1], [], []>} : vector<8x24xf32>, vector<24x256xf32>, vector<8x256xf32> -> vector<8x256xf32>
    %c0_62 = arith.constant 0 : index
    %c127 = arith.constant 127 : index
    %69 = vector.load %arg26[%c0_62, %c127] : memref<32x512xf32, #tpu.memory_space<vmem>>, vector<8x256xf32>
    %cst_63 = arith.constant 0.000000e+00 : f32
    %70 = vector.shape_cast %48 : vector<1x256xi1> to vector<1x256xi1>
    %71 = vector.broadcast %70 : vector<1x256xi1> to vector<8x256xi1>
    %72 = vector.broadcast %cst_63 : f32 to vector<8x256xf32>
    %73 = arith.select %71, %69, %72 : vector<8x256xi1>, vector<8x256xf32>
    %c0_64 = arith.constant 0 : index
    %c128_65 = arith.constant 128 : index
    %74 = vector.load %arg26[%c0_64, %c128_65] : memref<32x512xf32, #tpu.memory_space<vmem>>, vector<8x256xf32>
    %c0_66 = arith.constant 0 : index
    %c129 = arith.constant 129 : index
    %75 = vector.load %arg26[%c0_66, %c129] : memref<32x512xf32, #tpu.memory_space<vmem>>, vector<8x256xf32>
    %cst_67 = arith.constant 0.000000e+00 : f32
    %76 = vector.shape_cast %50 : vector<1x256xi1> to vector<1x256xi1>
    %77 = vector.broadcast %76 : vector<1x256xi1> to vector<8x256xi1>
    %78 = vector.broadcast %cst_67 : f32 to vector<8x256xf32>
    %79 = arith.select %77, %75, %78 : vector<8x256xi1>, vector<8x256xf32>
    %80 = tpu.concatenate %73, %74, %79 in 0 : vector<8x256xf32>, vector<8x256xf32>, vector<8x256xf32> -> vector<24x256xf32>
    %cst_68 = arith.constant dense<0.000000e+00> : vector<8x256xf32>
    %81 = tpu.matmul %5, %80, %cst_68 {dimension_numbers = #tpu.dot_dimension_numbers<[1], [0], [0], [1], [0, 0, 1, 1], [], []>} : vector<8x24xf32>, vector<24x256xf32>, vector<8x256xf32> -> vector<8x256xf32>
    %82 = arith.addf %68, %81 : vector<8x256xf32>
    %c0_69 = arith.constant 0 : index
    %c143 = arith.constant 143 : index
    %83 = vector.load %arg26[%c0_69, %c143] : memref<32x512xf32, #tpu.memory_space<vmem>>, vector<8x256xf32>
    %cst_70 = arith.constant 0.000000e+00 : f32
    %84 = vector.shape_cast %48 : vector<1x256xi1> to vector<1x256xi1>
    %85 = vector.broadcast %84 : vector<1x256xi1> to vector<8x256xi1>
    %86 = vector.broadcast %cst_70 : f32 to vector<8x256xf32>
    %87 = arith.select %85, %83, %86 : vector<8x256xi1>, vector<8x256xf32>
    %c0_71 = arith.constant 0 : index
    %c144 = arith.constant 144 : index
    %88 = vector.load %arg26[%c0_71, %c144] : memref<32x512xf32, #tpu.memory_space<vmem>>, vector<8x256xf32>
    %c0_72 = arith.constant 0 : index
    %c145 = arith.constant 145 : index
    %89 = vector.load %arg26[%c0_72, %c145] : memref<32x512xf32, #tpu.memory_space<vmem>>, vector<8x256xf32>
    %cst_73 = arith.constant 0.000000e+00 : f32
    %90 = vector.shape_cast %50 : vector<1x256xi1> to vector<1x256xi1>
    %91 = vector.broadcast %90 : vector<1x256xi1> to vector<8x256xi1>
    %92 = vector.broadcast %cst_73 : f32 to vector<8x256xf32>
    %93 = arith.select %91, %89, %92 : vector<8x256xi1>, vector<8x256xf32>
    %94 = tpu.concatenate %87, %88, %93 in 0 : vector<8x256xf32>, vector<8x256xf32>, vector<8x256xf32> -> vector<24x256xf32>
    %cst_74 = arith.constant dense<0.000000e+00> : vector<8x256xf32>
    %95 = tpu.matmul %7, %94, %cst_74 {dimension_numbers = #tpu.dot_dimension_numbers<[1], [0], [0], [1], [0, 0, 1, 1], [], []>} : vector<8x24xf32>, vector<24x256xf32>, vector<8x256xf32> -> vector<8x256xf32>
    %96 = arith.addf %82, %95 : vector<8x256xf32>
    %97 = vector.broadcast %8 : vector<8x1xf32> to vector<8x256xf32>
    %98 = arith.mulf %96, %97 : vector<8x256xf32>
    %99 = vector.broadcast %9 : vector<8x1xf32> to vector<8x256xf32>
    %100 = arith.addf %98, %99 : vector<8x256xf32>
    %cst_75 = arith.constant 0.000000e+00 : f32
    %101 = vector.broadcast %cst_75 : f32 to vector<8x256xf32>
    %102 = arith.cmpf ogt, %100, %101 : vector<8x256xf32>
    %cst_76 = arith.constant 1.000000e-01 : f32
    %103 = vector.broadcast %cst_76 : f32 to vector<8x256xf32>
    %104 = arith.mulf %103, %100 : vector<8x256xf32>
    %105 = arith.select %102, %100, %104 : vector<8x256xi1>, vector<8x256xf32>
    %cst_77 = arith.constant dense<0.000000e+00> : vector<30x256xf32>
    %106 = tpu.matmul %10, %105, %cst_77 {dimension_numbers = #tpu.dot_dimension_numbers<[1], [0], [0], [1], [0, 0, 1, 1], [], []>} : vector<30x8xf32>, vector<8x256xf32>, vector<30x256xf32> -> vector<30x256xf32>
    %107 = vector.broadcast %11 : vector<30x1xf32> to vector<30x256xf32>
    %108 = arith.addf %106, %107 : vector<30x256xf32>
    %c0_78 = arith.constant 0 : index
    %c0_79 = arith.constant 0 : index
    %c0_80 = arith.constant 0 : index
    %109 = vector.load %arg21[%c0_78, %c0_79, %c0_80] : memref<1x30x256xf32, #tpu.memory_space<vmem>>, vector<1x30x256xf32>
    %110 = vector.shape_cast %109 : vector<1x30x256xf32> to vector<30x256xf32>
    %111 = vector.shape_cast %108 : vector<30x256xf32> to vector<1x30x256xf32>
    tpu.vector_store %arg21[%c0_78, %c0_79, %c0_80], %111 {strides = array<i32>} : memref<1x30x256xf32, #tpu.memory_space<vmem>>, vector<1x30x256xf32>,
    %112 = tpu.iota {dimensions = array<i32: 1>} : vector<1x64xi32>
    %c8_i32 = arith.constant 8 : i32
    %c0_i32_81 = arith.constant 0 : i32
    %113 = arith.cmpi eq, %c8_i32, %c0_i32_81 : i32
    %c1_i32_82 = arith.constant 1 : i32
    %114 = arith.select %113, %c1_i32_82, %c8_i32 : i32
    %115 = vector.broadcast %114 : i32 to vector<1x64xi32>
    %116 = arith.remsi %112, %115 : vector<1x64xi32>
    %c0_i32_83 = arith.constant 0 : i32
    %117 = vector.broadcast %c0_i32_83 : i32 to vector<1x64xi32>
    %118 = arith.cmpi ne, %116, %117 : vector<1x64xi32>
    %c0_i32_84 = arith.constant 0 : i32
    %119 = vector.broadcast %c0_i32_84 : i32 to vector<1x64xi32>
    %120 = arith.cmpi slt, %116, %119 : vector<1x64xi32>
    %c0_i32_85 = arith.constant 0 : i32
    %121 = arith.cmpi slt, %114, %c0_i32_85 : i32
    %122 = vector.broadcast %121 : i1 to vector<1x64xi1>
    %123 = vector.broadcast %122 : vector<1x64xi1> to vector<1x64xi1>
    %124 = arith.xori %120, %123 : vector<1x64xi1>
    %125 = arith.andi %124, %118 : vector<1x64xi1>
    %126 = vector.broadcast %114 : i32 to vector<1x64xi32>
    %127 = arith.addi %116, %126 : vector<1x64xi32>
    %128 = arith.select %125, %127, %116 : vector<1x64xi1>, vector<1x64xi32>
    %c0_i32_86 = arith.constant 0 : i32
    %129 = vector.broadcast %c0_i32_86 : i32 to vector<1x64xi32>
    %130 = arith.cmpi sgt, %128, %129 : vector<1x64xi32>
    %c7_i32 = arith.constant 7 : i32
    %131 = vector.broadcast %c7_i32 : i32 to vector<1x64xi32>
    %132 = arith.cmpi slt, %128, %131 : vector<1x64xi32>
    %c0_87 = arith.constant 0 : index
    %c0_88 = arith.constant 0 : index
    %c0_89 = arith.constant 0 : index
    %133 = vector.load %arg2[%c0_87, %c0_88, %c0_89] : memref<1x8x64xf32, #tpu.memory_space<vmem>>, vector<1x8x64xf32>
    %134 = vector.shape_cast %133 : vector<1x8x64xf32> to vector<8x64xf32>
    %c0_90 = arith.constant 0 : index
    %c128_91 = arith.constant 128 : index
    %135 = vector.load %arg26[%c0_90, %c128_91] : memref<32x512xf32, #tpu.memory_space<vmem>>, vector<8x64xf32>
    tpu.vector_store %arg26[%c0_90, %c128_91], %134 {strides = array<i32>} : memref<32x512xf32, #tpu.memory_space<vmem>>, vector<8x64xf32>,
    %cst_92 = arith.constant 0.000000e+00 : f32
    %136 = vector.broadcast %cst_92 : f32 to vector<8x9xf32>
    %c0_93 = arith.constant 0 : index
    %c192 = arith.constant 192 : index
    %137 = vector.load %arg26[%c0_93, %c192] : memref<32x512xf32, #tpu.memory_space<vmem>>, vector<8x9xf32>
    tpu.vector_store %arg26[%c0_93, %c192], %136 {strides = array<i32>} : memref<32x512xf32, #tpu.memory_space<vmem>>, vector<8x9xf32>,
    %c0_94 = arith.constant 0 : index
    %c119 = arith.constant 119 : index
    %138 = vector.load %arg26[%c0_94, %c119] : memref<32x512xf32, #tpu.memory_space<vmem>>, vector<8x64xf32>
    %cst_95 = arith.constant 0.000000e+00 : f32
    %139 = vector.shape_cast %130 : vector<1x64xi1> to vector<1x64xi1>
    %140 = vector.broadcast %139 : vector<1x64xi1> to vector<8x64xi1>
    %141 = vector.broadcast %cst_95 : f32 to vector<8x64xf32>
    %142 = arith.select %140, %138, %141 : vector<8x64xi1>, vector<8x64xf32>
    %c0_96 = arith.constant 0 : index
    %c120 = arith.constant 120 : index
    %143 = vector.load %arg26[%c0_96, %c120] : memref<32x512xf32, #tpu.memory_space<vmem>>, vector<8x64xf32>
    %c0_97 = arith.constant 0 : index
    %c121 = arith.constant 121 : index
    %144 = vector.load %arg26[%c0_97, %c121] : memref<32x512xf32, #tpu.memory_space<vmem>>, vector<8x64xf32>
    %cst_98 = arith.constant 0.000000e+00 : f32
    %145 = vector.shape_cast %132 : vector<1x64xi1> to vector<1x64xi1>
    %146 = vector.broadcast %145 : vector<1x64xi1> to vector<8x64xi1>
    %147 = vector.broadcast %cst_98 : f32 to vector<8x64xf32>
    %148 = arith.select %146, %144, %147 : vector<8x64xi1>, vector<8x64xf32>
    %149 = tpu.concatenate %142, %143, %148 in 0 : vector<8x64xf32>, vector<8x64xf32>, vector<8x64xf32> -> vector<24x64xf32>
    %cst_99 = arith.constant dense<0.000000e+00> : vector<8x64xf32>
    %150 = tpu.matmul %3, %149, %cst_99 {dimension_numbers = #tpu.dot_dimension_numbers<[1], [0], [0], [1], [0, 0, 1, 1], [], []>} : vector<8x24xf32>, vector<24x64xf32>, vector<8x64xf32> -> vector<8x64xf32>
    %c0_100 = arith.constant 0 : index
    %c127_101 = arith.constant 127 : index
    %151 = vector.load %arg26[%c0_100, %c127_101] : memref<32x512xf32, #tpu.memory_space<vmem>>, vector<8x64xf32>
    %cst_102 = arith.constant 0.000000e+00 : f32
    %152 = vector.shape_cast %130 : vector<1x64xi1> to vector<1x64xi1>
    %153 = vector.broadcast %152 : vector<1x64xi1> to vector<8x64xi1>
    %154 = vector.broadcast %cst_102 : f32 to vector<8x64xf32>
    %155 = arith.select %153, %151, %154 : vector<8x64xi1>, vector<8x64xf32>
    %c0_103 = arith.constant 0 : index
    %c128_104 = arith.constant 128 : index
    %156 = vector.load %arg26[%c0_103, %c128_104] : memref<32x512xf32, #tpu.memory_space<vmem>>, vector<8x64xf32>
    %c0_105 = arith.constant 0 : index
    %c129_106 = arith.constant 129 : index
    %157 = vector.load %arg26[%c0_105, %c129_106] : memref<32x512xf32, #tpu.memory_space<vmem>>, vector<8x64xf32>
    %cst_107 = arith.constant 0.000000e+00 : f32
    %158 = vector.shape_cast %132 : vector<1x64xi1> to vector<1x64xi1>
    %159 = vector.broadcast %158 : vector<1x64xi1> to vector<8x64xi1>
    %160 = vector.broadcast %cst_107 : f32 to vector<8x64xf32>
    %161 = arith.select %159, %157, %160 : vector<8x64xi1>, vector<8x64xf32>
    %162 = tpu.concatenate %155, %156, %161 in 0 : vector<8x64xf32>, vector<8x64xf32>, vector<8x64xf32> -> vector<24x64xf32>
    %cst_108 = arith.constant dense<0.000000e+00> : vector<8x64xf32>
    %163 = tpu.matmul %5, %162, %cst_108 {dimension_numbers = #tpu.dot_dimension_numbers<[1], [0], [0], [1], [0, 0, 1, 1], [], []>} : vector<8x24xf32>, vector<24x64xf32>, vector<8x64xf32> -> vector<8x64xf32>
    %164 = arith.addf %150, %163 : vector<8x64xf32>
    %c0_109 = arith.constant 0 : index
    %c135 = arith.constant 135 : index
    %165 = vector.load %arg26[%c0_109, %c135] : memref<32x512xf32, #tpu.memory_space<vmem>>, vector<8x64xf32>
    %cst_110 = arith.constant 0.000000e+00 : f32
    %166 = vector.shape_cast %130 : vector<1x64xi1> to vector<1x64xi1>
    %167 = vector.broadcast %166 : vector<1x64xi1> to vector<8x64xi1>
    %168 = vector.broadcast %cst_110 : f32 to vector<8x64xf32>
    %169 = arith.select %167, %165, %168 : vector<8x64xi1>, vector<8x64xf32>
    %c0_111 = arith.constant 0 : index
    %c136 = arith.constant 136 : index
    %170 = vector.load %arg26[%c0_111, %c136] : memref<32x512xf32, #tpu.memory_space<vmem>>, vector<8x64xf32>
    %c0_112 = arith.constant 0 : index
    %c137 = arith.constant 137 : index
    %171 = vector.load %arg26[%c0_112, %c137] : memref<32x512xf32, #tpu.memory_space<vmem>>, vector<8x64xf32>
    %cst_113 = arith.constant 0.000000e+00 : f32
    %172 = vector.shape_cast %132 : vector<1x64xi1> to vector<1x64xi1>
    %173 = vector.broadcast %172 : vector<1x64xi1> to vector<8x64xi1>
    %174 = vector.broadcast %cst_113 : f32 to vector<8x64xf32>
    %175 = arith.select %173, %171, %174 : vector<8x64xi1>, vector<8x64xf32>
    %176 = tpu.concatenate %169, %170, %175 in 0 : vector<8x64xf32>, vector<8x64xf32>, vector<8x64xf32> -> vector<24x64xf32>
    %cst_114 = arith.constant dense<0.000000e+00> : vector<8x64xf32>
    %177 = tpu.matmul %7, %176, %cst_114 {dimension_numbers = #tpu.dot_dimension_numbers<[1], [0], [0], [1], [0, 0, 1, 1], [], []>} : vector<8x24xf32>, vector<24x64xf32>, vector<8x64xf32> -> vector<8x64xf32>
    %178 = arith.addf %164, %177 : vector<8x64xf32>
    %179 = vector.broadcast %8 : vector<8x1xf32> to vector<8x64xf32>
    %180 = arith.mulf %178, %179 : vector<8x64xf32>
    %181 = vector.broadcast %9 : vector<8x1xf32> to vector<8x64xf32>
    %182 = arith.addf %180, %181 : vector<8x64xf32>
    %cst_115 = arith.constant 0.000000e+00 : f32
    %183 = vector.broadcast %cst_115 : f32 to vector<8x64xf32>
    %184 = arith.cmpf ogt, %182, %183 : vector<8x64xf32>
    %cst_116 = arith.constant 1.000000e-01 : f32
    %185 = vector.broadcast %cst_116 : f32 to vector<8x64xf32>
    %186 = arith.mulf %185, %182 : vector<8x64xf32>
    %187 = arith.select %184, %182, %186 : vector<8x64xi1>, vector<8x64xf32>
    %cst_117 = arith.constant dense<0.000000e+00> : vector<30x64xf32>
    %188 = tpu.matmul %10, %187, %cst_117 {dimension_numbers = #tpu.dot_dimension_numbers<[1], [0], [0], [1], [0, 0, 1, 1], [], []>} : vector<30x8xf32>, vector<8x64xf32>, vector<30x64xf32> -> vector<30x64xf32>
    %189 = vector.broadcast %11 : vector<30x1xf32> to vector<30x64xf32>
    %190 = arith.addf %188, %189 : vector<30x64xf32>
    %c0_118 = arith.constant 0 : index
    %c0_119 = arith.constant 0 : index
    %c0_120 = arith.constant 0 : index
    %191 = vector.load %arg22[%c0_118, %c0_119, %c0_120] : memref<1x30x64xf32, #tpu.memory_space<vmem>>, vector<1x30x64xf32>
    %192 = vector.shape_cast %191 : vector<1x30x64xf32> to vector<30x64xf32>
    %193 = vector.shape_cast %190 : vector<30x64xf32> to vector<1x30x64xf32>
    tpu.vector_store %arg22[%c0_118, %c0_119, %c0_120], %193 {strides = array<i32>} : memref<1x30x64xf32, #tpu.memory_space<vmem>>, vector<1x30x64xf32>,
    %194 = tpu.iota {dimensions = array<i32: 1>} : vector<1x16xi32>
    %c4_i32 = arith.constant 4 : i32
    %c0_i32_121 = arith.constant 0 : i32
    %195 = arith.cmpi eq, %c4_i32, %c0_i32_121 : i32
    %c1_i32_122 = arith.constant 1 : i32
    %196 = arith.select %195, %c1_i32_122, %c4_i32 : i32
    %197 = vector.broadcast %196 : i32 to vector<1x16xi32>
    %198 = arith.remsi %194, %197 : vector<1x16xi32>
    %c0_i32_123 = arith.constant 0 : i32
    %199 = vector.broadcast %c0_i32_123 : i32 to vector<1x16xi32>
    %200 = arith.cmpi ne, %198, %199 : vector<1x16xi32>
    %c0_i32_124 = arith.constant 0 : i32
    %201 = vector.broadcast %c0_i32_124 : i32 to vector<1x16xi32>
    %202 = arith.cmpi slt, %198, %201 : vector<1x16xi32>
    %c0_i32_125 = arith.constant 0 : i32
    %203 = arith.cmpi slt, %196, %c0_i32_125 : i32
    %204 = vector.broadcast %203 : i1 to vector<1x16xi1>
    %205 = vector.broadcast %204 : vector<1x16xi1> to vector<1x16xi1>
    %206 = arith.xori %202, %205 : vector<1x16xi1>
    %207 = arith.andi %206, %200 : vector<1x16xi1>
    %208 = vector.broadcast %196 : i32 to vector<1x16xi32>
    %209 = arith.addi %198, %208 : vector<1x16xi32>
    %210 = arith.select %207, %209, %198 : vector<1x16xi1>, vector<1x16xi32>
    %c0_i32_126 = arith.constant 0 : i32
    %211 = vector.broadcast %c0_i32_126 : i32 to vector<1x16xi32>
    %212 = arith.cmpi sgt, %210, %211 : vector<1x16xi32>
    %c3_i32 = arith.constant 3 : i32
    %213 = vector.broadcast %c3_i32 : i32 to vector<1x16xi32>
    %214 = arith.cmpi slt, %210, %213 : vector<1x16xi32>
    %c0_127 = arith.constant 0 : index
    %c0_128 = arith.constant 0 : index
    %c0_129 = arith.constant 0 : index
    %215 = vector.load %arg3[%c0_127, %c0_128, %c0_129] : memref<1x8x16xf32, #tpu.memory_space<vmem>>, vector<1x8x16xf32>
    %216 = vector.shape_cast %215 : vector<1x8x16xf32> to vector<8x16xf32>
    %c0_130 = arith.constant 0 : index
    %c128_131 = arith.constant 128 : index
    %217 = vector.load %arg26[%c0_130, %c128_131] : memref<32x512xf32, #tpu.memory_space<vmem>>, vector<8x16xf32>
    tpu.vector_store %arg26[%c0_130, %c128_131], %216 {strides = array<i32>} : memref<32x512xf32, #tpu.memory_space<vmem>>, vector<8x16xf32>,
    %cst_132 = arith.constant 0.000000e+00 : f32
    %218 = vector.broadcast %cst_132 : f32 to vector<8x5xf32>
    %c0_133 = arith.constant 0 : index
    %c144_134 = arith.constant 144 : index
    %219 = vector.load %arg26[%c0_133, %c144_134] : memref<32x512xf32, #tpu.memory_space<vmem>>, vector<8x5xf32>
    tpu.vector_store %arg26[%c0_133, %c144_134], %218 {strides = array<i32>} : memref<32x512xf32, #tpu.memory_space<vmem>>, vector<8x5xf32>,
    %c0_135 = arith.constant 0 : index
    %c123 = arith.constant 123 : index
    %220 = vector.load %arg26[%c0_135, %c123] : memref<32x512xf32, #tpu.memory_space<vmem>>, vector<8x16xf32>
    %cst_136 = arith.constant 0.000000e+00 : f32
    %221 = vector.shape_cast %212 : vector<1x16xi1> to vector<1x16xi1>
    %222 = vector.broadcast %221 : vector<1x16xi1> to vector<8x16xi1>
    %223 = vector.broadcast %cst_136 : f32 to vector<8x16xf32>
    %224 = arith.select %222, %220, %223 : vector<8x16xi1>, vector<8x16xf32>
    %c0_137 = arith.constant 0 : index
    %c124 = arith.constant 124 : index
    %225 = vector.load %arg26[%c0_137, %c124] : memref<32x512xf32, #tpu.memory_space<vmem>>, vector<8x16xf32>
    %c0_138 = arith.constant 0 : index
    %c125 = arith.constant 125 : index
    %226 = vector.load %arg26[%c0_138, %c125] : memref<32x512xf32, #tpu.memory_space<vmem>>, vector<8x16xf32>
    %cst_139 = arith.constant 0.000000e+00 : f32
    %227 = vector.shape_cast %214 : vector<1x16xi1> to vector<1x16xi1>
    %228 = vector.broadcast %227 : vector<1x16xi1> to vector<8x16xi1>
    %229 = vector.broadcast %cst_139 : f32 to vector<8x16xf32>
    %230 = arith.select %228, %226, %229 : vector<8x16xi1>, vector<8x16xf32>
    %231 = tpu.concatenate %224, %225, %230 in 0 : vector<8x16xf32>, vector<8x16xf32>, vector<8x16xf32> -> vector<24x16xf32>
    %cst_140 = arith.constant dense<0.000000e+00> : vector<8x16xf32>
    %232 = tpu.matmul %3, %231, %cst_140 {dimension_numbers = #tpu.dot_dimension_numbers<[1], [0], [0], [1], [0, 0, 1, 1], [], []>} : vector<8x24xf32>, vector<24x16xf32>, vector<8x16xf32> -> vector<8x16xf32>
    %c0_141 = arith.constant 0 : index
    %c127_142 = arith.constant 127 : index
    %233 = vector.load %arg26[%c0_141, %c127_142] : memref<32x512xf32, #tpu.memory_space<vmem>>, vector<8x16xf32>
    %cst_143 = arith.constant 0.000000e+00 : f32
    %234 = vector.shape_cast %212 : vector<1x16xi1> to vector<1x16xi1>
    %235 = vector.broadcast %234 : vector<1x16xi1> to vector<8x16xi1>
    %236 = vector.broadcast %cst_143 : f32 to vector<8x16xf32>
    %237 = arith.select %235, %233, %236 : vector<8x16xi1>, vector<8x16xf32>
    %c0_144 = arith.constant 0 : index
    %c128_145 = arith.constant 128 : index
    %238 = vector.load %arg26[%c0_144, %c128_145] : memref<32x512xf32, #tpu.memory_space<vmem>>, vector<8x16xf32>
    %c0_146 = arith.constant 0 : index
    %c129_147 = arith.constant 129 : index
    %239 = vector.load %arg26[%c0_146, %c129_147] : memref<32x512xf32, #tpu.memory_space<vmem>>, vector<8x16xf32>
    %cst_148 = arith.constant 0.000000e+00 : f32
    %240 = vector.shape_cast %214 : vector<1x16xi1> to vector<1x16xi1>
    %241 = vector.broadcast %240 : vector<1x16xi1> to vector<8x16xi1>
    %242 = vector.broadcast %cst_148 : f32 to vector<8x16xf32>
    %243 = arith.select %241, %239, %242 : vector<8x16xi1>, vector<8x16xf32>
    %244 = tpu.concatenate %237, %238, %243 in 0 : vector<8x16xf32>, vector<8x16xf32>, vector<8x16xf32> -> vector<24x16xf32>
    %cst_149 = arith.constant dense<0.000000e+00> : vector<8x16xf32>
    %245 = tpu.matmul %5, %244, %cst_149 {dimension_numbers = #tpu.dot_dimension_numbers<[1], [0], [0], [1], [0, 0, 1, 1], [], []>} : vector<8x24xf32>, vector<24x16xf32>, vector<8x16xf32> -> vector<8x16xf32>
    %246 = arith.addf %232, %245 : vector<8x16xf32>
    %c0_150 = arith.constant 0 : index
    %c131 = arith.constant 131 : index
    %247 = vector.load %arg26[%c0_150, %c131] : memref<32x512xf32, #tpu.memory_space<vmem>>, vector<8x16xf32>
    %cst_151 = arith.constant 0.000000e+00 : f32
    %248 = vector.shape_cast %212 : vector<1x16xi1> to vector<1x16xi1>
    %249 = vector.broadcast %248 : vector<1x16xi1> to vector<8x16xi1>
    %250 = vector.broadcast %cst_151 : f32 to vector<8x16xf32>
    %251 = arith.select %249, %247, %250 : vector<8x16xi1>, vector<8x16xf32>
    %c0_152 = arith.constant 0 : index
    %c132 = arith.constant 132 : index
    %252 = vector.load %arg26[%c0_152, %c132] : memref<32x512xf32, #tpu.memory_space<vmem>>, vector<8x16xf32>
    %c0_153 = arith.constant 0 : index
    %c133 = arith.constant 133 : index
    %253 = vector.load %arg26[%c0_153, %c133] : memref<32x512xf32, #tpu.memory_space<vmem>>, vector<8x16xf32>
    %cst_154 = arith.constant 0.000000e+00 : f32
    %254 = vector.shape_cast %214 : vector<1x16xi1> to vector<1x16xi1>
    %255 = vector.broadcast %254 : vector<1x16xi1> to vector<8x16xi1>
    %256 = vector.broadcast %cst_154 : f32 to vector<8x16xf32>
    %257 = arith.select %255, %253, %256 : vector<8x16xi1>, vector<8x16xf32>
    %258 = tpu.concatenate %251, %252, %257 in 0 : vector<8x16xf32>, vector<8x16xf32>, vector<8x16xf32> -> vector<24x16xf32>
    %cst_155 = arith.constant dense<0.000000e+00> : vector<8x16xf32>
    %259 = tpu.matmul %7, %258, %cst_155 {dimension_numbers = #tpu.dot_dimension_numbers<[1], [0], [0], [1], [0, 0, 1, 1], [], []>} : vector<8x24xf32>, vector<24x16xf32>, vector<8x16xf32> -> vector<8x16xf32>
    %260 = arith.addf %246, %259 : vector<8x16xf32>
    %261 = vector.broadcast %8 : vector<8x1xf32> to vector<8x16xf32>
    %262 = arith.mulf %260, %261 : vector<8x16xf32>
    %263 = vector.broadcast %9 : vector<8x1xf32> to vector<8x16xf32>
    %264 = arith.addf %262, %263 : vector<8x16xf32>
    %cst_156 = arith.constant 0.000000e+00 : f32
    %265 = vector.broadcast %cst_156 : f32 to vector<8x16xf32>
    %266 = arith.cmpf ogt, %264, %265 : vector<8x16xf32>
    %cst_157 = arith.constant 1.000000e-01 : f32
    %267 = vector.broadcast %cst_157 : f32 to vector<8x16xf32>
    %268 = arith.mulf %267, %264 : vector<8x16xf32>
    %269 = arith.select %266, %264, %268 : vector<8x16xi1>, vector<8x16xf32>
    %cst_158 = arith.constant dense<0.000000e+00> : vector<30x16xf32>
    %270 = tpu.matmul %10, %269, %cst_158 {dimension_numbers = #tpu.dot_dimension_numbers<[1], [0], [0], [1], [0, 0, 1, 1], [], []>} : vector<30x8xf32>, vector<8x16xf32>, vector<30x16xf32> -> vector<30x16xf32>
    %271 = vector.broadcast %11 : vector<30x1xf32> to vector<30x16xf32>
    %272 = arith.addf %270, %271 : vector<30x16xf32>
    %c0_159 = arith.constant 0 : index
    %c0_160 = arith.constant 0 : index
    %c0_161 = arith.constant 0 : index
    %273 = vector.load %arg23[%c0_159, %c0_160, %c0_161] : memref<1x30x16xf32, #tpu.memory_space<vmem>>, vector<1x30x16xf32>
    %274 = vector.shape_cast %273 : vector<1x30x16xf32> to vector<30x16xf32>
    %275 = vector.shape_cast %272 : vector<30x16xf32> to vector<1x30x16xf32>
    tpu.vector_store %arg23[%c0_159, %c0_160, %c0_161], %275 {strides = array<i32>} : memref<1x30x16xf32, #tpu.memory_space<vmem>>, vector<1x30x16xf32>,
    %276 = tpu.iota {dimensions = array<i32: 1>} : vector<1x4xi32>
    %c2_i32 = arith.constant 2 : i32
    %c0_i32_162 = arith.constant 0 : i32
    %277 = arith.cmpi eq, %c2_i32, %c0_i32_162 : i32
    %c1_i32_163 = arith.constant 1 : i32
    %278 = arith.select %277, %c1_i32_163, %c2_i32 : i32
    %279 = vector.broadcast %278 : i32 to vector<1x4xi32>
    %280 = arith.remsi %276, %279 : vector<1x4xi32>
    %c0_i32_164 = arith.constant 0 : i32
    %281 = vector.broadcast %c0_i32_164 : i32 to vector<1x4xi32>
    %282 = arith.cmpi ne, %280, %281 : vector<1x4xi32>
    %c0_i32_165 = arith.constant 0 : i32
    %283 = vector.broadcast %c0_i32_165 : i32 to vector<1x4xi32>
    %284 = arith.cmpi slt, %280, %283 : vector<1x4xi32>
    %c0_i32_166 = arith.constant 0 : i32
    %285 = arith.cmpi slt, %278, %c0_i32_166 : i32
    %286 = vector.broadcast %285 : i1 to vector<1x4xi1>
    %287 = vector.broadcast %286 : vector<1x4xi1> to vector<1x4xi1>
    %288 = arith.xori %284, %287 : vector<1x4xi1>
    %289 = arith.andi %288, %282 : vector<1x4xi1>
    %290 = vector.broadcast %278 : i32 to vector<1x4xi32>
    %291 = arith.addi %280, %290 : vector<1x4xi32>
    %292 = arith.select %289, %291, %280 : vector<1x4xi1>, vector<1x4xi32>
    %c0_i32_167 = arith.constant 0 : i32
    %293 = vector.broadcast %c0_i32_167 : i32 to vector<1x4xi32>
    %294 = arith.cmpi sgt, %292, %293 : vector<1x4xi32>
    %c1_i32_168 = arith.constant 1 : i32
    %295 = vector.broadcast %c1_i32_168 : i32 to vector<1x4xi32>
    %296 = arith.cmpi slt, %292, %295 : vector<1x4xi32>
    %c0_169 = arith.constant 0 : index
    %c0_170 = arith.constant 0 : index
    %c0_171 = arith.constant 0 : index
    %297 = vector.load %arg4[%c0_169, %c0_170, %c0_171] : memref<1x8x4xf32, #tpu.memory_space<vmem>>, vector<1x8x4xf32>
    %298 = vector.shape_cast %297 : vector<1x8x4xf32> to vector<8x4xf32>
    %c0_172 = arith.constant 0 : index
    %c128_173 = arith.constant 128 : index
    %299 = vector.load %arg26[%c0_172, %c128_173] : memref<32x512xf32, #tpu.memory_space<vmem>>, vector<8x4xf32>
    tpu.vector_store %arg26[%c0_172, %c128_173], %298 {strides = array<i32>} : memref<32x512xf32, #tpu.memory_space<vmem>>, vector<8x4xf32>,
    %cst_174 = arith.constant 0.000000e+00 : f32
    %300 = vector.broadcast %cst_174 : f32 to vector<8x3xf32>
    %c0_175 = arith.constant 0 : index
    %c132_176 = arith.constant 132 : index
    %301 = vector.load %arg26[%c0_175, %c132_176] : memref<32x512xf32, #tpu.memory_space<vmem>>, vector<8x3xf32>
    tpu.vector_store %arg26[%c0_175, %c132_176], %300 {strides = array<i32>} : memref<32x512xf32, #tpu.memory_space<vmem>>, vector<8x3xf32>,
    %c0_177 = arith.constant 0 : index
    %c125_178 = arith.constant 125 : index
    %302 = vector.load %arg26[%c0_177, %c125_178] : memref<32x512xf32, #tpu.memory_space<vmem>>, vector<8x4xf32>
    %cst_179 = arith.constant 0.000000e+00 : f32
    %303 = vector.shape_cast %294 : vector<1x4xi1> to vector<1x4xi1>
    %304 = vector.broadcast %303 : vector<1x4xi1> to vector<8x4xi1>
    %305 = vector.broadcast %cst_179 : f32 to vector<8x4xf32>
    %306 = arith.select %304, %302, %305 : vector<8x4xi1>, vector<8x4xf32>
    %c0_180 = arith.constant 0 : index
    %c126 = arith.constant 126 : index
    %307 = vector.load %arg26[%c0_180, %c126] : memref<32x512xf32, #tpu.memory_space<vmem>>, vector<8x4xf32>
    %c0_181 = arith.constant 0 : index
    %c127_182 = arith.constant 127 : index
    %308 = vector.load %arg26[%c0_181, %c127_182] : memref<32x512xf32, #tpu.memory_space<vmem>>, vector<8x4xf32>
    %cst_183 = arith.constant 0.000000e+00 : f32
    %309 = vector.shape_cast %296 : vector<1x4xi1> to vector<1x4xi1>
    %310 = vector.broadcast %309 : vector<1x4xi1> to vector<8x4xi1>
    %311 = vector.broadcast %cst_183 : f32 to vector<8x4xf32>
    %312 = arith.select %310, %308, %311 : vector<8x4xi1>, vector<8x4xf32>
    %313 = tpu.concatenate %306, %307, %312 in 0 : vector<8x4xf32>, vector<8x4xf32>, vector<8x4xf32> -> vector<24x4xf32>
    %cst_184 = arith.constant dense<0.000000e+00> : vector<8x4xf32>
    %314 = tpu.matmul %3, %313, %cst_184 {dimension_numbers = #tpu.dot_dimension_numbers<[1], [0], [0], [1], [0, 0, 1, 1], [], []>} : vector<8x24xf32>, vector<24x4xf32>, vector<8x4xf32> -> vector<8x4xf32>
    %c0_185 = arith.constant 0 : index
    %c127_186 = arith.constant 127 : index
    %315 = vector.load %arg26[%c0_185, %c127_186] : memref<32x512xf32, #tpu.memory_space<vmem>>, vector<8x4xf32>
    %cst_187 = arith.constant 0.000000e+00 : f32
    %316 = vector.shape_cast %294 : vector<1x4xi1> to vector<1x4xi1>
    %317 = vector.broadcast %316 : vector<1x4xi1> to vector<8x4xi1>
    %318 = vector.broadcast %cst_187 : f32 to vector<8x4xf32>
    %319 = arith.select %317, %315, %318 : vector<8x4xi1>, vector<8x4xf32>
    %c0_188 = arith.constant 0 : index
    %c128_189 = arith.constant 128 : index
    %320 = vector.load %arg26[%c0_188, %c128_189] : memref<32x512xf32, #tpu.memory_space<vmem>>, vector<8x4xf32>
    %c0_190 = arith.constant 0 : index
    %c129_191 = arith.constant 129 : index
    %321 = vector.load %arg26[%c0_190, %c129_191] : memref<32x512xf32, #tpu.memory_space<vmem>>, vector<8x4xf32>
    %cst_192 = arith.constant 0.000000e+00 : f32
    %322 = vector.shape_cast %296 : vector<1x4xi1> to vector<1x4xi1>
    %323 = vector.broadcast %322 : vector<1x4xi1> to vector<8x4xi1>
    %324 = vector.broadcast %cst_192 : f32 to vector<8x4xf32>
    %325 = arith.select %323, %321, %324 : vector<8x4xi1>, vector<8x4xf32>
    %326 = tpu.concatenate %319, %320, %325 in 0 : vector<8x4xf32>, vector<8x4xf32>, vector<8x4xf32> -> vector<24x4xf32>
    %cst_193 = arith.constant dense<0.000000e+00> : vector<8x4xf32>
    %327 = tpu.matmul %5, %326, %cst_193 {dimension_numbers = #tpu.dot_dimension_numbers<[1], [0], [0], [1], [0, 0, 1, 1], [], []>} : vector<8x24xf32>, vector<24x4xf32>, vector<8x4xf32> -> vector<8x4xf32>
    %328 = arith.addf %314, %327 : vector<8x4xf32>
    %c0_194 = arith.constant 0 : index
    %c129_195 = arith.constant 129 : index
    %329 = vector.load %arg26[%c0_194, %c129_195] : memref<32x512xf32, #tpu.memory_space<vmem>>, vector<8x4xf32>
    %cst_196 = arith.constant 0.000000e+00 : f32
    %330 = vector.shape_cast %294 : vector<1x4xi1> to vector<1x4xi1>
    %331 = vector.broadcast %330 : vector<1x4xi1> to vector<8x4xi1>
    %332 = vector.broadcast %cst_196 : f32 to vector<8x4xf32>
    %333 = arith.select %331, %329, %332 : vector<8x4xi1>, vector<8x4xf32>
    %c0_197 = arith.constant 0 : index
    %c130 = arith.constant 130 : index
    %334 = vector.load %arg26[%c0_197, %c130] : memref<32x512xf32, #tpu.memory_space<vmem>>, vector<8x4xf32>
    %c0_198 = arith.constant 0 : index
    %c131_199 = arith.constant 131 : index
    %335 = vector.load %arg26[%c0_198, %c131_199] : memref<32x512xf32, #tpu.memory_space<vmem>>, vector<8x4xf32>
    %cst_200 = arith.constant 0.000000e+00 : f32
    %336 = vector.shape_cast %296 : vector<1x4xi1> to vector<1x4xi1>
    %337 = vector.broadcast %336 : vector<1x4xi1> to vector<8x4xi1>
    %338 = vector.broadcast %cst_200 : f32 to vector<8x4xf32>
    %339 = arith.select %337, %335, %338 : vector<8x4xi1>, vector<8x4xf32>
    %340 = tpu.concatenate %333, %334, %339 in 0 : vector<8x4xf32>, vector<8x4xf32>, vector<8x4xf32> -> vector<24x4xf32>
    %cst_201 = arith.constant dense<0.000000e+00> : vector<8x4xf32>
    %341 = tpu.matmul %7, %340, %cst_201 {dimension_numbers = #tpu.dot_dimension_numbers<[1], [0], [0], [1], [0, 0, 1, 1], [], []>} : vector<8x24xf32>, vector<24x4xf32>, vector<8x4xf32> -> vector<8x4xf32>
    %342 = arith.addf %328, %341 : vector<8x4xf32>
    %343 = vector.broadcast %8 : vector<8x1xf32> to vector<8x4xf32>
    %344 = arith.mulf %342, %343 : vector<8x4xf32>
    %345 = vector.broadcast %9 : vector<8x1xf32> to vector<8x4xf32>
    %346 = arith.addf %344, %345 : vector<8x4xf32>
    %cst_202 = arith.constant 0.000000e+00 : f32
    %347 = vector.broadcast %cst_202 : f32 to vector<8x4xf32>
    %348 = arith.cmpf ogt, %346, %347 : vector<8x4xf32>
    %cst_203 = arith.constant 1.000000e-01 : f32
    %349 = vector.broadcast %cst_203 : f32 to vector<8x4xf32>
    %350 = arith.mulf %349, %346 : vector<8x4xf32>
    %351 = arith.select %348, %346, %350 : vector<8x4xi1>, vector<8x4xf32>
    %cst_204 = arith.constant dense<0.000000e+00> : vector<30x4xf32>
    %352 = tpu.matmul %10, %351, %cst_204 {dimension_numbers = #tpu.dot_dimension_numbers<[1], [0], [0], [1], [0, 0, 1, 1], [], []>} : vector<30x8xf32>, vector<8x4xf32>, vector<30x4xf32> -> vector<30x4xf32>
    %353 = vector.broadcast %11 : vector<30x1xf32> to vector<30x4xf32>
    %354 = arith.addf %352, %353 : vector<30x4xf32>
    %c0_205 = arith.constant 0 : index
    %c0_206 = arith.constant 0 : index
    %c0_207 = arith.constant 0 : index
    %355 = vector.load %arg24[%c0_205, %c0_206, %c0_207] : memref<1x30x4xf32, #tpu.memory_space<vmem>>, vector<1x30x4xf32>
    %356 = vector.shape_cast %355 : vector<1x30x4xf32> to vector<30x4xf32>
    %357 = vector.shape_cast %354 : vector<30x4xf32> to vector<1x30x4xf32>
    tpu.vector_store %arg24[%c0_205, %c0_206, %c0_207], %357 {strides = array<i32>} : memref<1x30x4xf32, #tpu.memory_space<vmem>>, vector<1x30x4xf32>,
    %c0_208 = arith.constant 0 : index
    %c0_209 = arith.constant 0 : index
    %c0_210 = arith.constant 0 : index
    %358 = vector.load %arg1[%c0_208, %c0_209, %c0_210] : memref<1x8x256xf32, #tpu.memory_space<vmem>>, vector<1x8x256xf32>
    %359 = vector.shape_cast %358 : vector<1x8x256xf32> to vector<8x256xf32>
    %c0_211 = arith.constant 0 : index
    %c0_212 = arith.constant 0 : index
    %c0_213 = arith.constant 0 : index
    %360 = vector.load %arg2[%c0_211, %c0_212, %c0_213] : memref<1x8x64xf32, #tpu.memory_space<vmem>>, vector<1x8x64xf32>
    %361 = vector.shape_cast %360 : vector<1x8x64xf32> to vector<8x64xf32>
    %c0_214 = arith.constant 0 : index
    %c0_215 = arith.constant 0 : index
    %362 = vector.load %arg18[%c0_214, %c0_215] : memref<64x256xf32, #tpu.memory_space<vmem>>, vector<64x256xf32>
    %cst_216 = arith.constant dense<0.000000e+00> : vector<8x256xf32>
    %363 = tpu.matmul %361, %362, %cst_216 {dimension_numbers = #tpu.dot_dimension_numbers<[1], [0], [0], [1], [0, 0, 1, 1], [], []>} : vector<8x64xf32>, vector<64x256xf32>, vector<8x256xf32> -> vector<8x256xf32>
    %c0_217 = arith.constant 0 : index
    %c0_218 = arith.constant 0 : index
    %c0_219 = arith.constant 0 : index
    %364 = vector.load %arg3[%c0_217, %c0_218, %c0_219] : memref<1x8x16xf32, #tpu.memory_space<vmem>>, vector<1x8x16xf32>
    %365 = vector.shape_cast %364 : vector<1x8x16xf32> to vector<8x16xf32>
    %c0_220 = arith.constant 0 : index
    %c0_221 = arith.constant 0 : index
    %366 = vector.load %arg19[%c0_220, %c0_221] : memref<16x256xf32, #tpu.memory_space<vmem>>, vector<16x256xf32>
    %cst_222 = arith.constant dense<0.000000e+00> : vector<8x256xf32>
    %367 = tpu.matmul %365, %366, %cst_222 {dimension_numbers = #tpu.dot_dimension_numbers<[1], [0], [0], [1], [0, 0, 1, 1], [], []>} : vector<8x16xf32>, vector<16x256xf32>, vector<8x256xf32> -> vector<8x256xf32>
    %c0_223 = arith.constant 0 : index
    %c0_224 = arith.constant 0 : index
    %c0_225 = arith.constant 0 : index
    %368 = vector.load %arg4[%c0_223, %c0_224, %c0_225] : memref<1x8x4xf32, #tpu.memory_space<vmem>>, vector<1x8x4xf32>
    %369 = vector.shape_cast %368 : vector<1x8x4xf32> to vector<8x4xf32>
    %c0_226 = arith.constant 0 : index
    %c0_227 = arith.constant 0 : index
    %370 = vector.load %arg20[%c0_226, %c0_227] : memref<4x256xf32, #tpu.memory_space<vmem>>, vector<4x256xf32>
    %cst_228 = arith.constant dense<0.000000e+00> : vector<8x256xf32>
    %371 = tpu.matmul %369, %370, %cst_228 {dimension_numbers = #tpu.dot_dimension_numbers<[1], [0], [0], [1], [0, 0, 1, 1], [], []>} : vector<8x4xf32>, vector<4x256xf32>, vector<8x256xf32> -> vector<8x256xf32>
    %372 = tpu.concatenate %359, %363, %367, %371 in 0 : vector<8x256xf32>, vector<8x256xf32>, vector<8x256xf32>, vector<8x256xf32> -> vector<32x256xf32>
    %c0_229 = arith.constant 0 : index
    %c128_230 = arith.constant 128 : index
    %373 = vector.load %arg26[%c0_229, %c128_230] : memref<32x512xf32, #tpu.memory_space<vmem>>, vector<32x256xf32>
    tpu.vector_store %arg26[%c0_229, %c128_230], %372 {strides = array<i32>} : memref<32x512xf32, #tpu.memory_space<vmem>>, vector<32x256xf32>,
    %cst_231 = arith.constant 0.000000e+00 : f32
    %374 = vector.broadcast %cst_231 : f32 to vector<32x17xf32>
    %c0_232 = arith.constant 0 : index
    %c384_233 = arith.constant 384 : index
    %375 = vector.load %arg26[%c0_232, %c384_233] : memref<32x512xf32, #tpu.memory_space<vmem>>, vector<32x17xf32>
    tpu.vector_store %arg26[%c0_232, %c384_233], %374 {strides = array<i32>} : memref<32x512xf32, #tpu.memory_space<vmem>>, vector<32x17xf32>,
    %c0_234 = arith.constant 0 : index
    %c111_235 = arith.constant 111 : index
    %376 = vector.load %arg26[%c0_234, %c111_235] : memref<32x512xf32, #tpu.memory_space<vmem>>, vector<32x256xf32>
    %cst_236 = arith.constant 0.000000e+00 : f32
    %377 = vector.shape_cast %48 : vector<1x256xi1> to vector<1x256xi1>
    %378 = vector.broadcast %377 : vector<1x256xi1> to vector<32x256xi1>
    %379 = vector.broadcast %cst_236 : f32 to vector<32x256xf32>
    %380 = arith.select %378, %376, %379 : vector<32x256xi1>, vector<32x256xf32>
    %c0_237 = arith.constant 0 : index
    %c112_238 = arith.constant 112 : index
    %381 = vector.load %arg26[%c0_237, %c112_238] : memref<32x512xf32, #tpu.memory_space<vmem>>, vector<32x256xf32>
    %c0_239 = arith.constant 0 : index
    %c113_240 = arith.constant 113 : index
    %382 = vector.load %arg26[%c0_239, %c113_240] : memref<32x512xf32, #tpu.memory_space<vmem>>, vector<32x256xf32>
    %cst_241 = arith.constant 0.000000e+00 : f32
    %383 = vector.shape_cast %50 : vector<1x256xi1> to vector<1x256xi1>
    %384 = vector.broadcast %383 : vector<1x256xi1> to vector<32x256xi1>
    %385 = vector.broadcast %cst_241 : f32 to vector<32x256xf32>
    %386 = arith.select %384, %382, %385 : vector<32x256xi1>, vector<32x256xf32>
    %387 = tpu.concatenate %380, %381, %386 in 0 : vector<32x256xf32>, vector<32x256xf32>, vector<32x256xf32> -> vector<96x256xf32>
    %cst_242 = arith.constant dense<0.000000e+00> : vector<8x256xf32>
    %388 = tpu.matmul %13, %387, %cst_242 {dimension_numbers = #tpu.dot_dimension_numbers<[1], [0], [0], [1], [0, 0, 1, 1], [], []>} : vector<8x96xf32>, vector<96x256xf32>, vector<8x256xf32> -> vector<8x256xf32>
    %c0_243 = arith.constant 0 : index
    %c127_244 = arith.constant 127 : index
    %389 = vector.load %arg26[%c0_243, %c127_244] : memref<32x512xf32, #tpu.memory_space<vmem>>, vector<32x256xf32>
    %cst_245 = arith.constant 0.000000e+00 : f32
    %390 = vector.shape_cast %48 : vector<1x256xi1> to vector<1x256xi1>
    %391 = vector.broadcast %390 : vector<1x256xi1> to vector<32x256xi1>
    %392 = vector.broadcast %cst_245 : f32 to vector<32x256xf32>
    %393 = arith.select %391, %389, %392 : vector<32x256xi1>, vector<32x256xf32>
    %c0_246 = arith.constant 0 : index
    %c128_247 = arith.constant 128 : index
    %394 = vector.load %arg26[%c0_246, %c128_247] : memref<32x512xf32, #tpu.memory_space<vmem>>, vector<32x256xf32>
    %c0_248 = arith.constant 0 : index
    %c129_249 = arith.constant 129 : index
    %395 = vector.load %arg26[%c0_248, %c129_249] : memref<32x512xf32, #tpu.memory_space<vmem>>, vector<32x256xf32>
    %cst_250 = arith.constant 0.000000e+00 : f32
    %396 = vector.shape_cast %50 : vector<1x256xi1> to vector<1x256xi1>
    %397 = vector.broadcast %396 : vector<1x256xi1> to vector<32x256xi1>
    %398 = vector.broadcast %cst_250 : f32 to vector<32x256xf32>
    %399 = arith.select %397, %395, %398 : vector<32x256xi1>, vector<32x256xf32>
    %400 = tpu.concatenate %393, %394, %399 in 0 : vector<32x256xf32>, vector<32x256xf32>, vector<32x256xf32> -> vector<96x256xf32>
    %cst_251 = arith.constant dense<0.000000e+00> : vector<8x256xf32>
    %401 = tpu.matmul %15, %400, %cst_251 {dimension_numbers = #tpu.dot_dimension_numbers<[1], [0], [0], [1], [0, 0, 1, 1], [], []>} : vector<8x96xf32>, vector<96x256xf32>, vector<8x256xf32> -> vector<8x256xf32>
    %402 = arith.addf %388, %401 : vector<8x256xf32>
    %c0_252 = arith.constant 0 : index
    %c143_253 = arith.constant 143 : index
    %403 = vector.load %arg26[%c0_252, %c143_253] : memref<32x512xf32, #tpu.memory_space<vmem>>, vector<32x256xf32>
    %cst_254 = arith.constant 0.000000e+00 : f32
    %404 = vector.shape_cast %48 : vector<1x256xi1> to vector<1x256xi1>
    %405 = vector.broadcast %404 : vector<1x256xi1> to vector<32x256xi1>
    %406 = vector.broadcast %cst_254 : f32 to vector<32x256xf32>
    %407 = arith.select %405, %403, %406 : vector<32x256xi1>, vector<32x256xf32>
    %c0_255 = arith.constant 0 : index
    %c144_256 = arith.constant 144 : index
    %408 = vector.load %arg26[%c0_255, %c144_256] : memref<32x512xf32, #tpu.memory_space<vmem>>, vector<32x256xf32>
    %c0_257 = arith.constant 0 : index
    %c145_258 = arith.constant 145 : index
    %409 = vector.load %arg26[%c0_257, %c145_258] : memref<32x512xf32, #tpu.memory_space<vmem>>, vector<32x256xf32>
    %cst_259 = arith.constant 0.000000e+00 : f32
    %410 = vector.shape_cast %50 : vector<1x256xi1> to vector<1x256xi1>
    %411 = vector.broadcast %410 : vector<1x256xi1> to vector<32x256xi1>
    %412 = vector.broadcast %cst_259 : f32 to vector<32x256xf32>
    %413 = arith.select %411, %409, %412 : vector<32x256xi1>, vector<32x256xf32>
    %414 = tpu.concatenate %407, %408, %413 in 0 : vector<32x256xf32>, vector<32x256xf32>, vector<32x256xf32> -> vector<96x256xf32>
    %cst_260 = arith.constant dense<0.000000e+00> : vector<8x256xf32>
    %415 = tpu.matmul %17, %414, %cst_260 {dimension_numbers = #tpu.dot_dimension_numbers<[1], [0], [0], [1], [0, 0, 1, 1], [], []>} : vector<8x96xf32>, vector<96x256xf32>, vector<8x256xf32> -> vector<8x256xf32>
    %416 = arith.addf %402, %415 : vector<8x256xf32>
    %417 = vector.broadcast %18 : vector<8x1xf32> to vector<8x256xf32>
    %418 = arith.mulf %416, %417 : vector<8x256xf32>
    %419 = vector.broadcast %19 : vector<8x1xf32> to vector<8x256xf32>
    %420 = arith.addf %418, %419 : vector<8x256xf32>
    %cst_261 = arith.constant 0.000000e+00 : f32
    %421 = vector.broadcast %cst_261 : f32 to vector<8x256xf32>
    %422 = arith.cmpf ogt, %420, %421 : vector<8x256xf32>
    %cst_262 = arith.constant 1.000000e-01 : f32
    %423 = vector.broadcast %cst_262 : f32 to vector<8x256xf32>
    %424 = arith.mulf %423, %420 : vector<8x256xf32>
    %425 = arith.select %422, %420, %424 : vector<8x256xi1>, vector<8x256xf32>
    %c0_263 = arith.constant 0 : index
    %c128_264 = arith.constant 128 : index
    %426 = vector.load %arg26[%c0_263, %c128_264] : memref<32x512xf32, #tpu.memory_space<vmem>>, vector<8x256xf32>
    tpu.vector_store %arg26[%c0_263, %c128_264], %425 {strides = array<i32>} : memref<32x512xf32, #tpu.memory_space<vmem>>, vector<8x256xf32>,
    %cst_265 = arith.constant 0.000000e+00 : f32
    %427 = vector.broadcast %cst_265 : f32 to vector<8x17xf32>
    %c0_266 = arith.constant 0 : index
    %c384_267 = arith.constant 384 : index
    %428 = vector.load %arg26[%c0_266, %c384_267] : memref<32x512xf32, #tpu.memory_space<vmem>>, vector<8x17xf32>
    tpu.vector_store %arg26[%c0_266, %c384_267], %427 {strides = array<i32>} : memref<32x512xf32, #tpu.memory_space<vmem>>, vector<8x17xf32>,
    %c0_268 = arith.constant 0 : index
    %c111_269 = arith.constant 111 : index
    %429 = vector.load %arg26[%c0_268, %c111_269] : memref<32x512xf32, #tpu.memory_space<vmem>>, vector<8x256xf32>
    %cst_270 = arith.constant 0.000000e+00 : f32
    %430 = vector.shape_cast %48 : vector<1x256xi1> to vector<1x256xi1>
    %431 = vector.broadcast %430 : vector<1x256xi1> to vector<8x256xi1>
    %432 = vector.broadcast %cst_270 : f32 to vector<8x256xf32>
    %433 = arith.select %431, %429, %432 : vector<8x256xi1>, vector<8x256xf32>
    %c0_271 = arith.constant 0 : index
    %c112_272 = arith.constant 112 : index
    %434 = vector.load %arg26[%c0_271, %c112_272] : memref<32x512xf32, #tpu.memory_space<vmem>>, vector<8x256xf32>
    %c0_273 = arith.constant 0 : index
    %c113_274 = arith.constant 113 : index
    %435 = vector.load %arg26[%c0_273, %c113_274] : memref<32x512xf32, #tpu.memory_space<vmem>>, vector<8x256xf32>
    %cst_275 = arith.constant 0.000000e+00 : f32
    %436 = vector.shape_cast %50 : vector<1x256xi1> to vector<1x256xi1>
    %437 = vector.broadcast %436 : vector<1x256xi1> to vector<8x256xi1>
    %438 = vector.broadcast %cst_275 : f32 to vector<8x256xf32>
    %439 = arith.select %437, %435, %438 : vector<8x256xi1>, vector<8x256xf32>
    %440 = tpu.concatenate %433, %434, %439 in 0 : vector<8x256xf32>, vector<8x256xf32>, vector<8x256xf32> -> vector<24x256xf32>
    %cst_276 = arith.constant dense<0.000000e+00> : vector<4x256xf32>
    %441 = tpu.matmul %21, %440, %cst_276 {dimension_numbers = #tpu.dot_dimension_numbers<[1], [0], [0], [1], [0, 0, 1, 1], [], []>} : vector<4x24xf32>, vector<24x256xf32>, vector<4x256xf32> -> vector<4x256xf32>
    %c0_277 = arith.constant 0 : index
    %c127_278 = arith.constant 127 : index
    %442 = vector.load %arg26[%c0_277, %c127_278] : memref<32x512xf32, #tpu.memory_space<vmem>>, vector<8x256xf32>
    %cst_279 = arith.constant 0.000000e+00 : f32
    %443 = vector.shape_cast %48 : vector<1x256xi1> to vector<1x256xi1>
    %444 = vector.broadcast %443 : vector<1x256xi1> to vector<8x256xi1>
    %445 = vector.broadcast %cst_279 : f32 to vector<8x256xf32>
    %446 = arith.select %444, %442, %445 : vector<8x256xi1>, vector<8x256xf32>
    %c0_280 = arith.constant 0 : index
    %c128_281 = arith.constant 128 : index
    %447 = vector.load %arg26[%c0_280, %c128_281] : memref<32x512xf32, #tpu.memory_space<vmem>>, vector<8x256xf32>
    %c0_282 = arith.constant 0 : index
    %c129_283 = arith.constant 129 : index
    %448 = vector.load %arg26[%c0_282, %c129_283] : memref<32x512xf32, #tpu.memory_space<vmem>>, vector<8x256xf32>
    %cst_284 = arith.constant 0.000000e+00 : f32
    %449 = vector.shape_cast %50 : vector<1x256xi1> to vector<1x256xi1>
    %450 = vector.broadcast %449 : vector<1x256xi1> to vector<8x256xi1>
    %451 = vector.broadcast %cst_284 : f32 to vector<8x256xf32>
    %452 = arith.select %450, %448, %451 : vector<8x256xi1>, vector<8x256xf32>
    %453 = tpu.concatenate %446, %447, %452 in 0 : vector<8x256xf32>, vector<8x256xf32>, vector<8x256xf32> -> vector<24x256xf32>
    %cst_285 = arith.constant dense<0.000000e+00> : vector<4x256xf32>
    %454 = tpu.matmul %23, %453, %cst_285 {dimension_numbers = #tpu.dot_dimension_numbers<[1], [0], [0], [1], [0, 0, 1, 1], [], []>} : vector<4x24xf32>, vector<24x256xf32>, vector<4x256xf32> -> vector<4x256xf32>
    %455 = arith.addf %441, %454 : vector<4x256xf32>
    %c0_286 = arith.constant 0 : index
    %c143_287 = arith.constant 143 : index
    %456 = vector.load %arg26[%c0_286, %c143_287] : memref<32x512xf32, #tpu.memory_space<vmem>>, vector<8x256xf32>
    %cst_288 = arith.constant 0.000000e+00 : f32
    %457 = vector.shape_cast %48 : vector<1x256xi1> to vector<1x256xi1>
    %458 = vector.broadcast %457 : vector<1x256xi1> to vector<8x256xi1>
    %459 = vector.broadcast %cst_288 : f32 to vector<8x256xf32>
    %460 = arith.select %458, %456, %459 : vector<8x256xi1>, vector<8x256xf32>
    %c0_289 = arith.constant 0 : index
    %c144_290 = arith.constant 144 : index
    %461 = vector.load %arg26[%c0_289, %c144_290] : memref<32x512xf32, #tpu.memory_space<vmem>>, vector<8x256xf32>
    %c0_291 = arith.constant 0 : index
    %c145_292 = arith.constant 145 : index
    %462 = vector.load %arg26[%c0_291, %c145_292] : memref<32x512xf32, #tpu.memory_space<vmem>>, vector<8x256xf32>
    %cst_293 = arith.constant 0.000000e+00 : f32
    %463 = vector.shape_cast %50 : vector<1x256xi1> to vector<1x256xi1>
    %464 = vector.broadcast %463 : vector<1x256xi1> to vector<8x256xi1>
    %465 = vector.broadcast %cst_293 : f32 to vector<8x256xf32>
    %466 = arith.select %464, %462, %465 : vector<8x256xi1>, vector<8x256xf32>
    %467 = tpu.concatenate %460, %461, %466 in 0 : vector<8x256xf32>, vector<8x256xf32>, vector<8x256xf32> -> vector<24x256xf32>
    %cst_294 = arith.constant dense<0.000000e+00> : vector<4x256xf32>
    %468 = tpu.matmul %25, %467, %cst_294 {dimension_numbers = #tpu.dot_dimension_numbers<[1], [0], [0], [1], [0, 0, 1, 1], [], []>} : vector<4x24xf32>, vector<24x256xf32>, vector<4x256xf32> -> vector<4x256xf32>
    %469 = arith.addf %455, %468 : vector<4x256xf32>
    %470 = vector.broadcast %26 : vector<4x1xf32> to vector<4x256xf32>
    %471 = arith.mulf %469, %470 : vector<4x256xf32>
    %472 = vector.broadcast %27 : vector<4x1xf32> to vector<4x256xf32>
    %473 = arith.addf %471, %472 : vector<4x256xf32>
    %cst_295 = arith.constant 0.000000e+00 : f32
    %474 = vector.broadcast %cst_295 : f32 to vector<4x256xf32>
    %475 = arith.cmpf ogt, %473, %474 : vector<4x256xf32>
    %cst_296 = arith.constant 1.000000e-01 : f32
    %476 = vector.broadcast %cst_296 : f32 to vector<4x256xf32>
    %477 = arith.mulf %476, %473 : vector<4x256xf32>
    %478 = arith.select %475, %473, %477 : vector<4x256xi1>, vector<4x256xf32>
    %cst_297 = arith.constant dense<0.000000e+00> : vector<4x256xf32>
    %479 = tpu.matmul %28, %478, %cst_297 {dimension_numbers = #tpu.dot_dimension_numbers<[1], [0], [0], [1], [0, 0, 1, 1], [], []>} : vector<4x4xf32>, vector<4x256xf32>, vector<4x256xf32> -> vector<4x256xf32>
    %480 = vector.broadcast %29 : vector<4x1xf32> to vector<4x256xf32>
    %481 = arith.addf %479, %480 : vector<4x256xf32>
    %c0_298 = arith.constant 0 : index
    %c0_299 = arith.constant 0 : index
    %c0_300 = arith.constant 0 : index
    %482 = vector.load %arg25[%c0_298, %c0_299, %c0_300] : memref<1x4x256xf32, #tpu.memory_space<vmem>>, vector<1x4x256xf32>
    %483 = vector.shape_cast %482 : vector<1x4x256xf32> to vector<4x256xf32>
    %484 = vector.shape_cast %481 : vector<4x256xf32> to vector<1x4x256xf32>
    tpu.vector_store %arg25[%c0_298, %c0_299, %c0_300], %484 {strides = array<i32>} : memref<1x4x256xf32, #tpu.memory_space<vmem>>, vector<1x4x256xf32>,
    return
  }
  func.func @transform_0(%arg0: i32) -> (i32, i32, i32) {
    %c0_i32 = arith.constant 0 : i32
    %c0_i32_0 = arith.constant 0 : i32
    %c0_i32_1 = arith.constant 0 : i32
    return %arg0, %c0_i32, %c0_i32_0 : i32, i32, i32
  }
  func.func @transform_1(%arg0: i32) -> (i32, i32, i32) {
    %c0_i32 = arith.constant 0 : i32
    %c0_i32_0 = arith.constant 0 : i32
    %c0_i32_1 = arith.constant 0 : i32
    return %arg0, %c0_i32, %c0_i32_0 : i32, i32, i32
  }
  func.func @transform_2(%arg0: i32) -> (i32, i32, i32) {
    %c0_i32 = arith.constant 0 : i32
    %c0_i32_0 = arith.constant 0 : i32
    %c0_i32_1 = arith.constant 0 : i32
    return %arg0, %c0_i32, %c0_i32_0 : i32, i32, i32
  }
  func.func @transform_3(%arg0: i32) -> (i32, i32, i32) {
    %c0_i32 = arith.constant 0 : i32
    %c0_i32_0 = arith.constant 0 : i32
    %c0_i32_1 = arith.constant 0 : i32
    return %arg0, %c0_i32, %c0_i32_0 : i32, i32, i32
  }
  func.func @transform_4(%arg0: i32) -> (i32, i32, i32) {
    %c0_i32 = arith.constant 0 : i32
    %c0_i32_0 = arith.constant 0 : i32
    %c0_i32_1 = arith.constant 0 : i32
    %c0_i32_2 = arith.constant 0 : i32
    return %c0_i32, %c0_i32_0, %c0_i32_1 : i32, i32, i32
  }
  func.func @transform_5(%arg0: i32) -> (i32, i32) {
    %c0_i32 = arith.constant 0 : i32
    %c0_i32_0 = arith.constant 0 : i32
    %c0_i32_1 = arith.constant 0 : i32
    return %c0_i32, %c0_i32_0 : i32, i32
  }
  func.func @transform_6(%arg0: i32) -> (i32, i32) {
    %c0_i32 = arith.constant 0 : i32
    %c0_i32_0 = arith.constant 0 : i32
    %c0_i32_1 = arith.constant 0 : i32
    return %c0_i32, %c0_i32_0 : i32, i32
  }
  func.func @transform_7(%arg0: i32) -> (i32, i32) {
    %c0_i32 = arith.constant 0 : i32
    %c0_i32_0 = arith.constant 0 : i32
    %c0_i32_1 = arith.constant 0 : i32
    return %c0_i32, %c0_i32_0 : i32, i32
  }
  func.func @transform_8(%arg0: i32) -> (i32, i32) {
    %c0_i32 = arith.constant 0 : i32
    %c0_i32_0 = arith.constant 0 : i32
    %c0_i32_1 = arith.constant 0 : i32
    return %c0_i32, %c0_i32_0 : i32, i32
  }
  func.func @transform_9(%arg0: i32) -> (i32, i32, i32) {
    %c0_i32 = arith.constant 0 : i32
    %c0_i32_0 = arith.constant 0 : i32
    %c0_i32_1 = arith.constant 0 : i32
    %c0_i32_2 = arith.constant 0 : i32
    return %c0_i32, %c0_i32_0, %c0_i32_1 : i32, i32, i32
  }
  func.func @transform_10(%arg0: i32) -> (i32, i32) {
    %c0_i32 = arith.constant 0 : i32
    %c0_i32_0 = arith.constant 0 : i32
    %c0_i32_1 = arith.constant 0 : i32
    return %c0_i32, %c0_i32_0 : i32, i32
  }
  func.func @transform_11(%arg0: i32) -> (i32, i32) {
    %c0_i32 = arith.constant 0 : i32
    %c0_i32_0 = arith.constant 0 : i32
    %c0_i32_1 = arith.constant 0 : i32
    return %c0_i32, %c0_i32_0 : i32, i32
  }
  func.func @transform_12(%arg0: i32) -> (i32, i32, i32) {
    %c0_i32 = arith.constant 0 : i32
    %c0_i32_0 = arith.constant 0 : i32
    %c0_i32_1 = arith.constant 0 : i32
    %c0_i32_2 = arith.constant 0 : i32
    return %c0_i32, %c0_i32_0, %c0_i32_1 : i32, i32, i32
  }
  func.func @transform_13(%arg0: i32) -> (i32, i32) {
    %c0_i32 = arith.constant 0 : i32
    %c0_i32_0 = arith.constant 0 : i32
    %c0_i32_1 = arith.constant 0 : i32
    return %c0_i32, %c0_i32_0 : i32, i32
  }
  func.func @transform_14(%arg0: i32) -> (i32, i32) {
    %c0_i32 = arith.constant 0 : i32
    %c0_i32_0 = arith.constant 0 : i32
    %c0_i32_1 = arith.constant 0 : i32
    return %c0_i32, %c0_i32_0 : i32, i32
  }
  func.func @transform_15(%arg0: i32) -> (i32, i32) {
    %c0_i32 = arith.constant 0 : i32
    %c0_i32_0 = arith.constant 0 : i32
    %c0_i32_1 = arith.constant 0 : i32
    return %c0_i32, %c0_i32_0 : i32, i32
  }
  func.func @transform_16(%arg0: i32) -> (i32, i32) {
    %c0_i32 = arith.constant 0 : i32
    %c0_i32_0 = arith.constant 0 : i32
    %c0_i32_1 = arith.constant 0 : i32
    return %c0_i32, %c0_i32_0 : i32, i32
  }
  func.func @transform_17(%arg0: i32) -> (i32, i32) {
    %c0_i32 = arith.constant 0 : i32
    %c0_i32_0 = arith.constant 0 : i32
    %c0_i32_1 = arith.constant 0 : i32
    return %c0_i32, %c0_i32_0 : i32, i32
  }
  func.func @transform_18(%arg0: i32) -> (i32, i32) {
    %c0_i32 = arith.constant 0 : i32
    %c0_i32_0 = arith.constant 0 : i32
    %c0_i32_1 = arith.constant 0 : i32
    return %c0_i32, %c0_i32_0 : i32, i32
  }
  func.func @transform_19(%arg0: i32) -> (i32, i32) {
    %c0_i32 = arith.constant 0 : i32
    %c0_i32_0 = arith.constant 0 : i32
    %c0_i32_1 = arith.constant 0 : i32
    return %c0_i32, %c0_i32_0 : i32, i32
  }
  func.func @transform_20(%arg0: i32) -> (i32, i32, i32) {
    %c0_i32 = arith.constant 0 : i32
    %c0_i32_0 = arith.constant 0 : i32
    %c0_i32_1 = arith.constant 0 : i32
    return %arg0, %c0_i32, %c0_i32_0 : i32, i32, i32
  }
  func.func @transform_21(%arg0: i32) -> (i32, i32, i32) {
    %c0_i32 = arith.constant 0 : i32
    %c0_i32_0 = arith.constant 0 : i32
    %c0_i32_1 = arith.constant 0 : i32
    return %arg0, %c0_i32, %c0_i32_0 : i32, i32, i32
  }
  func.func @transform_22(%arg0: i32) -> (i32, i32, i32) {
    %c0_i32 = arith.constant 0 : i32
    %c0_i32_0 = arith.constant 0 : i32
    %c0_i32_1 = arith.constant 0 : i32
    return %arg0, %c0_i32, %c0_i32_0 : i32, i32, i32
  }
  func.func @transform_23(%arg0: i32) -> (i32, i32, i32) {
    %c0_i32 = arith.constant 0 : i32
    %c0_i32_0 = arith.constant 0 : i32
    %c0_i32_1 = arith.constant 0 : i32
    return %arg0, %c0_i32, %c0_i32_0 : i32, i32, i32
  }
  func.func @transform_24(%arg0: i32) -> (i32, i32, i32) {
    %c0_i32 = arith.constant 0 : i32
    %c0_i32_0 = arith.constant 0 : i32
    %c0_i32_1 = arith.constant 0 : i32
    return %arg0, %c0_i32, %c0_i32_0 : i32, i32, i32
  }
}

</mosaic_0001>

<llo_original>
// kernel: tpu_custom_call.1
$region0: #{tpu_custom_call.1}
  #allocation0 [shape = 'u32[]', space=smem, size = 0x4, offset = 0x4, fixed_abs, tag = 'smem constant byte address 0x4 - core index']
  #allocation1 [shape = 'u32[144,128]{1,0:T(1,128)}', space=vmem, size = 0x12000, scoped, tag = 'internal scratch']
  #allocation2 [shape = 'f32[32,512]{1,0:T(8,128)}', space=vmem, size = 0x10000, scoped, tag = 'scratch operand']
  %s0 = inlined_call_operand.vmem [shape: f32[2,8,256], index: 0, kind: input, shape index: {}]
  %s1 = inlined_call_operand.vmem [shape: f32[2,8,64], index: 1, kind: input, shape index: {}]
  %s2 = inlined_call_operand.hbm [shape: f32[2,8,16], index: 2, kind: input, shape index: {}]
  %s3 = inlined_call_operand.vmem [shape: f32[2,8,4], index: 3, kind: input, shape index: {}]
  %s4 = inlined_call_operand.hbm [shape: f32[3,8,24], index: 4, kind: input, shape index: {}]
  %s5 = inlined_call_operand.vmem [shape: f32[8,1], index: 5, kind: input, shape index: {}]
  %s6 = inlined_call_operand.vmem [shape: f32[8,1], index: 6, kind: input, shape index: {}]
  %s7 = inlined_call_operand.vmem [shape: f32[30,8], index: 7, kind: input, shape index: {}]
  %s8 = inlined_call_operand.vmem [shape: f32[30,1], index: 8, kind: input, shape index: {}]
  %s9 = inlined_call_operand.hbm [shape: f32[3,8,96], index: 9, kind: input, shape index: {}]
  %s10 = inlined_call_operand.vmem [shape: f32[8,1], index: 10, kind: input, shape index: {}]
  %s11 = inlined_call_operand.vmem [shape: f32[8,1], index: 11, kind: input, shape index: {}]
  %s12 = inlined_call_operand.hbm [shape: f32[3,4,24], index: 12, kind: input, shape index: {}]
  %s13 = inlined_call_operand.vmem [shape: f32[4,1], index: 13, kind: input, shape index: {}]
  %s14 = inlined_call_operand.vmem [shape: f32[4,1], index: 14, kind: input, shape index: {}]
  %s15 = inlined_call_operand.hbm [shape: f32[4,4], index: 15, kind: input, shape index: {}]
  %s16 = inlined_call_operand.vmem [shape: f32[4,1], index: 16, kind: input, shape index: {}]
  %s17 = inlined_call_operand.vmem [shape: f32[64,256], index: 17, kind: input, shape index: {}]
  %s18 = inlined_call_operand.vmem [shape: f32[16,256], index: 18, kind: input, shape index: {}]
  %s19 = inlined_call_operand.vmem [shape: f32[4,256], index: 19, kind: input, shape index: {}]
  %s20 = inlined_call_operand.vmem [shape: f32[2,30,256], index: 20, kind: output, shape index: {0}]
  %s21 = inlined_call_operand.vmem [shape: f32[2,30,64], index: 21, kind: output, shape index: {1}]
  %s22 = inlined_call_operand.vmem [shape: f32[2,30,16], index: 22, kind: output, shape index: {2}]
  %s23 = inlined_call_operand.vmem [shape: f32[2,30,4], index: 23, kind: output, shape index: {3}]
  %s24 = inlined_call_operand.hbm [shape: f32[2,4,256], index: 24, kind: output, shape index: {4}]
  %25 = xla_tuple %s20, %s21, %s22, %s23, %s24
  %s26 = sld [smem:[#allocation0]]
  $region165: #{tpu_custom_call.1} parent=0
    _
  %s28 = ssub.s32 1, %s26
  %s29 = scalar_select 0, %s28, %s26
  $region1: #{tpu_custom_call.1} parent=0
    #allocation3 [shape = 'u8[8192]{0}', space=vmem, size = 0x2000, scoped, tag = 'input window, operand 2']
    #allocation4 [shape = 's32[2]{0}', space=sflag, size = 0x8, scoped, tag = 'scoped memory for tpu_custom_call.1']
    #allocation5 [shape = 's32[2]{0}', space=sflag, size = 0x8, scoped, tag = 'scoped memory for tpu_custom_call.1']
    #allocation6 [shape = 'u8[12288]{0}', space=vmem, size = 0x3000, scoped, tag = 'input window, operand 4, single buffered']
    #allocation7 [shape = 's32[1]{0}', space=sflag, size = 0x4, scoped, tag = 'scoped memory for tpu_custom_call.1']
    #allocation8 [shape = 'u8[12288]{0}', space=vmem, size = 0x3000, scoped, tag = 'input window, operand 9, single buffered']
    #allocation9 [shape = 'u8[6144]{0}', space=vmem, size = 0x1800, scoped, tag = 'input window, operand 12, single buffered']
    #allocation10 [shape = 's32[1]{0}', space=sflag, size = 0x4, scoped, tag = 'scoped memory for tpu_custom_call.1']
    #allocation11 [shape = 'u8[2048]{0}', space=vmem, size = 0x800, scoped, tag = 'input window, operand 15, single buffered']
    #allocation12 [shape = 'u8[8192]{0}', space=vmem, size = 0x2000, scoped, tag = 'output window, operand 4']
    %30 = vsyncpa [#allocation4], 0
    %s31 = scalar_lea.sflag [#allocation4], 1
    %32 = vsyncpa %s31, 0
    %33 = vsyncpa [#allocation7], 0
    %34 = vsyncpa [#allocation10], 0
    %35 = vsyncpa [#allocation5], 0
    %s36 = scalar_lea.sflag [#allocation5], 1
    %37 = vsyncpa %s36, 0
    loop: start=0, step=1, limit=4
    $region2: #{tpu_custom_call.1} parent=1 // loop_pre_header
      _
    $region3: #{tpu_custom_call.1} parent=1 // loop_header
      %s39 = sphi 0, %s43
      %p40 = scmp.ge.s32.totalorder %s39, 4
      %s49 = sphi 0, %s51
      %s52 = sphi 0, %s49
      %s53 = sphi 0, %s52
      %s69 = sphi 0, %s53
      %s75 = sphi 0, %s77
      %s78 = sphi 0, %s75
      %s79 = sphi 0, %s78
      %s95 = sphi 0, %s79
      %s101 = sphi 0, %s103
      %s104 = sphi 0, %s101
      %s105 = sphi 0, %s104
      %s121 = sphi 0, %s105
      %s127 = sphi 0, %s129
      %s130 = sphi 0, %s127
      %s131 = sphi 0, %s130
      %s147 = sphi 0, %s131
      %s151 = sphi 0, %s151
      %s153 = sphi 0, %s151
      %s154 = sphi 0, %s153
      %s168 = sphi 0, %s154
      %s172 = sphi 0, %s172
      %s174 = sphi 0, %s172
      %s175 = sphi 0, %s174
      %s189 = sphi 0, %s175
      %s193 = sphi 0, %s193
      %s195 = sphi 0, %s193
      %s196 = sphi 0, %s195
      %s210 = sphi 0, %s196
      %s214 = sphi 0, %s214
      %s216 = sphi 0, %s214
      %s217 = sphi 0, %s216
      %s231 = sphi 0, %s217
      %s235 = sphi 0, %s235
      %s237 = sphi 0, %s235
      %s238 = sphi 0, %s237
      %s252 = sphi 0, %s238
      %s256 = sphi 0, %s256
      %s258 = sphi 0, %s256
      %s259 = sphi 0, %s258
      %s273 = sphi 0, %s259
      %s277 = sphi 0, %s277
      %s279 = sphi 0, %s277
      %s280 = sphi 0, %s279
      %s294 = sphi 0, %s280
      %s298 = sphi 0, %s298
      %s300 = sphi 0, %s298
      %s301 = sphi 0, %s300
      %s315 = sphi 0, %s301
      %s319 = sphi 0, %s319
      %s321 = sphi 0, %s319
      %s322 = sphi 0, %s321
      %s336 = sphi 0, %s322
      %s340 = sphi 0, %s340
      %s342 = sphi 0, %s340
      %s343 = sphi 0, %s342
      %s357 = sphi 0, %s343
      %s361 = sphi 0, %s361
      %s363 = sphi 0, %s361
      %s364 = sphi 0, %s363
      %s378 = sphi 0, %s364
      %s382 = sphi 0, %s382
      %s384 = sphi 0, %s382
      %s385 = sphi 0, %s384
      %s399 = sphi 0, %s385
      %s403 = sphi 0, %s403
      %s405 = sphi 0, %s403
      %s406 = sphi 0, %s405
      %s420 = sphi 0, %s406
      %s424 = sphi 0, %s424
      %s426 = sphi 0, %s424
      %s427 = sphi 0, %s426
      %s441 = sphi 0, %s427
      %s445 = sphi 0, %s445
      %s447 = sphi 0, %s445
      %s448 = sphi 0, %s447
      %s462 = sphi 0, %s448
      %s466 = sphi 0, %s466
      %s468 = sphi 0, %s466
      %s469 = sphi 0, %s468
      %s483 = sphi 0, %s469
      %s489 = sphi 0, %s491
      %s492 = sphi 0, %s489
      %s493 = sphi 0, %s492
      %s509 = sphi 0, %s493
      %s515 = sphi 0, %s517
      %s518 = sphi 0, %s515
      %s519 = sphi 0, %s518
      %s535 = sphi 0, %s519
      %s541 = sphi 0, %s543
      %s544 = sphi 0, %s541
      %s545 = sphi 0, %s544
      %s561 = sphi 0, %s545
      %s567 = sphi 0, %s569
      %s570 = sphi 0, %s567
      %s571 = sphi 0, %s570
      %s587 = sphi 0, %s571
      %s593 = sphi 0, %s595
      %s596 = sphi 0, %s593
      %s597 = sphi 0, %s596
      %s613 = sphi 0, %s597
    $region4: #{tpu_custom_call.1} parent=1 // loop_header_branch
      %42 = sbr.rel (%p40) target = $region8
    $region5: #{tpu_custom_call.1} parent=1 // loop_body
      %s44 = ssub.s32 %s39, 1
      %s45 = ssub.s32 %s39, 2
      %s46 = sadd.s32 %s39, 1
      %s47 = ssub.s32 %s39, %s46
      %p48 = scmp.eq.s32.totalorder %s47, 0
      %s50 = sadd.s32 %s49, 1
      %s51 = scalar_select %p48, %s49, %s50
      %p54 = pneg %p48
      %p55 = scmp.eq.s32.totalorder %s39, 1
      %p56 = por %p54, %p55
      %p57 = scmp.ne.s32.totalorder %s49, %s52
      %p58 = scmp.eq.s32.totalorder %s39, 0
      %p59 = por %p57, %p58
      %p60 = scmp.ne.s32.totalorder %s49, %s52
      %p61 = scmp.eq.s32.totalorder %s44, 1
      %p62 = por %p60, %p61
      %p63 = scmp.ne.s32.totalorder %s52, %s53
      %p64 = scmp.eq.s32.totalorder %s44, 0
      %p65 = por %p63, %p64
      %p66 = scmp.ne.s32.totalorder %s52, %s53
      %p67 = scmp.eq.s32.totalorder %s45, 1
      %p68 = por %p66, %p67
      %p70 = scmp.ne.s32.totalorder %s53, %s69
      %p71 = scmp.eq.s32.totalorder %s45, 0
      %p72 = por %p70, %p71
      %s73 = ssub.s32 %s39, %s46
      %p74 = scmp.eq.s32.totalorder %s73, 0
      %s76 = sadd.s32 %s75, 1
      %s77 = scalar_select %p74, %s75, %s76
      %p80 = pneg %p74
      %p81 = scmp.eq.s32.totalorder %s39, 1
      %p82 = por %p80, %p81
      %p83 = scmp.ne.s32.totalorder %s75, %s78
      %p84 = scmp.eq.s32.totalorder %s39, 0
      %p85 = por %p83, %p84
      %p86 = scmp.ne.s32.totalorder %s75, %s78
      %p87 = scmp.eq.s32.totalorder %s44, 1
      %p88 = por %p86, %p87
      %p89 = scmp.ne.s32.totalorder %s78, %s79
      %p90 = scmp.eq.s32.totalorder %s44, 0
      %p91 = por %p89, %p90
      %p92 = scmp.ne.s32.totalorder %s78, %s79
      %p93 = scmp.eq.s32.totalorder %s45, 1
      %p94 = por %p92, %p93
      %p96 = scmp.ne.s32.totalorder %s79, %s95
      %p97 = scmp.eq.s32.totalorder %s45, 0
      %p98 = por %p96, %p97
      %s99 = ssub.s32 %s39, %s46
      %p100 = scmp.eq.s32.totalorder %s99, 0
      %s102 = sadd.s32 %s101, 1
      %s103 = scalar_select %p100, %s101, %s102
      %p106 = pneg %p100
      %p107 = scmp.eq.s32.totalorder %s39, 1
      %p108 = por %p106, %p107
      %p109 = scmp.ne.s32.totalorder %s101, %s104
      %p110 = scmp.eq.s32.totalorder %s39, 0
      %p111 = por %p109, %p110
      %p112 = scmp.ne.s32.totalorder %s101, %s104
      %p113 = scmp.eq.s32.totalorder %s44, 1
      %p114 = por %p112, %p113
      %p115 = scmp.ne.s32.totalorder %s104, %s105
      %p116 = scmp.eq.s32.totalorder %s44, 0
      %p117 = por %p115, %p116
      %p118 = scmp.ne.s32.totalorder %s104, %s105
      %p119 = scmp.eq.s32.totalorder %s45, 1
      %p120 = por %p118, %p119
      %p122 = scmp.ne.s32.totalorder %s105, %s121
      %p123 = scmp.eq.s32.totalorder %s45, 0
      %p124 = por %p122, %p123
      %s125 = ssub.s32 %s39, %s46
      %p126 = scmp.eq.s32.totalorder %s125, 0
      %s128 = sadd.s32 %s127, 1
      %s129 = scalar_select %p126, %s127, %s128
      %p132 = pneg %p126
      %p133 = scmp.eq.s32.totalorder %s39, 1
      %p134 = por %p132, %p133
      %p135 = scmp.ne.s32.totalorder %s127, %s130
      %p136 = scmp.eq.s32.totalorder %s39, 0
      %p137 = por %p135, %p136
      %p138 = scmp.ne.s32.totalorder %s127, %s130
      %p139 = scmp.eq.s32.totalorder %s44, 1
      %p140 = por %p138, %p139
      %p141 = scmp.ne.s32.totalorder %s130, %s131
      %p142 = scmp.eq.s32.totalorder %s44, 0
      %p143 = por %p141, %p142
      %p144 = scmp.ne.s32.totalorder %s130, %s131
      %p145 = scmp.eq.s32.totalorder %s45, 1
      %p146 = por %p144, %p145
      %p148 = scmp.ne.s32.totalorder %s131, %s147
      %p149 = scmp.eq.s32.totalorder %s45, 0
      %p150 = por %p148, %p149
      %s152 = sadd.s32 %s151, 1
      %p155 = scmp.eq.s32.totalorder %s39, 1
      %p156 = scmp.ne.s32.totalorder %s151, %s153
      %p157 = scmp.eq.s32.totalorder %s39, 0
      %p158 = por %p156, %p157
      %p159 = scmp.ne.s32.totalorder %s151, %s153
      %p160 = scmp.eq.s32.totalorder %s44, 1
      %p161 = por %p159, %p160
      %p162 = scmp.ne.s32.totalorder %s153, %s154
      %p163 = scmp.eq.s32.totalorder %s44, 0
      %p164 = por %p162, %p163
      %p165 = scmp.ne.s32.totalorder %s153, %s154
      %p166 = scmp.eq.s32.totalorder %s45, 1
      %p167 = por %p165, %p166
      %p169 = scmp.ne.s32.totalorder %s154, %s168
      %p170 = scmp.eq.s32.totalorder %s45, 0
      %p171 = por %p169, %p170
      %s173 = sadd.s32 %s172, 1
      %p176 = scmp.eq.s32.totalorder %s39, 1
      %p177 = scmp.ne.s32.totalorder %s172, %s174
      %p178 = scmp.eq.s32.totalorder %s39, 0
      %p179 = por %p177, %p178
      %p180 = scmp.ne.s32.totalorder %s172, %s174
      %p181 = scmp.eq.s32.totalorder %s44, 1
      %p182 = por %p180, %p181
      %p183 = scmp.ne.s32.totalorder %s174, %s175
      %p184 = scmp.eq.s32.totalorder %s44, 0
      %p185 = por %p183, %p184
      %p186 = scmp.ne.s32.totalorder %s174, %s175
      %p187 = scmp.eq.s32.totalorder %s45, 1
      %p188 = por %p186, %p187
      %p190 = scmp.ne.s32.totalorder %s175, %s189
      %p191 = scmp.eq.s32.totalorder %s45, 0
      %p192 = por %p190, %p191
      %s194 = sadd.s32 %s193, 1
      %p197 = scmp.eq.s32.totalorder %s39, 1
      %p198 = scmp.ne.s32.totalorder %s193, %s195
      %p199 = scmp.eq.s32.totalorder %s39, 0
      %p200 = por %p198, %p199
      %p201 = scmp.ne.s32.totalorder %s193, %s195
      %p202 = scmp.eq.s32.totalorder %s44, 1
      %p203 = por %p201, %p202
      %p204 = scmp.ne.s32.totalorder %s195, %s196
      %p205 = scmp.eq.s32.totalorder %s44, 0
      %p206 = por %p204, %p205
      %p207 = scmp.ne.s32.totalorder %s195, %s196
      %p208 = scmp.eq.s32.totalorder %s45, 1
      %p209 = por %p207, %p208
      %p211 = scmp.ne.s32.totalorder %s196, %s210
      %p212 = scmp.eq.s32.totalorder %s45, 0
      %p213 = por %p211, %p212
      %s215 = sadd.s32 %s214, 1
      %p218 = scmp.eq.s32.totalorder %s39, 1
      %p219 = scmp.ne.s32.totalorder %s214, %s216
      %p220 = scmp.eq.s32.totalorder %s39, 0
      %p221 = por %p219, %p220
      %p222 = scmp.ne.s32.totalorder %s214, %s216
      %p223 = scmp.eq.s32.totalorder %s44, 1
      %p224 = por %p222, %p223
      %p225 = scmp.ne.s32.totalorder %s216, %s217
      %p226 = scmp.eq.s32.totalorder %s44, 0
      %p227 = por %p225, %p226
      %p228 = scmp.ne.s32.totalorder %s216, %s217
      %p229 = scmp.eq.s32.totalorder %s45, 1
      %p230 = por %p228, %p229
      %p232 = scmp.ne.s32.totalorder %s217, %s231
      %p233 = scmp.eq.s32.totalorder %s45, 0
      %p234 = por %p232, %p233
      %s236 = sadd.s32 %s235, 1
      %p239 = scmp.eq.s32.totalorder %s39, 1
      %p240 = scmp.ne.s32.totalorder %s235, %s237
      %p241 = scmp.eq.s32.totalorder %s39, 0
      %p242 = por %p240, %p241
      %p243 = scmp.ne.s32.totalorder %s235, %s237
      %p244 = scmp.eq.s32.totalorder %s44, 1
      %p245 = por %p243, %p244
      %p246 = scmp.ne.s32.totalorder %s237, %s238
      %p247 = scmp.eq.s32.totalorder %s44, 0
      %p248 = por %p246, %p247
      %p249 = scmp.ne.s32.totalorder %s237, %s238
      %p250 = scmp.eq.s32.totalorder %s45, 1
      %p251 = por %p249, %p250
      %p253 = scmp.ne.s32.totalorder %s238, %s252
      %p254 = scmp.eq.s32.totalorder %s45, 0
      %p255 = por %p253, %p254
      %s257 = sadd.s32 %s256, 1
      %p260 = scmp.eq.s32.totalorder %s39, 1
      %p261 = scmp.ne.s32.totalorder %s256, %s258
      %p262 = scmp.eq.s32.totalorder %s39, 0
      %p263 = por %p261, %p262
      %p264 = scmp.ne.s32.totalorder %s256, %s258
      %p265 = scmp.eq.s32.totalorder %s44, 1
      %p266 = por %p264, %p265
      %p267 = scmp.ne.s32.totalorder %s258, %s259
      %p268 = scmp.eq.s32.totalorder %s44, 0
      %p269 = por %p267, %p268
      %p270 = scmp.ne.s32.totalorder %s258, %s259
      %p271 = scmp.eq.s32.totalorder %s45, 1
      %p272 = por %p270, %p271
      %p274 = scmp.ne.s32.totalorder %s259, %s273
      %p275 = scmp.eq.s32.totalorder %s45, 0
      %p276 = por %p274, %p275
      %s278 = sadd.s32 %s277, 1
      %p281 = scmp.eq.s32.totalorder %s39, 1
      %p282 = scmp.ne.s32.totalorder %s277, %s279
      %p283 = scmp.eq.s32.totalorder %s39, 0
      %p284 = por %p282, %p283
      %p285 = scmp.ne.s32.totalorder %s277, %s279
      %p286 = scmp.eq.s32.totalorder %s44, 1
      %p287 = por %p285, %p286
      %p288 = scmp.ne.s32.totalorder %s279, %s280
      %p289 = scmp.eq.s32.totalorder %s44, 0
      %p290 = por %p288, %p289
      %p291 = scmp.ne.s32.totalorder %s279, %s280
      %p292 = scmp.eq.s32.totalorder %s45, 1
      %p293 = por %p291, %p292
      %p295 = scmp.ne.s32.totalorder %s280, %s294
      %p296 = scmp.eq.s32.totalorder %s45, 0
      %p297 = por %p295, %p296
      %s299 = sadd.s32 %s298, 1
      %p302 = scmp.eq.s32.totalorder %s39, 1
      %p303 = scmp.ne.s32.totalorder %s298, %s300
      %p304 = scmp.eq.s32.totalorder %s39, 0
      %p305 = por %p303, %p304
      %p306 = scmp.ne.s32.totalorder %s298, %s300
      %p307 = scmp.eq.s32.totalorder %s44, 1
      %p308 = por %p306, %p307
      %p309 = scmp.ne.s32.totalorder %s300, %s301
      %p310 = scmp.eq.s32.totalorder %s44, 0
      %p311 = por %p309, %p310
      %p312 = scmp.ne.s32.totalorder %s300, %s301
      %p313 = scmp.eq.s32.totalorder %s45, 1
      %p314 = por %p312, %p313
      %p316 = scmp.ne.s32.totalorder %s301, %s315
      %p317 = scmp.eq.s32.totalorder %s45, 0
      %p318 = por %p316, %p317
      %s320 = sadd.s32 %s319, 1
      %p323 = scmp.eq.s32.totalorder %s39, 1
      %p324 = scmp.ne.s32.totalorder %s319, %s321
      %p325 = scmp.eq.s32.totalorder %s39, 0
      %p326 = por %p324, %p325
      %p327 = scmp.ne.s32.totalorder %s319, %s321
      %p328 = scmp.eq.s32.totalorder %s44, 1
      %p329 = por %p327, %p328
      %p330 = scmp.ne.s32.totalorder %s321, %s322
      %p331 = scmp.eq.s32.totalorder %s44, 0
      %p332 = por %p330, %p331
      %p333 = scmp.ne.s32.totalorder %s321, %s322
      %p334 = scmp.eq.s32.totalorder %s45, 1
      %p335 = por %p333, %p334
      %p337 = scmp.ne.s32.totalorder %s322, %s336
      %p338 = scmp.eq.s32.totalorder %s45, 0
      %p339 = por %p337, %p338
      %s341 = sadd.s32 %s340, 1
      %p344 = scmp.eq.s32.totalorder %s39, 1
      %p345 = scmp.ne.s32.totalorder %s340, %s342
      %p346 = scmp.eq.s32.totalorder %s39, 0
      %p347 = por %p345, %p346
      %p348 = scmp.ne.s32.totalorder %s340, %s342
      %p349 = scmp.eq.s32.totalorder %s44, 1
      %p350 = por %p348, %p349
      %p351 = scmp.ne.s32.totalorder %s342, %s343
      %p352 = scmp.eq.s32.totalorder %s44, 0
      %p353 = por %p351, %p352
      %p354 = scmp.ne.s32.totalorder %s342, %s343
      %p355 = scmp.eq.s32.totalorder %s45, 1
      %p356 = por %p354, %p355
      %p358 = scmp.ne.s32.totalorder %s343, %s357
      %p359 = scmp.eq.s32.totalorder %s45, 0
      %p360 = por %p358, %p359
      %s362 = sadd.s32 %s361, 1
      %p365 = scmp.eq.s32.totalorder %s39, 1
      %p366 = scmp.ne.s32.totalorder %s361, %s363
      %p367 = scmp.eq.s32.totalorder %s39, 0
      %p368 = por %p366, %p367
      %p369 = scmp.ne.s32.totalorder %s361, %s363
      %p370 = scmp.eq.s32.totalorder %s44, 1
      %p371 = por %p369, %p370
      %p372 = scmp.ne.s32.totalorder %s363, %s364
      %p373 = scmp.eq.s32.totalorder %s44, 0
      %p374 = por %p372, %p373
      %p375 = scmp.ne.s32.totalorder %s363, %s364
      %p376 = scmp.eq.s32.totalorder %s45, 1
      %p377 = por %p375, %p376
      %p379 = scmp.ne.s32.totalorder %s364, %s378
      %p380 = scmp.eq.s32.totalorder %s45, 0
      %p381 = por %p379, %p380
      %s383 = sadd.s32 %s382, 1
      %p386 = scmp.eq.s32.totalorder %s39, 1
      %p387 = scmp.ne.s32.totalorder %s382, %s384
      %p388 = scmp.eq.s32.totalorder %s39, 0
      %p389 = por %p387, %p388
      %p390 = scmp.ne.s32.totalorder %s382, %s384
      %p391 = scmp.eq.s32.totalorder %s44, 1
      %p392 = por %p390, %p391
      %p393 = scmp.ne.s32.totalorder %s384, %s385
      %p394 = scmp.eq.s32.totalorder %s44, 0
      %p395 = por %p393, %p394
      %p396 = scmp.ne.s32.totalorder %s384, %s385
      %p397 = scmp.eq.s32.totalorder %s45, 1
      %p398 = por %p396, %p397
      %p400 = scmp.ne.s32.totalorder %s385, %s399
      %p401 = scmp.eq.s32.totalorder %s45, 0
      %p402 = por %p400, %p401
      %s404 = sadd.s32 %s403, 1
      %p407 = scmp.eq.s32.totalorder %s39, 1
      %p408 = scmp.ne.s32.totalorder %s403, %s405
      %p409 = scmp.eq.s32.totalorder %s39, 0
      %p410 = por %p408, %p409
      %p411 = scmp.ne.s32.totalorder %s403, %s405
      %p412 = scmp.eq.s32.totalorder %s44, 1
      %p413 = por %p411, %p412
      %p414 = scmp.ne.s32.totalorder %s405, %s406
      %p415 = scmp.eq.s32.totalorder %s44, 0
      %p416 = por %p414, %p415
      %p417 = scmp.ne.s32.totalorder %s405, %s406
      %p418 = scmp.eq.s32.totalorder %s45, 1
      %p419 = por %p417, %p418
      %p421 = scmp.ne.s32.totalorder %s406, %s420
      %p422 = scmp.eq.s32.totalorder %s45, 0
      %p423 = por %p421, %p422
      %s425 = sadd.s32 %s424, 1
      %p428 = scmp.eq.s32.totalorder %s39, 1
      %p429 = scmp.ne.s32.totalorder %s424, %s426
      %p430 = scmp.eq.s32.totalorder %s39, 0
      %p431 = por %p429, %p430
      %p432 = scmp.ne.s32.totalorder %s424, %s426
      %p433 = scmp.eq.s32.totalorder %s44, 1
      %p434 = por %p432, %p433
      %p435 = scmp.ne.s32.totalorder %s426, %s427
      %p436 = scmp.eq.s32.totalorder %s44, 0
      %p437 = por %p435, %p436
      %p438 = scmp.ne.s32.totalorder %s426, %s427
      %p439 = scmp.eq.s32.totalorder %s45, 1
      %p440 = por %p438, %p439
      %p442 = scmp.ne.s32.totalorder %s427, %s441
      %p443 = scmp.eq.s32.totalorder %s45, 0
      %p444 = por %p442, %p443
      %s446 = sadd.s32 %s445, 1
      %p449 = scmp.eq.s32.totalorder %s39, 1
      %p450 = scmp.ne.s32.totalorder %s445, %s447
      %p451 = scmp.eq.s32.totalorder %s39, 0
      %p452 = por %p450, %p451
      %p453 = scmp.ne.s32.totalorder %s445, %s447
      %p454 = scmp.eq.s32.totalorder %s44, 1
      %p455 = por %p453, %p454
      %p456 = scmp.ne.s32.totalorder %s447, %s448
      %p457 = scmp.eq.s32.totalorder %s44, 0
      %p458 = por %p456, %p457
      %p459 = scmp.ne.s32.totalorder %s447, %s448
      %p460 = scmp.eq.s32.totalorder %s45, 1
      %p461 = por %p459, %p460
      %p463 = scmp.ne.s32.totalorder %s448, %s462
      %p464 = scmp.eq.s32.totalorder %s45, 0
      %p465 = por %p463, %p464
      %s467 = sadd.s32 %s466, 1
      %p470 = scmp.eq.s32.totalorder %s39, 1
      %p471 = scmp.ne.s32.totalorder %s466, %s468
      %p472 = scmp.eq.s32.totalorder %s39, 0
      %p473 = por %p471, %p472
      %p474 = scmp.ne.s32.totalorder %s466, %s468
      %p475 = scmp.eq.s32.totalorder %s44, 1
      %p476 = por %p474, %p475
      %p477 = scmp.ne.s32.totalorder %s468, %s469
      %p478 = scmp.eq.s32.totalorder %s44, 0
      %p479 = por %p477, %p478
      %p480 = scmp.ne.s32.totalorder %s468, %s469
      %p481 = scmp.eq.s32.totalorder %s45, 1
      %p482 = por %p480, %p481
      %p484 = scmp.ne.s32.totalorder %s469, %s483
      %p485 = scmp.eq.s32.totalorder %s45, 0
      %p486 = por %p484, %p485
      %s487 = ssub.s32 %s39, %s46
      %p488 = scmp.eq.s32.totalorder %s487, 0
      %s490 = sadd.s32 %s489, 1
      %s491 = scalar_select %p488, %s489, %s490
      %p494 = pneg %p488
      %p495 = scmp.eq.s32.totalorder %s39, 1
      %p496 = por %p494, %p495
      %p497 = scmp.ne.s32.totalorder %s489, %s492
      %p498 = scmp.eq.s32.totalorder %s39, 0
      %p499 = por %p497, %p498
      %p500 = scmp.ne.s32.totalorder %s489, %s492
      %p501 = scmp.eq.s32.totalorder %s44, 1
      %p502 = por %p500, %p501
      %p503 = scmp.ne.s32.totalorder %s492, %s493
      %p504 = scmp.eq.s32.totalorder %s44, 0
      %p505 = por %p503, %p504
      %p506 = scmp.ne.s32.totalorder %s492, %s493
      %p507 = scmp.eq.s32.totalorder %s45, 1
      %p508 = por %p506, %p507
      %p510 = scmp.ne.s32.totalorder %s493, %s509
      %p511 = scmp.eq.s32.totalorder %s45, 0
      %p512 = por %p510, %p511
      %s513 = ssub.s32 %s39, %s46
      %p514 = scmp.eq.s32.totalorder %s513, 0
      %s516 = sadd.s32 %s515, 1
      %s517 = scalar_select %p514, %s515, %s516
      %p520 = pneg %p514
      %p521 = scmp.eq.s32.totalorder %s39, 1
      %p522 = por %p520, %p521
      %p523 = scmp.ne.s32.totalorder %s515, %s518
      %p524 = scmp.eq.s32.totalorder %s39, 0
      %p525 = por %p523, %p524
      %p526 = scmp.ne.s32.totalorder %s515, %s518
      %p527 = scmp.eq.s32.totalorder %s44, 1
      %p528 = por %p526, %p527
      %p529 = scmp.ne.s32.totalorder %s518, %s519
      %p530 = scmp.eq.s32.totalorder %s44, 0
      %p531 = por %p529, %p530
      %p532 = scmp.ne.s32.totalorder %s518, %s519
      %p533 = scmp.eq.s32.totalorder %s45, 1
      %p534 = por %p532, %p533
      %p536 = scmp.ne.s32.totalorder %s519, %s535
      %p537 = scmp.eq.s32.totalorder %s45, 0
      %p538 = por %p536, %p537
      %s539 = ssub.s32 %s39, %s46
      %p540 = scmp.eq.s32.totalorder %s539, 0
      %s542 = sadd.s32 %s541, 1
      %s543 = scalar_select %p540, %s541, %s542
      %p546 = pneg %p540
      %p547 = scmp.eq.s32.totalorder %s39, 1
      %p548 = por %p546, %p547
      %p549 = scmp.ne.s32.totalorder %s541, %s544
      %p550 = scmp.eq.s32.totalorder %s39, 0
      %p551 = por %p549, %p550
      %p552 = scmp.ne.s32.totalorder %s541, %s544
      %p553 = scmp.eq.s32.totalorder %s44, 1
      %p554 = por %p552, %p553
      %p555 = scmp.ne.s32.totalorder %s544, %s545
      %p556 = scmp.eq.s32.totalorder %s44, 0
      %p557 = por %p555, %p556
      %p558 = scmp.ne.s32.totalorder %s544, %s545
      %p559 = scmp.eq.s32.totalorder %s45, 1
      %p560 = por %p558, %p559
      %p562 = scmp.ne.s32.totalorder %s545, %s561
      %p563 = scmp.eq.s32.totalorder %s45, 0
      %p564 = por %p562, %p563
      %s565 = ssub.s32 %s39, %s46
      %p566 = scmp.eq.s32.totalorder %s565, 0
      %s568 = sadd.s32 %s567, 1
      %s569 = scalar_select %p566, %s567, %s568
      %p572 = pneg %p566
      %p573 = scmp.eq.s32.totalorder %s39, 1
      %p574 = por %p572, %p573
      %p575 = scmp.ne.s32.totalorder %s567, %s570
      %p576 = scmp.eq.s32.totalorder %s39, 0
      %p577 = por %p575, %p576
      %p578 = scmp.ne.s32.totalorder %s567, %s570
      %p579 = scmp.eq.s32.totalorder %s44, 1
      %p580 = por %p578, %p579
      %p581 = scmp.ne.s32.totalorder %s570, %s571
      %p582 = scmp.eq.s32.totalorder %s44, 0
      %p583 = por %p581, %p582
      %p584 = scmp.ne.s32.totalorder %s570, %s571
      %p585 = scmp.eq.s32.totalorder %s45, 1
      %p586 = por %p584, %p585
      %p588 = scmp.ne.s32.totalorder %s571, %s587
      %p589 = scmp.eq.s32.totalorder %s45, 0
      %p590 = por %p588, %p589
      %s591 = ssub.s32 %s39, %s46
      %p592 = scmp.eq.s32.totalorder %s591, 0
      %s594 = sadd.s32 %s593, 1
      %s595 = scalar_select %p592, %s593, %s594
      %p598 = pneg %p592
      %p599 = scmp.eq.s32.totalorder %s39, 1
      %p600 = por %p598, %p599
      %p601 = scmp.ne.s32.totalorder %s593, %s596
      %p602 = scmp.eq.s32.totalorder %s39, 0
      %p603 = por %p601, %p602
      %p604 = scmp.ne.s32.totalorder %s593, %s596
      %p605 = scmp.eq.s32.totalorder %s44, 1
      %p606 = por %p604, %p605
      %p607 = scmp.ne.s32.totalorder %s596, %s597
      %p608 = scmp.eq.s32.totalorder %s44, 0
      %p609 = por %p607, %p608
      %p610 = scmp.ne.s32.totalorder %s596, %s597
      %p611 = scmp.eq.s32.totalorder %s45, 1
      %p612 = por %p610, %p611
      %p614 = scmp.ne.s32.totalorder %s597, %s613
      %p615 = scmp.eq.s32.totalorder %s45, 0
      %p616 = por %p614, %p615
      %p617 = scmp.le.s32.totalorder 1, %s39
      %p618 = scmp.lt.s32.totalorder %s39, 3
      %p619 = pnand %p617, %p618
      %p620 = pneg %p619
      // Predicated region
      $region9: #{tpu_custom_call.1} parent=5 // pred_check
        _
      $region10: #{tpu_custom_call.1} parent=5 // pred_check_branch
        %622 = sbr.rel (%p619) target = $region12
      $region11: #{tpu_custom_call.1} parent=5 // pred_region
        %s623 = ssub.s32 %s39, 1
        // Predicated region
        $region13: #{tpu_custom_call.1} parent=11 // pred_check
          %p624 = pneg %p164
        $region14: #{tpu_custom_call.1} parent=11 // pred_check_branch
          %626 = sbr.rel (%p624) target = $region16
        $region15: #{tpu_custom_call.1} parent=11 // pred_region
          %s628 = ssub.s32 384, 384
          %629 = vsyncadd [#allocation7], %s628
          %s630 = sshll.u32 [#allocation6], 4
          %s631 = int_to_ptr.vmem [resolvable:$true] %s630
          %636 = dma.hbm_to_vmem [thread:$0]  %s4, 384, %s631, [#allocation7], 128, 128, 8
        $region16: #{tpu_custom_call.1} parent=11 // pred_fallthru
          _
        // Predicated region
        $region17: #{tpu_custom_call.1} parent=11 // pred_check
          %p637 = pneg %p185
        $region18: #{tpu_custom_call.1} parent=11 // pred_check_branch
          %639 = sbr.rel (%p637) target = $region20
        $region19: #{tpu_custom_call.1} parent=11 // pred_region
          _
        $region20: #{tpu_custom_call.1} parent=11 // pred_fallthru
          _
        // Predicated region
        $region21: #{tpu_custom_call.1} parent=11 // pred_check
          %p640 = pneg %p206
        $region22: #{tpu_custom_call.1} parent=11 // pred_check_branch
          %642 = sbr.rel (%p640) target = $region24
        $region23: #{tpu_custom_call.1} parent=11 // pred_region
          _
        $region24: #{tpu_custom_call.1} parent=11 // pred_fallthru
          _
        // Predicated region
        $region25: #{tpu_custom_call.1} parent=11 // pred_check
          %p643 = pneg %p227
        $region26: #{tpu_custom_call.1} parent=11 // pred_check_branch
          %645 = sbr.rel (%p643) target = $region28
        $region27: #{tpu_custom_call.1} parent=11 // pred_region
          _
        $region28: #{tpu_custom_call.1} parent=11 // pred_fallthru
          _
        // Predicated region
        $region29: #{tpu_custom_call.1} parent=11 // pred_check
          %p646 = pneg %p248
        $region30: #{tpu_custom_call.1} parent=11 // pred_check_branch
          %648 = sbr.rel (%p646) target = $region32
        $region31: #{tpu_custom_call.1} parent=11 // pred_region
          _
        $region32: #{tpu_custom_call.1} parent=11 // pred_fallthru
          _
        // Predicated region
        $region33: #{tpu_custom_call.1} parent=11 // pred_check
          %p649 = pneg %p269
        $region34: #{tpu_custom_call.1} parent=11 // pred_check_branch
          %651 = sbr.rel (%p649) target = $region36
        $region35: #{tpu_custom_call.1} parent=11 // pred_region
          %s653 = ssub.s32 384, 384
          %654 = vsyncadd [#allocation7], %s653
          %s655 = sshll.u32 [#allocation8], 4
          %s656 = int_to_ptr.vmem [resolvable:$true] %s655
          %661 = dma.hbm_to_vmem [thread:$0]  %s9, 384, %s656, [#allocation7], 128, 128, 8
        $region36: #{tpu_custom_call.1} parent=11 // pred_fallthru
          _
        // Predicated region
        $region37: #{tpu_custom_call.1} parent=11 // pred_check
          %p662 = pneg %p290
        $region38: #{tpu_custom_call.1} parent=11 // pred_check_branch
          %664 = sbr.rel (%p662) target = $region40
        $region39: #{tpu_custom_call.1} parent=11 // pred_region
          _
        $region40: #{tpu_custom_call.1} parent=11 // pred_fallthru
          _
        // Predicated region
        $region41: #{tpu_custom_call.1} parent=11 // pred_check
          %p665 = pneg %p311
        $region42: #{tpu_custom_call.1} parent=11 // pred_check_branch
          %667 = sbr.rel (%p665) target = $region44
        $region43: #{tpu_custom_call.1} parent=11 // pred_region
          _
        $region44: #{tpu_custom_call.1} parent=11 // pred_fallthru
          _
        // Predicated region
        $region45: #{tpu_custom_call.1} parent=11 // pred_check
          %p668 = pneg %p332
        $region46: #{tpu_custom_call.1} parent=11 // pred_check_branch
          %670 = sbr.rel (%p668) target = $region48
        $region47: #{tpu_custom_call.1} parent=11 // pred_region
          %s672 = ssub.s32 192, 192
          %673 = vsyncadd [#allocation10], %s672
          %s674 = sshll.u32 [#allocation9], 4
          %s675 = int_to_ptr.vmem [resolvable:$true] %s674
          %680 = dma.hbm_to_vmem [thread:$0]  %s12, 192, %s675, [#allocation10], 64, 64, 4
        $region48: #{tpu_custom_call.1} parent=11 // pred_fallthru
          _
        // Predicated region
        $region49: #{tpu_custom_call.1} parent=11 // pred_check
          %p681 = pneg %p353
        $region50: #{tpu_custom_call.1} parent=11 // pred_check_branch
          %683 = sbr.rel (%p681) target = $region52
        $region51: #{tpu_custom_call.1} parent=11 // pred_region
          _
        $region52: #{tpu_custom_call.1} parent=11 // pred_fallthru
          _
        // Predicated region
        $region53: #{tpu_custom_call.1} parent=11 // pred_check
          %p684 = pneg %p374
        $region54: #{tpu_custom_call.1} parent=11 // pred_check_branch
          %686 = sbr.rel (%p684) target = $region56
        $region55: #{tpu_custom_call.1} parent=11 // pred_region
          _
        $region56: #{tpu_custom_call.1} parent=11 // pred_fallthru
          _
        // Predicated region
        $region57: #{tpu_custom_call.1} parent=11 // pred_check
          %p687 = pneg %p395
        $region58: #{tpu_custom_call.1} parent=11 // pred_check_branch
          %689 = sbr.rel (%p687) target = $region60
        $region59: #{tpu_custom_call.1} parent=11 // pred_region
          %s691 = ssub.s32 64, 64
          %692 = vsyncadd [#allocation10], %s691
          %s694 = sshll.u32 [#allocation11], 4
          %s695 = int_to_ptr.vmem [resolvable:$true] %s694
          %697 = dma.hbm_to_vmem [thread:$0]  %s15, 64, %s695, [#allocation10]
        $region60: #{tpu_custom_call.1} parent=11 // pred_fallthru
          _
        // Predicated region
        $region61: #{tpu_custom_call.1} parent=11 // pred_check
          %p698 = pneg %p416
        $region62: #{tpu_custom_call.1} parent=11 // pred_check_branch
          %700 = sbr.rel (%p698) target = $region64
        $region63: #{tpu_custom_call.1} parent=11 // pred_region
          _
        $region64: #{tpu_custom_call.1} parent=11 // pred_fallthru
          _
        // Predicated region
        $region65: #{tpu_custom_call.1} parent=11 // pred_check
          %p701 = pneg %p437
        $region66: #{tpu_custom_call.1} parent=11 // pred_check_branch
          %703 = sbr.rel (%p701) target = $region68
        $region67: #{tpu_custom_call.1} parent=11 // pred_region
          _
        $region68: #{tpu_custom_call.1} parent=11 // pred_fallthru
          _
        // Predicated region
        $region69: #{tpu_custom_call.1} parent=11 // pred_check
          %p704 = pneg %p458
        $region70: #{tpu_custom_call.1} parent=11 // pred_check_branch
          %706 = sbr.rel (%p704) target = $region72
        $region71: #{tpu_custom_call.1} parent=11 // pred_region
          _
        $region72: #{tpu_custom_call.1} parent=11 // pred_fallthru
          _
        // Predicated region
        $region73: #{tpu_custom_call.1} parent=11 // pred_check
          %p707 = pneg %p479
        $region74: #{tpu_custom_call.1} parent=11 // pred_check_branch
          %709 = sbr.rel (%p707) target = $region76
        $region75: #{tpu_custom_call.1} parent=11 // pred_region
          _
        $region76: #{tpu_custom_call.1} parent=11 // pred_fallthru
          _
      $region12: #{tpu_custom_call.1} parent=5 // pred_fallthru
        _
      %p710 = scmp.lt.s32.totalorder %s39, 2
      // Predicated region
      $region77: #{tpu_custom_call.1} parent=5 // pred_check
        %p711 = pneg %p710
      $region78: #{tpu_custom_call.1} parent=5 // pred_check_branch
        %713 = sbr.rel (%p711) target = $region80
      $region79: #{tpu_custom_call.1} parent=5 // pred_region
        // Predicated region
        $region81: #{tpu_custom_call.1} parent=79 // pred_check
          %p714 = pneg %p59
        $region82: #{tpu_custom_call.1} parent=79 // pred_check_branch
          %716 = sbr.rel (%p714) target = $region84
        $region83: #{tpu_custom_call.1} parent=79 // pred_region
          %p717 = scmp.lt.s32.totalorder %s39, 1
          %s718 = scalar_select %p717, %s39, 1
          %s719 = smul.addr %s718, 2
          %s720 = smul.addr %s719, 8
          %s721 = scalar_lea.vmem %s0, %s720
        $region84: #{tpu_custom_call.1} parent=79 // pred_fallthru
          _
        // Predicated region
        $region85: #{tpu_custom_call.1} parent=79 // pred_check
          %p722 = pneg %p85
        $region86: #{tpu_custom_call.1} parent=79 // pred_check_branch
          %724 = sbr.rel (%p722) target = $region88
        $region87: #{tpu_custom_call.1} parent=79 // pred_region
          %p725 = scmp.lt.s32.totalorder %s39, 1
          %s726 = scalar_select %p725, %s39, 1
          %s727 = smul.addr %s726, 8
          %s728 = scalar_lea.vmem %s1, %s727
        $region88: #{tpu_custom_call.1} parent=79 // pred_fallthru
          _
        // Predicated region
        $region89: #{tpu_custom_call.1} parent=79 // pred_check
          %p729 = pneg %p111
        $region90: #{tpu_custom_call.1} parent=79 // pred_check_branch
          %731 = sbr.rel (%p729) target = $region92
        $region91: #{tpu_custom_call.1} parent=79 // pred_region
          %s732 = sand.u32 %s101, 1
          %s733 = scalar_lea.sflag [#allocation4], %s732
          %s734 = sand.u32 %s101, 1
          %s735 = smul.addr %s734, 8
          %s736 = scalar_lea.vmem [#allocation3], %s735
          %s738 = ssub.s32 128, 128
          %739 = vsyncadd %s733, %s738
          %s740 = smul.addr %s39, 128
          %s741 = scalar_lea.hbm %s2, %s740
          %s743 = sshll.u32 %s736, 4
          %s744 = int_to_ptr.vmem [resolvable:$true] %s743
          %746 = dma.hbm_to_vmem [thread:$0]  %s741, 128, %s744, %s733
        $region92: #{tpu_custom_call.1} parent=79 // pred_fallthru
          _
        // Predicated region
        $region93: #{tpu_custom_call.1} parent=79 // pred_check
          %p747 = pneg %p137
        $region94: #{tpu_custom_call.1} parent=79 // pred_check_branch
          %749 = sbr.rel (%p747) target = $region96
        $region95: #{tpu_custom_call.1} parent=79 // pred_region
          %p750 = scmp.lt.s32.totalorder %s39, 1
          %s751 = scalar_select %p750, %s39, 1
          %s752 = smul.addr %s751, 8
          %s753 = scalar_lea.vmem %s3, %s752
        $region96: #{tpu_custom_call.1} parent=79 // pred_fallthru
          _
      $region80: #{tpu_custom_call.1} parent=5 // pred_fallthru
        _
      %p754 = scmp.le.s32.totalorder 1, %s39
      %p755 = scmp.lt.s32.totalorder %s39, 3
      %p756 = pnand %p754, %p755
      %p757 = pneg %p756
      // Predicated region
      $region97: #{tpu_custom_call.1} parent=5 // pred_check
        _
      $region98: #{tpu_custom_call.1} parent=5 // pred_check_branch
        %759 = sbr.rel (%p756) target = $region100
      $region99: #{tpu_custom_call.1} parent=5 // pred_region
        %s760 = ssub.s32 %s39, 1
        %s761 = sand.u32 %s104, 1
        %s762 = scalar_lea.sflag [#allocation4], %s761
        %s763 = sand.u32 %s104, 1
        %s764 = smul.addr %s763, 8
        %s765 = scalar_lea.vmem [#allocation3], %s764
        // Predicated region
        $region101: #{tpu_custom_call.1} parent=99 // pred_check
          %p766 = pneg %p117
        $region102: #{tpu_custom_call.1} parent=99 // pred_check_branch
          %768 = sbr.rel (%p766) target = $region104
        $region103: #{tpu_custom_call.1} parent=99 // pred_region
          %769 = dma.done %s762, 128
        $region104: #{tpu_custom_call.1} parent=99 // pred_fallthru
          _
        // Predicated region
        $region105: #{tpu_custom_call.1} parent=99 // pred_check
          %p770 = pneg %p164
        $region106: #{tpu_custom_call.1} parent=99 // pred_check_branch
          %772 = sbr.rel (%p770) target = $region108
        $region107: #{tpu_custom_call.1} parent=99 // pred_region
          %773 = dma.done [#allocation7], 384
        $region108: #{tpu_custom_call.1} parent=99 // pred_fallthru
          _
        // Predicated region
        $region109: #{tpu_custom_call.1} parent=99 // pred_check
          %p774 = pneg %p269
        $region110: #{tpu_custom_call.1} parent=99 // pred_check_branch
          %776 = sbr.rel (%p774) target = $region112
        $region111: #{tpu_custom_call.1} parent=99 // pred_region
          %777 = dma.done [#allocation7], 384
        $region112: #{tpu_custom_call.1} parent=99 // pred_fallthru
          _
        // Predicated region
        $region113: #{tpu_custom_call.1} parent=99 // pred_check
          %p778 = pneg %p332
        $region114: #{tpu_custom_call.1} parent=99 // pred_check_branch
          %780 = sbr.rel (%p778) target = $region116
        $region115: #{tpu_custom_call.1} parent=99 // pred_region
          %781 = dma.done [#allocation10], 192
        $region116: #{tpu_custom_call.1} parent=99 // pred_fallthru
          _
        // Predicated region
        $region117: #{tpu_custom_call.1} parent=99 // pred_check
          %p782 = pneg %p395
        $region118: #{tpu_custom_call.1} parent=99 // pred_check_branch
          %784 = sbr.rel (%p782) target = $region120
        $region119: #{tpu_custom_call.1} parent=99 // pred_region
          %785 = dma.done [#allocation10], 64
        $region120: #{tpu_custom_call.1} parent=99 // pred_fallthru
          _
        %p786 = scmp.lt.s32.totalorder %s44, 1
        %s787 = scalar_select %p786, %s44, 1
        %s788 = smul.addr %s787, 2
        %s789 = smul.addr %s788, 8
        %s790 = scalar_lea.vmem %s0, %s789
        %p791 = pneg %p65
        %p792 = pneg %p62
        %p793 = scmp.lt.s32.totalorder %s44, 1
        %s794 = scalar_select %p793, %s44, 1
        %s795 = smul.addr %s794, 8
        %s796 = scalar_lea.vmem %s1, %s795
        %p797 = pneg %p91
        %p798 = pneg %p88
        %s799 = sand.u32 %s104, 1
        %s800 = scalar_lea.sflag [#allocation4], %s799
        %s801 = sand.u32 %s104, 1
        %s802 = smul.addr %s801, 8
        %s803 = scalar_lea.vmem [#allocation3], %s802
        %p804 = pneg %p117
        %p805 = pneg %p114
        %p806 = scmp.lt.s32.totalorder %s44, 1
        %s807 = scalar_select %p806, %s44, 1
        %s808 = smul.addr %s807, 8
        %s809 = scalar_lea.vmem %s3, %s808
        %p810 = pneg %p143
        %p811 = pneg %p140
        %p812 = pneg %p164
        %p813 = pneg %p161
        %p814 = pneg %p185
        %p815 = pneg %p182
        %p816 = pneg %p206
        %p817 = pneg %p203
        %p818 = pneg %p227
        %p819 = pneg %p224
        %p820 = pneg %p248
        %p821 = pneg %p245
        %p822 = pneg %p269
        %p823 = pneg %p266
        %p824 = pneg %p290
        %p825 = pneg %p287
        %p826 = pneg %p311
        %p827 = pneg %p308
        %p828 = pneg %p332
        %p829 = pneg %p329
        %p830 = pneg %p353
        %p831 = pneg %p350
        %p832 = pneg %p374
        %p833 = pneg %p371
        %p834 = pneg %p395
        %p835 = pneg %p392
        %p836 = pneg %p416
        %p837 = pneg %p413
        %p838 = pneg %p437
        %p839 = pneg %p434
        %p840 = pneg %p458
        %p841 = pneg %p455
        %p842 = pneg %p479
        %p843 = pneg %p476
        %p844 = pneg %p505
        %p845 = pneg %p502
        %p846 = scmp.lt.s32.totalorder %s44, 1
        %s847 = scalar_select %p846, %s44, 1
        %s848 = smul.addr %s847, 8
        %s849 = smul.addr %s848, 8
        %s850 = scalar_lea.vmem %s20, %s849
        %p851 = pneg %p531
        %p852 = pneg %p528
        %p853 = scmp.lt.s32.totalorder %s44, 1
        %s854 = scalar_select %p853, %s44, 1
        %s855 = smul.addr %s854, 4
        %s856 = smul.addr %s855, 8
        %s857 = scalar_lea.vmem %s21, %s856
        %p858 = pneg %p557
        %p859 = pneg %p554
        %p860 = scmp.lt.s32.totalorder %s44, 1
        %s861 = scalar_select %p860, %s44, 1
        %s862 = smul.addr %s861, 4
        %s863 = smul.addr %s862, 8
        %s864 = scalar_lea.vmem %s22, %s863
        %p865 = pneg %p583
        %p866 = pneg %p580
        %p867 = scmp.lt.s32.totalorder %s44, 1
        %s868 = scalar_select %p867, %s44, 1
        %s869 = smul.addr %s868, 4
        %s870 = smul.addr %s869, 8
        %s871 = scalar_lea.vmem %s23, %s870
        %p872 = pneg %p609
        %p873 = pneg %p606
        %s874 = sand.u32 %s596, 1
        %s875 = scalar_lea.sflag [#allocation5], %s874
        %s876 = sand.u32 %s596, 1
        %s877 = smul.addr %s876, 8
        %s878 = scalar_lea.vmem [#allocation12], %s877
        %p879 = scmp.lt.s32.totalorder %s44, 1
        %s880 = scalar_select %p879, %s44, 1
        %s881 = smul.addr %s880, 2
        %s882 = smul.addr %s881, 8
        %s883 = scalar_lea.vmem %s0, %s882
        %p884 = scmp.lt.s32.totalorder %s44, 1
        %s885 = scalar_select %p884, %s44, 1
        %s886 = smul.addr %s885, 8
        %s887 = scalar_lea.vmem %s1, %s886
        %p888 = scmp.lt.s32.totalorder %s44, 1
        %s889 = scalar_select %p888, %s44, 1
        %s890 = smul.addr %s889, 8
        %s891 = scalar_lea.vmem %s3, %s890
        %p892 = scmp.lt.s32.totalorder %s44, 1
        %s893 = scalar_select %p892, %s44, 1
        %s894 = smul.addr %s893, 8
        %s895 = smul.addr %s894, 8
        %s896 = scalar_lea.vmem %s20, %s895
        %p897 = scmp.lt.s32.totalorder %s44, 1
        %s898 = scalar_select %p897, %s44, 1
        %s899 = smul.addr %s898, 4
        %s900 = smul.addr %s899, 8
        %s901 = scalar_lea.vmem %s21, %s900
        %p902 = scmp.lt.s32.totalorder %s44, 1
        %s903 = scalar_select %p902, %s44, 1
        %s904 = smul.addr %s903, 4
        %s905 = smul.addr %s904, 8
        %s906 = scalar_lea.vmem %s22, %s905
        %p907 = scmp.lt.s32.totalorder %s44, 1
        %s908 = scalar_select %p907, %s44, 1
        %s909 = smul.addr %s908, 4
        %s910 = smul.addr %s909, 8
        %s911 = scalar_lea.vmem %s23, %s910
        %912 = vst [vmem:[#allocation2] sm:$0xff] 0.0
        %913 = vst [vmem:[#allocation2 + $0x8] sm:$0xff] 0.0
        %914 = vst [vmem:[#allocation2 + $0x10] sm:$0xff] 0.0
        %915 = vst [vmem:[#allocation2 + $0x18] sm:$0xff] 0.0
        %916 = vst [vmem:[#allocation2 + $0x20] sm:$0xff] 0.0
        %917 = vst [vmem:[#allocation2 + $0x28] sm:$0xff] 0.0
        %918 = vst [vmem:[#allocation2 + $0x30] sm:$0xff] 0.0
        %919 = vst [vmem:[#allocation2 + $0x38] sm:$0xff] 0.0
        %920 = vst [vmem:[#allocation2 + $0x40] sm:$0xff] 0.0
        %921 = vst [vmem:[#allocation2 + $0x48] sm:$0xff] 0.0
        %922 = vst [vmem:[#allocation2 + $0x50] sm:$0xff] 0.0
        %923 = vst [vmem:[#allocation2 + $0x58] sm:$0xff] 0.0
        %924 = vst [vmem:[#allocation2 + $0x60] sm:$0xff] 0.0
        %925 = vst [vmem:[#allocation2 + $0x68] sm:$0xff] 0.0
        %926 = vst [vmem:[#allocation2 + $0x70] sm:$0xff] 0.0
        %927 = vst [vmem:[#allocation2 + $0x78] sm:$0xff] 0.0
        %v928 = vld [vmem:[#allocation6] sm:$0xff]
        %s929 = scalar_lea.vmem [#allocation6], 8
        %v930 = vld [vmem:[%s929] sm:$0xff]
        %s931 = scalar_lea.vmem [#allocation6], 16
        %v932 = vld [vmem:[%s931] sm:$0xff]
        %v933 = vld [vmem:[%s5] sm:$0xff]
        %v934 = vld [vmem:[%s6] sm:$0xff]
        %v935 = vld [vmem:[%s7] sm:$0xff]
        %v936 = vld [vmem:[%s7 + $0x8] sm:$0xff]
        %v937 = vld [vmem:[%s7 + $0x10] sm:$0xff]
        %v938 = vld [vmem:[%s7 + $0x18] sm:$0x3f]
        %v939 = vld [vmem:[%s8] sm:$0xff]
        %v940 = vld [vmem:[%s8 + $0x8] sm:$0xff]
        %v941 = vld [vmem:[%s8 + $0x10] sm:$0xff]
        %v942 = vld [vmem:[%s8 + $0x18] sm:$0x3f]
        %v943 = vld [vmem:[#allocation8] sm:$0xff]
        %s944 = scalar_lea.vmem [#allocation8], 8
        %v945 = vld [vmem:[%s944] sm:$0xff]
        %s946 = scalar_lea.vmem [#allocation8], 16
        %v947 = vld [vmem:[%s946] sm:$0xff]
        %v948 = vld [vmem:[%s10] sm:$0xff]
        %v949 = vld [vmem:[%s11] sm:$0xff]
        %v950 = vld [vmem:[#allocation9] sm:$0xf]
        %s951 = scalar_lea.vmem [#allocation9], 4
        %v952 = vld [vmem:[%s951] sm:$0xf]
        %s953 = scalar_lea.vmem [#allocation9], 8
        %v954 = vld [vmem:[%s953] sm:$0xf]
        %v955 = vld [vmem:[%s13] sm:$0xf]
        %v956 = vld [vmem:[%s14] sm:$0xf]
        %v957 = vld [vmem:[#allocation11] sm:$0xf]
        %v958 = vld [vmem:[%s16] sm:$0xf]
        %v959 = vlaneseq
        %v960 = vand.u32 %v959, 127
        %v961 = vadd.s32 %v960, 128
        %vm962 = vcmp.lt.s32.totalorder %v960, 0
        %v963 = vsub.s32 0, %v960
        %v964 = vsel %vm962, %v963, %v960
        %v965 = vshrl.u32 %v964, 4
        %v966 = vand.u32 %v964, 15
        %v967 = vsub.s32 0, %v966
        %v968 = vsel %vm962, %v967, %v966
        %vm969 = vcmp.lt.s32.totalorder %v961, 0
        %v970 = vsub.s32 0, %v961
        %v971 = vsel %vm969, %v970, %v961
        %v972 = vshrl.u32 %v971, 4
        %v973 = vand.u32 %v971, 15
        %v974 = vsub.s32 0, %v973
        %v975 = vsel %vm969, %v974, %v973
        %vm976 = vcmp.ne.s32.totalorder %v968, 0
        %vm977 = vcmp.ne.s32.totalorder %v975, 0
        %vm978 = vcmp.lt.s32.totalorder %v968, 0
        %vm979 = vcmp.lt.s32.totalorder %v975, 0
        %vm980 = vmand %vm978, %vm976
        %vm981 = vmand %vm979, %vm977
        %v982 = vadd.s32 %v968, 16
        %v983 = vadd.s32 %v975, 16
        %v984 = vsel %vm980, %v982, %v968
        %v985 = vsel %vm981, %v983, %v975
        %vm986 = vcmp.gt.s32.totalorder %v984, 0
        %vm987 = vcmp.gt.s32.totalorder %v985, 0
        %vm988 = vcmp.lt.s32.totalorder %v984, 15
        %vm989 = vcmp.lt.s32.totalorder %v985, 15
        %v990 = vld [vmem:[%s883] sm:$0xff]
        %v991 = vld [vmem:[%s883 + $0x8] sm:$0xff]
        %992 = vst [vmem:[#allocation2 + $0x8] sm:$0xff] %v990
        %993 = vst [vmem:[#allocation2 + $0x10] sm:$0xff] %v991
        %vm994 = vcmask 138240
        %995 = vst.msk [vmem:[#allocation2 + $0x18] sm:$0xff] %vm994, 0.0
        %v996 = vld [vmem:[#allocation2] sm:$0xff]
        %v997 = vld [vmem:[#allocation2 + $0x8] sm:$0xff]
        %v998 = vld [vmem:[#allocation2 + $0x10] sm:$0xff]
        %v999 = vsel %vm986, 1, 0
        %v1000 = vsel %vm987, 1, 0
        %vm1001 = vcmp.eq.s32.totalorder %v999, 1
        %vm1002 = vcmp.eq.s32.totalorder %v1000, 1
        %1006 = vrot.lane.b32.xlu0 %v996, 17
        %v1007 = vpop.permute.xlu0 %1006
        %1008 = vrot.lane.b32.xlu0 %v997, 17
        %v1009 = vpop.permute.xlu0 %1008
        %1010 = vrot.lane.b32.xlu0 %v998, 17
        %v1011 = vpop.permute.xlu0 %1010
        %v1012 = vsel %vm994, %v1007, %v1009
        %v1013 = vsel %vm994, %v1009, %v1011
        %v1016 = vsel %vm1001, %v1012, 0.0
        %v1017 = vsel %vm1002, %v1013, 0.0
        %v1018 = vsel %vm988, 1, 0
        %v1019 = vsel %vm989, 1, 0
        %vm1020 = vcmp.eq.s32.totalorder %v1018, 1
        %vm1021 = vcmp.eq.s32.totalorder %v1019, 1
        %1022 = vrot.lane.b32.xlu0 %v996, 15
        %v1023 = vpop.permute.xlu0 %1022
        %1024 = vrot.lane.b32.xlu0 %v997, 15
        %v1025 = vpop.permute.xlu0 %1024
        %1026 = vrot.lane.b32.xlu0 %v998, 15
        %v1027 = vpop.permute.xlu0 %1026
        %vm1028 = vcmask 121856
        %v1029 = vsel %vm1028, %v1023, %v1025
        %v1030 = vsel %vm1028, %v1025, %v1027
        %v1033 = vsel %vm1020, %v1029, 0.0
        %v1034 = vsel %vm1021, %v1030, 0.0
        %1035 = vrot.lane.b32.xlu0 %v996, 16
        %v1036 = vpop.permute.xlu0 %1035
        %1037 = vrot.lane.b32.xlu0 %v997, 16
        %v1038 = vpop.permute.xlu0 %1037
        %1039 = vrot.lane.b32.xlu0 %v998, 16
        %v1040 = vpop.permute.xlu0 %1039
        %vm1041 = vcmask 130048
        %v1042 = vsel %vm1041, %v1036, %v1038
        %v1043 = vsel %vm1041, %v1038, %v1040
        %1046 = vrot.lane.b32.xlu0 %v996, 1
        %v1047 = vpop.permute.xlu0 %1046
        %1048 = vrot.lane.b32.xlu0 %v997, 1
        %v1049 = vpop.permute.xlu0 %1048
        %1050 = vrot.lane.b32.xlu0 %v998, 1
        %v1051 = vpop.permute.xlu0 %1050
        %vm1052 = vcmask 7168
        %v1053 = vsel %vm1052, %v1047, %v1049
        %v1054 = vsel %vm1052, %v1049, %v1051
        %v1057 = vsel %vm1001, %v1053, 0.0
        %v1058 = vsel %vm1002, %v1054, 0.0
        %v1059 = vld [vmem:[#allocation2 + $0x18] sm:$0xff]
        %1061 = vrot.lane.b32.xlu0 %v997, 127
        %v1062 = vpop.permute.xlu0 %1061
        %1063 = vrot.lane.b32.xlu0 %v998, 127
        %v1064 = vpop.permute.xlu0 %1063
        %1065 = vrot.lane.b32.xlu0 %v1059, 127
        %v1066 = vpop.permute.xlu0 %1065
        %vm1067 = vcmask 1039360
        %v1068 = vsel %vm1067, %v1062, %v1064
        %v1069 = vsel %vm1067, %v1064, %v1066
        %v1072 = vsel %vm1020, %v1068, 0.0
        %v1073 = vsel %vm1021, %v1069, 0.0
        %vm1074 = vcmask 195584
        %v1076 = vsel %vm1074, %v930, 0
        %1078 = vmatprep.subr.mxu0 %v1058
        %1079 = vmatpush1.msra.mxu0 %v1057
        %1080 = vmatprep.subr.mxu0 %v998
        %1081 = vmatpush1.msra.mxu0 %v997
        %1082 = vmatprep.subr.mxu0 %v1073
        %1083 = vmatpush1.msra.mxu0 %v1072
        %1084 = vmatprep.subr.mxu0 0.0
        %1085 = vmatpush1.msra.mxu0 0.0
        %1086 = vmatprep.subr.mxu0 0.0
        %1087 = vmatpush1.msra.mxu0 0.0
        %1088 = vmatprep.subr.mxu0 0.0
        %1089 = vmatpush1.msra.mxu0 0.0
        %1090 = vmatprep.subr.mxu0 0.0
        %1091 = vmatpush1.msra.mxu0 0.0
        %1092 = vmatprep.subr.mxu0 0.0
        %1093 = vmatpush1.msra.mxu0 0.0
        %1094 = vmatprep.subr.mxu0 0.0
        %1095 = vmatpush1.msra.mxu0 0.0
        %1096 = vmatprep.subr.mxu0 0.0
        %1097 = vmatpush1.msra.mxu0 0.0
        %1098 = vmatprep.subr.mxu0 0.0
        %1099 = vmatpush1.msra.mxu0 0.0
        %1100 = vmatprep.subr.mxu0 0.0
        %1101 = vmatpush1.msra.mxu0 0.0
        %1102 = vmatprep.subr.mxu0 0.0
        %1103 = vmatpush1.msra.mxu0 0.0
        %1104 = vmatprep.subr.mxu0 0.0
        %1105 = vmatpush1.msra.mxu0 0.0
        %1106 = vmatprep.subr.mxu0 0.0
        %1107 = vmatpush1.msra.mxu0 0.0
        %1108 = vmatprep.subr.mxu0 0.0
        %1109 = vmatpush1.msra.mxu0 0.0
        %1110 = vmatprep.subr.mxu0 0.0
        %1111 = vmatpush1.msra.mxu0 0.0
        %1112 = vmatprep.subr.mxu0 0.0
        %1113 = vmatpush1.msra.mxu0 0.0
        %1114 = vmatprep.subr.mxu0 0.0
        %1115 = vmatpush1.msra.mxu0 0.0
        %1116 = vmatprep.subr.mxu0 0.0
        %1117 = vmatpush1.msra.mxu0 0.0
        %1118 = vmatprep.subr.mxu0 0.0
        %1119 = vmatpush1.msra.mxu0 0.0
        %1120 = vmatprep.subr.mxu0 0.0
        %1121 = vmatpush1.msra.mxu0 0.0
        %1122 = vmatprep.subr.mxu0 0.0
        %1123 = vmatpush1.msra.mxu0 0.0
        %1124 = vmatprep.subr.mxu0 0.0
        %1125 = vmatpush1.msra.mxu0 0.0
        %1126 = vmatprep.subr.mxu0 0.0
        %1127 = vmatpush1.msra.mxu0 0.0
        %1128 = vmatprep.subr.mxu0 0.0
        %1129 = vmatpush1.msra.mxu0 0.0
        %1130 = vmatprep.subr.mxu0 0.0
        %1131 = vmatpush1.msra.mxu0 0.0
        %1132 = vmatprep.subr.mxu0 0.0
        %1133 = vmatpush1.msra.mxu0 0.0
        %1134 = vmatprep.subr.mxu0 0.0
        %1135 = vmatpush1.msra.mxu0 0.0
        %1136 = vmatprep.subr.mxu0 0.0
        %1137 = vmatpush1.msra.mxu0 0.0
        %1138 = vmatprep.subr.mxu0 0.0
        %1139 = vmatpush1.msra.mxu0 0.0
        %1140 = vmatprep.subr.mxu0 0.0
        %1141 = vmatpush1.msra.mxu0 0.0
        %1142 = vmatprep.mubr.f32.mxu0 0.0
        %1143 = vmatmul.mubr.f32.gmra.mrb[0].mxu0 %v1076
        %v1144 = vpop.f32.mrb[0].mxu0
        %v1145 = vadd.f32 0.0, %v1144
        %v1146 = vpop.f32.mrb[0].mxu0
        %v1147 = vadd.f32 0.0, %v1146
        %1148 = vdwg.mxu0
        %v1150 = vsel %vm1074, %v928, 0
        %1152 = vmatprep.subr.mxu0 %v1017
        %1153 = vmatpush1.msra.mxu0 %v1016
        %1154 = vmatprep.subr.mxu0 %v1043
        %1155 = vmatpush1.msra.mxu0 %v1042
        %1156 = vmatprep.subr.mxu0 %v1034
        %1157 = vmatpush1.msra.mxu0 %v1033
        %1158 = vmatprep.subr.mxu0 0.0
        %1159 = vmatpush1.msra.mxu0 0.0
        %1160 = vmatprep.subr.mxu0 0.0
        %1161 = vmatpush1.msra.mxu0 0.0
        %1162 = vmatprep.subr.mxu0 0.0
        %1163 = vmatpush1.msra.mxu0 0.0
        %1164 = vmatprep.subr.mxu0 0.0
        %1165 = vmatpush1.msra.mxu0 0.0
        %1166 = vmatprep.subr.mxu0 0.0
        %1167 = vmatpush1.msra.mxu0 0.0
        %1168 = vmatprep.subr.mxu0 0.0
        %1169 = vmatpush1.msra.mxu0 0.0
        %1170 = vmatprep.subr.mxu0 0.0
        %1171 = vmatpush1.msra.mxu0 0.0
        %1172 = vmatprep.subr.mxu0 0.0
        %1173 = vmatpush1.msra.mxu0 0.0
        %1174 = vmatprep.subr.mxu0 0.0
        %1175 = vmatpush1.msra.mxu0 0.0
        %1176 = vmatprep.subr.mxu0 0.0
        %1177 = vmatpush1.msra.mxu0 0.0
        %1178 = vmatprep.subr.mxu0 0.0
        %1179 = vmatpush1.msra.mxu0 0.0
        %1180 = vmatprep.subr.mxu0 0.0
        %1181 = vmatpush1.msra.mxu0 0.0
        %1182 = vmatprep.subr.mxu0 0.0
        %1183 = vmatpush1.msra.mxu0 0.0
        %1184 = vmatprep.subr.mxu0 0.0
        %1185 = vmatpush1.msra.mxu0 0.0
        %1186 = vmatprep.subr.mxu0 0.0
        %1187 = vmatpush1.msra.mxu0 0.0
        %1188 = vmatprep.subr.mxu0 0.0
        %1189 = vmatpush1.msra.mxu0 0.0
        %1190 = vmatprep.subr.mxu0 0.0
        %1191 = vmatpush1.msra.mxu0 0.0
        %1192 = vmatprep.subr.mxu0 0.0
        %1193 = vmatpush1.msra.mxu0 0.0
        %1194 = vmatprep.subr.mxu0 0.0
        %1195 = vmatpush1.msra.mxu0 0.0
        %1196 = vmatprep.subr.mxu0 0.0
        %1197 = vmatpush1.msra.mxu0 0.0
        %1198 = vmatprep.subr.mxu0 0.0
        %1199 = vmatpush1.msra.mxu0 0.0
        %1200 = vmatprep.subr.mxu0 0.0
        %1201 = vmatpush1.msra.mxu0 0.0
        %1202 = vmatprep.subr.mxu0 0.0
        %1203 = vmatpush1.msra.mxu0 0.0
        %1204 = vmatprep.subr.mxu0 0.0
        %1205 = vmatpush1.msra.mxu0 0.0
        %1206 = vmatprep.subr.mxu0 0.0
        %1207 = vmatpush1.msra.mxu0 0.0
        %1208 = vmatprep.subr.mxu0 0.0
        %1209 = vmatpush1.msra.mxu0 0.0
        %1210 = vmatprep.subr.mxu0 0.0
        %1211 = vmatpush1.msra.mxu0 0.0
        %1212 = vmatprep.subr.mxu0 0.0
        %1213 = vmatpush1.msra.mxu0 0.0
        %1214 = vmatprep.subr.mxu0 0.0
        %1215 = vmatpush1.msra.mxu0 0.0
        %1216 = vmatprep.mubr.f32.mxu0 0.0
        %1217 = vmatmul.mubr.f32.gmra.mrb[0].mxu0 %v1150
        %v1218 = vpop.f32.mrb[0].mxu0
        %v1219 = vadd.f32 %v1145, %v1218
        %v1220 = vpop.f32.mrb[0].mxu0
        %v1221 = vadd.f32 %v1147, %v1220
        %1222 = vdwg.mxu0
        %1223 = vrot.lane.b32.xlu0 %v997, 113
        %v1224 = vpop.permute.xlu0 %1223
        %1225 = vrot.lane.b32.xlu0 %v998, 113
        %v1226 = vpop.permute.xlu0 %1225
        %1227 = vrot.lane.b32.xlu0 %v1059, 113
        %v1228 = vpop.permute.xlu0 %1227
        %vm1229 = vcmask 924672
        %v1230 = vsel %vm1229, %v1224, %v1226
        %v1231 = vsel %vm1229, %v1226, %v1228
        %v1234 = vsel %vm1001, %v1230, 0.0
        %v1235 = vsel %vm1002, %v1231, 0.0
        %1236 = vrot.lane.b32.xlu0 %v997, 111
        %v1237 = vpop.permute.xlu0 %1236
        %1238 = vrot.lane.b32.xlu0 %v998, 111
        %v1239 = vpop.permute.xlu0 %1238
        %1240 = vrot.lane.b32.xlu0 %v1059, 111
        %v1241 = vpop.permute.xlu0 %1240
        %vm1242 = vcmask 908288
        %v1243 = vsel %vm1242, %v1237, %v1239
        %v1244 = vsel %vm1242, %v1239, %v1241
        %v1247 = vsel %vm1020, %v1243, 0.0
        %v1248 = vsel %vm1021, %v1244, 0.0
        %1249 = vrot.lane.b32.xlu0 %v997, 112
        %v1250 = vpop.permute.xlu0 %1249
        %1251 = vrot.lane.b32.xlu0 %v998, 112
        %v1252 = vpop.permute.xlu0 %1251
        %1253 = vrot.lane.b32.xlu0 %v1059, 112
        %v1254 = vpop.permute.xlu0 %1253
        %vm1255 = vcmask 916480
        %v1256 = vsel %vm1255, %v1250, %v1252
        %v1257 = vsel %vm1255, %v1252, %v1254
        %v1261 = vsel %vm1074, %v932, 0
        %1263 = vmatprep.subr.mxu0 %v1235
        %1264 = vmatpush1.msra.mxu0 %v1234
        %1265 = vmatprep.subr.mxu0 %v1257
        %1266 = vmatpush1.msra.mxu0 %v1256
        %1267 = vmatprep.subr.mxu0 %v1248
        %1268 = vmatpush1.msra.mxu0 %v1247
        %1269 = vmatprep.subr.mxu0 0.0
        %1270 = vmatpush1.msra.mxu0 0.0
        %1271 = vmatprep.subr.mxu0 0.0
        %1272 = vmatpush1.msra.mxu0 0.0
        %1273 = vmatprep.subr.mxu0 0.0
        %1274 = vmatpush1.msra.mxu0 0.0
        %1275 = vmatprep.subr.mxu0 0.0
        %1276 = vmatpush1.msra.mxu0 0.0
        %1277 = vmatprep.subr.mxu0 0.0
        %1278 = vmatpush1.msra.mxu0 0.0
        %1279 = vmatprep.subr.mxu0 0.0
        %1280 = vmatpush1.msra.mxu0 0.0
        %1281 = vmatprep.subr.mxu0 0.0
        %1282 = vmatpush1.msra.mxu0 0.0
        %1283 = vmatprep.subr.mxu0 0.0
        %1284 = vmatpush1.msra.mxu0 0.0
        %1285 = vmatprep.subr.mxu0 0.0
        %1286 = vmatpush1.msra.mxu0 0.0
        %1287 = vmatprep.subr.mxu0 0.0
        %1288 = vmatpush1.msra.mxu0 0.0
        %1289 = vmatprep.subr.mxu0 0.0
        %1290 = vmatpush1.msra.mxu0 0.0
        %1291 = vmatprep.subr.mxu0 0.0
        %1292 = vmatpush1.msra.mxu0 0.0
        %1293 = vmatprep.subr.mxu0 0.0
        %1294 = vmatpush1.msra.mxu0 0.0
        %1295 = vmatprep.subr.mxu0 0.0
        %1296 = vmatpush1.msra.mxu0 0.0
        %1297 = vmatprep.subr.mxu0 0.0
        %1298 = vmatpush1.msra.mxu0 0.0
        %1299 = vmatprep.subr.mxu0 0.0
        %1300 = vmatpush1.msra.mxu0 0.0
        %1301 = vmatprep.subr.mxu0 0.0
        %1302 = vmatpush1.msra.mxu0 0.0
        %1303 = vmatprep.subr.mxu0 0.0
        %1304 = vmatpush1.msra.mxu0 0.0
        %1305 = vmatprep.subr.mxu0 0.0
        %1306 = vmatpush1.msra.mxu0 0.0
        %1307 = vmatprep.subr.mxu0 0.0
        %1308 = vmatpush1.msra.mxu0 0.0
        %1309 = vmatprep.subr.mxu0 0.0
        %1310 = vmatpush1.msra.mxu0 0.0
        %1311 = vmatprep.subr.mxu0 0.0
        %1312 = vmatpush1.msra.mxu0 0.0
        %1313 = vmatprep.subr.mxu0 0.0
        %1314 = vmatpush1.msra.mxu0 0.0
        %1315 = vmatprep.subr.mxu0 0.0
        %1316 = vmatpush1.msra.mxu0 0.0
        %1317 = vmatprep.subr.mxu0 0.0
        %1318 = vmatpush1.msra.mxu0 0.0
        %1319 = vmatprep.subr.mxu0 0.0
        %1320 = vmatpush1.msra.mxu0 0.0
        %1321 = vmatprep.subr.mxu0 0.0
        %1322 = vmatpush1.msra.mxu0 0.0
        %1323 = vmatprep.subr.mxu0 0.0
        %1324 = vmatpush1.msra.mxu0 0.0
        %1325 = vmatprep.subr.mxu0 0.0
        %1326 = vmatpush1.msra.mxu0 0.0
        %1327 = vmatprep.mubr.f32.mxu0 0.0
        %1328 = vmatmul.mubr.f32.gmra.mrb[0].mxu0 %v1261
        %v1329 = vpop.f32.mrb[0].mxu0
        %v1330 = vadd.f32 0.0, %v1329
        %v1331 = vpop.f32.mrb[0].mxu0
        %v1332 = vadd.f32 0.0, %v1331
        %1333 = vdwg.mxu0
        %v1334 = vadd.f32 %v1219, %v1330
        %v1335 = vadd.f32 %v1221, %v1332
        %1337 = vset.pattern.permute.xlu0 0
        %1338 = vperm.xlu0 %1337, %v933
        %v1339 = vpop.permute.xlu0 %1338
        %v1341 = vmul.f32 %v1334, %v1339
        %v1342 = vmul.f32 %v1335, %v1339
        %1344 = vset.pattern.permute.xlu0 0
        %1345 = vperm.xlu0 %1344, %v934
        %v1346 = vpop.permute.xlu0 %1345
        %v1348 = vadd.f32 %v1341, %v1346
        %v1349 = vadd.f32 %v1342, %v1346
        %vm1350 = vcmp.gt.f32.partialorder %v1348, 0.0
        %vm1351 = vcmp.gt.f32.partialorder %v1349, 0.0
        %v1352 = vmul.f32 %v1348, 0.1
        %v1353 = vmul.f32 %v1349, 0.1
        %v1354 = vsel %vm1350, %v1348, %v1352
        %v1355 = vsel %vm1351, %v1349, %v1353
        %1357 = vset.pattern.permute.xlu0 0
        %1358 = vperm.xlu0 %1357, %v939
        %v1359 = vpop.permute.xlu0 %1358
        %1362 = vset.pattern.permute.xlu0 0
        %1363 = vperm.xlu0 %1362, %v940
        %v1364 = vpop.permute.xlu0 %1363
        %1367 = vset.pattern.permute.xlu0 0
        %1368 = vperm.xlu0 %1367, %v941
        %v1369 = vpop.permute.xlu0 %1368
        %1372 = vset.pattern.permute.xlu0 0
        %1373 = vperm.xlu0 %1372, %v942
        %v1374 = vpop.permute.xlu0 %1373
        %vm1376 = vcmask 64512
        %v1378 = vsel %vm1376, %v935, 0
        %v1381 = vsel %vm1376, %v936, 0
        %v1384 = vsel %vm1376, %v937, 0
        %v1387 = vsel %vm1376, %v938, 0
        %1389 = vmatprep.subr.mxu0 %v1355
        %1390 = vmatpush1.msra.mxu0 %v1354
        %1391 = vmatprep.subr.mxu0 0.0
        %1392 = vmatpush1.msra.mxu0 0.0
        %1393 = vmatprep.subr.mxu0 0.0
        %1394 = vmatpush1.msra.mxu0 0.0
        %1395 = vmatprep.subr.mxu0 0.0
        %1396 = vmatpush1.msra.mxu0 0.0
        %1397 = vmatprep.subr.mxu0 0.0
        %1398 = vmatpush1.msra.mxu0 0.0
        %1399 = vmatprep.subr.mxu0 0.0
        %1400 = vmatpush1.msra.mxu0 0.0
        %1401 = vmatprep.subr.mxu0 0.0
        %1402 = vmatpush1.msra.mxu0 0.0
        %1403 = vmatprep.subr.mxu0 0.0
        %1404 = vmatpush1.msra.mxu0 0.0
        %1405 = vmatprep.subr.mxu0 0.0
        %1406 = vmatpush1.msra.mxu0 0.0
        %1407 = vmatprep.subr.mxu0 0.0
        %1408 = vmatpush1.msra.mxu0 0.0
        %1409 = vmatprep.subr.mxu0 0.0
        %1410 = vmatpush1.msra.mxu0 0.0
        %1411 = vmatprep.subr.mxu0 0.0
        %1412 = vmatpush1.msra.mxu0 0.0
        %1413 = vmatprep.subr.mxu0 0.0
        %1414 = vmatpush1.msra.mxu0 0.0
        %1415 = vmatprep.subr.mxu0 0.0
        %1416 = vmatpush1.msra.mxu0 0.0
        %1417 = vmatprep.subr.mxu0 0.0
        %1418 = vmatpush1.msra.mxu0 0.0
        %1419 = vmatprep.subr.mxu0 0.0
        %1420 = vmatpush1.msra.mxu0 0.0
        %1421 = vmatprep.subr.mxu0 0.0
        %1422 = vmatpush1.msra.mxu0 0.0
        %1423 = vmatprep.subr.mxu0 0.0
        %1424 = vmatpush1.msra.mxu0 0.0
        %1425 = vmatprep.subr.mxu0 0.0
        %1426 = vmatpush1.msra.mxu0 0.0
        %1427 = vmatprep.subr.mxu0 0.0
        %1428 = vmatpush1.msra.mxu0 0.0
        %1429 = vmatprep.subr.mxu0 0.0
        %1430 = vmatpush1.msra.mxu0 0.0
        %1431 = vmatprep.subr.mxu0 0.0
        %1432 = vmatpush1.msra.mxu0 0.0
        %1433 = vmatprep.subr.mxu0 0.0
        %1434 = vmatpush1.msra.mxu0 0.0
        %1435 = vmatprep.subr.mxu0 0.0
        %1436 = vmatpush1.msra.mxu0 0.0
        %1437 = vmatprep.subr.mxu0 0.0
        %1438 = vmatpush1.msra.mxu0 0.0
        %1439 = vmatprep.subr.mxu0 0.0
        %1440 = vmatpush1.msra.mxu0 0.0
        %1441 = vmatprep.subr.mxu0 0.0
        %1442 = vmatpush1.msra.mxu0 0.0
        %1443 = vmatprep.subr.mxu0 0.0
        %1444 = vmatpush1.msra.mxu0 0.0
        %1445 = vmatprep.subr.mxu0 0.0
        %1446 = vmatpush1.msra.mxu0 0.0
        %1447 = vmatprep.subr.mxu0 0.0
        %1448 = vmatpush1.msra.mxu0 0.0
        %1449 = vmatprep.subr.mxu0 0.0
        %1450 = vmatpush1.msra.mxu0 0.0
        %1451 = vmatprep.subr.mxu0 0.0
        %1452 = vmatpush1.msra.mxu0 0.0
        %1453 = vmatprep.mubr.f32.mxu0 0.0
        %1454 = vmatmul.mubr.f32.gmra.mrb[0].mxu0 %v1378
        %v1455 = vpop.f32.mrb[0].mxu0
        %v1456 = vadd.f32 %v1359, %v1455
        %v1457 = vpop.f32.mrb[0].mxu0
        %v1458 = vadd.f32 %v1359, %v1457
        %1459 = vmatprep.mubr.f32.mxu0 0.0
        %1460 = vmatmul.mubr.f32.gmra.mrb[0].mxu0 %v1381
        %v1461 = vpop.f32.mrb[0].mxu0
        %v1462 = vadd.f32 %v1364, %v1461
        %v1463 = vpop.f32.mrb[0].mxu0
        %v1464 = vadd.f32 %v1364, %v1463
        %1465 = vmatprep.mubr.f32.mxu0 0.0
        %1466 = vmatmul.mubr.f32.gmra.mrb[0].mxu0 %v1384
        %v1467 = vpop.f32.mrb[0].mxu0
        %v1468 = vadd.f32 %v1369, %v1467
        %v1469 = vpop.f32.mrb[0].mxu0
        %v1470 = vadd.f32 %v1369, %v1469
        %1471 = vmatprep.mubr.f32.mxu0 0.0
        %1472 = vmatmul.mubr.f32.gmra.mrb[0].mxu0 %v1387
        %v1473 = vpop.f32.mrb[0].mxu0
        %v1474 = vadd.f32 %v1374, %v1473
        %v1475 = vpop.f32.mrb[0].mxu0
        %v1476 = vadd.f32 %v1374, %v1475
        %1477 = vdwg.mxu0
        %1478 = vst [vmem:[%s896] sm:$0xff] %v1456
        %1479 = vst [vmem:[%s896 + $0x8] sm:$0xff] %v1458
        %1480 = vst [vmem:[%s896 + $0x10] sm:$0xff] %v1462
        %1481 = vst [vmem:[%s896 + $0x18] sm:$0xff] %v1464
        %1482 = vst [vmem:[%s896 + $0x20] sm:$0xff] %v1468
        %1483 = vst [vmem:[%s896 + $0x28] sm:$0xff] %v1470
        %1484 = vst [vmem:[%s896 + $0x30] sm:$0x3f] %v1474
        %1485 = vst [vmem:[%s896 + $0x38] sm:$0x3f] %v1476
        %vm1486 = vcmp.lt.s32.totalorder %v960, 0
        %v1487 = vsub.s32 0, %v960
        %v1488 = vsel %vm1486, %v1487, %v960
        %v1489 = vshrl.u32 %v1488, 3
        %v1490 = vand.u32 %v1488, 7
        %v1491 = vsub.s32 0, %v1490
        %v1492 = vsel %vm1486, %v1491, %v1490
        %vm1493 = vcmp.ne.s32.totalorder %v1492, 0
        %vm1494 = vcmp.lt.s32.totalorder %v1492, 0
        %vm1495 = vmand %vm1494, %vm1493
        %v1496 = vadd.s32 %v1492, 8
        %v1497 = vsel %vm1495, %v1496, %v1492
        %vm1498 = vcmp.gt.s32.totalorder %v1497, 0
        %vm1499 = vcmp.lt.s32.totalorder %v1497, 7
        %v1500 = vld [vmem:[%s887] sm:$0xff]
        %vm1501 = vcmask 523264
        %1502 = vst.msk [vmem:[#allocation2 + $0x8] sm:$0xff] %vm1501, %v1500
        %vm1503 = vcmask 597504
        %1504 = vst.msk [vmem:[#allocation2 + $0x8] sm:$0xff] %vm1503, 0.0
        %v1505 = vld [vmem:[#allocation2] sm:$0xff]
        %v1506 = vld [vmem:[#allocation2 + $0x8] sm:$0xff]
        %v1507 = vsel %vm1498, 1, 0
        %vm1508 = vcmp.eq.s32.totalorder %v1507, 1
        %1511 = vrot.lane.b32.xlu0 %v1505, 9
        %v1512 = vpop.permute.xlu0 %1511
        %1513 = vrot.lane.b32.xlu0 %v1506, 9
        %v1514 = vpop.permute.xlu0 %1513
        %vm1515 = vcmask 72704
        %v1516 = vsel %vm1515, %v1512, %v1514
        %v1518 = vsel %vm1508, %v1516, 0.0
        %v1519 = vsel %vm1499, 1, 0
        %vm1520 = vcmp.eq.s32.totalorder %v1519, 1
        %1521 = vrot.lane.b32.xlu0 %v1505, 7
        %v1522 = vpop.permute.xlu0 %1521
        %1523 = vrot.lane.b32.xlu0 %v1506, 7
        %v1524 = vpop.permute.xlu0 %1523
        %vm1525 = vcmask 56320
        %v1526 = vsel %vm1525, %v1522, %v1524
        %v1528 = vsel %vm1520, %v1526, 0.0
        %1529 = vrot.lane.b32.xlu0 %v1505, 8
        %v1530 = vpop.permute.xlu0 %1529
        %1531 = vrot.lane.b32.xlu0 %v1506, 8
        %v1532 = vpop.permute.xlu0 %1531
        %v1533 = vsel %vm1376, %v1530, %v1532
        %1535 = vrot.lane.b32.xlu0 %v1505, 1
        %v1536 = vpop.permute.xlu0 %1535
        %1537 = vrot.lane.b32.xlu0 %v1506, 1
        %v1538 = vpop.permute.xlu0 %1537
        %v1539 = vsel %vm1052, %v1536, %v1538
        %v1541 = vsel %vm1508, %v1539, 0.0
        %1542 = vrot.lane.b32.xlu0 %v1506, 127
        %v1543 = vpop.permute.xlu0 %1542
        %v1545 = vsel %vm1520, %v1543, 0.0
        %1546 = vmatprep.subr.mxu0 0.0
        %1547 = vmatpush1.msra.mxu0 %v1541
        %1548 = vmatprep.subr.mxu0 0.0
        %1549 = vmatpush1.msra.mxu0 %v1506
        %1550 = vmatprep.subr.mxu0 0.0
        %1551 = vmatpush1.msra.mxu0 %v1545
        %1552 = vmatprep.subr.mxu0 0.0
        %1553 = vmatpush1.msra.mxu0 0.0
        %1554 = vmatprep.subr.mxu0 0.0
        %1555 = vmatpush1.msra.mxu0 0.0
        %1556 = vmatprep.subr.mxu0 0.0
        %1557 = vmatpush1.msra.mxu0 0.0
        %1558 = vmatprep.subr.mxu0 0.0
        %1559 = vmatpush1.msra.mxu0 0.0
        %1560 = vmatprep.subr.mxu0 0.0
        %1561 = vmatpush1.msra.mxu0 0.0
        %1562 = vmatprep.subr.mxu0 0.0
        %1563 = vmatpush1.msra.mxu0 0.0
        %1564 = vmatprep.subr.mxu0 0.0
        %1565 = vmatpush1.msra.mxu0 0.0
        %1566 = vmatprep.subr.mxu0 0.0
        %1567 = vmatpush1.msra.mxu0 0.0
        %1568 = vmatprep.subr.mxu0 0.0
        %1569 = vmatpush1.msra.mxu0 0.0
        %1570 = vmatprep.subr.mxu0 0.0
        %1571 = vmatpush1.msra.mxu0 0.0
        %1572 = vmatprep.subr.mxu0 0.0
        %1573 = vmatpush1.msra.mxu0 0.0
        %1574 = vmatprep.subr.mxu0 0.0
        %1575 = vmatpush1.msra.mxu0 0.0
        %1576 = vmatprep.subr.mxu0 0.0
        %1577 = vmatpush1.msra.mxu0 0.0
        %1578 = vmatprep.subr.mxu0 0.0
        %1579 = vmatpush1.msra.mxu0 0.0
        %1580 = vmatprep.subr.mxu0 0.0
        %1581 = vmatpush1.msra.mxu0 0.0
        %1582 = vmatprep.subr.mxu0 0.0
        %1583 = vmatpush1.msra.mxu0 0.0
        %1584 = vmatprep.subr.mxu0 0.0
        %1585 = vmatpush1.msra.mxu0 0.0
        %1586 = vmatprep.subr.mxu0 0.0
        %1587 = vmatpush1.msra.mxu0 0.0
        %1588 = vmatprep.subr.mxu0 0.0
        %1589 = vmatpush1.msra.mxu0 0.0
        %1590 = vmatprep.subr.mxu0 0.0
        %1591 = vmatpush1.msra.mxu0 0.0
        %1592 = vmatprep.subr.mxu0 0.0
        %1593 = vmatpush1.msra.mxu0 0.0
        %1594 = vmatprep.subr.mxu0 0.0
        %1595 = vmatpush1.msra.mxu0 0.0
        %1596 = vmatprep.subr.mxu0 0.0
        %1597 = vmatpush1.msra.mxu0 0.0
        %1598 = vmatprep.subr.mxu0 0.0
        %1599 = vmatpush1.msra.mxu0 0.0
        %1600 = vmatprep.subr.mxu0 0.0
        %1601 = vmatpush1.msra.mxu0 0.0
        %1602 = vmatprep.subr.mxu0 0.0
        %1603 = vmatpush1.msra.mxu0 0.0
        %1604 = vmatprep.subr.mxu0 0.0
        %1605 = vmatpush1.msra.mxu0 0.0
        %1606 = vmatprep.subr.mxu0 0.0
        %1607 = vmatpush1.msra.mxu0 0.0
        %1608 = vmatprep.subr.mxu0 0.0
        %1609 = vmatpush1.msra.mxu0 0.0
        %1610 = vmatprep.mubr.f32.mxu0 0.0
        %1611 = vmatmul.mubr.f32.gmra.mrb[0].mxu0 %v1076
        %v1612 = vpop.f32.mrb[0].mxu0
        %v1613 = vadd.f32 0.0, %v1612
        %v1614 = vpop.f32.mrb[0].mxu0
        %1615 = vdwg.mxu0
        %1616 = vmatprep.subr.mxu0 0.0
        %1617 = vmatpush1.msra.mxu0 %v1518
        %1618 = vmatprep.subr.mxu0 0.0
        %1619 = vmatpush1.msra.mxu0 %v1533
        %1620 = vmatprep.subr.mxu0 0.0
        %1621 = vmatpush1.msra.mxu0 %v1528
        %1622 = vmatprep.subr.mxu0 0.0
        %1623 = vmatpush1.msra.mxu0 0.0
        %1624 = vmatprep.subr.mxu0 0.0
        %1625 = vmatpush1.msra.mxu0 0.0
        %1626 = vmatprep.subr.mxu0 0.0
        %1627 = vmatpush1.msra.mxu0 0.0
        %1628 = vmatprep.subr.mxu0 0.0
        %1629 = vmatpush1.msra.mxu0 0.0
        %1630 = vmatprep.subr.mxu0 0.0
        %1631 = vmatpush1.msra.mxu0 0.0
        %1632 = vmatprep.subr.mxu0 0.0
        %1633 = vmatpush1.msra.mxu0 0.0
        %1634 = vmatprep.subr.mxu0 0.0
        %1635 = vmatpush1.msra.mxu0 0.0
        %1636 = vmatprep.subr.mxu0 0.0
        %1637 = vmatpush1.msra.mxu0 0.0
        %1638 = vmatprep.subr.mxu0 0.0
        %1639 = vmatpush1.msra.mxu0 0.0
        %1640 = vmatprep.subr.mxu0 0.0
        %1641 = vmatpush1.msra.mxu0 0.0
        %1642 = vmatprep.subr.mxu0 0.0
        %1643 = vmatpush1.msra.mxu0 0.0
        %1644 = vmatprep.subr.mxu0 0.0
        %1645 = vmatpush1.msra.mxu0 0.0
        %1646 = vmatprep.subr.mxu0 0.0
        %1647 = vmatpush1.msra.mxu0 0.0
        %1648 = vmatprep.subr.mxu0 0.0
        %1649 = vmatpush1.msra.mxu0 0.0
        %1650 = vmatprep.subr.mxu0 0.0
        %1651 = vmatpush1.msra.mxu0 0.0
        %1652 = vmatprep.subr.mxu0 0.0
        %1653 = vmatpush1.msra.mxu0 0.0
        %1654 = vmatprep.subr.mxu0 0.0
        %1655 = vmatpush1.msra.mxu0 0.0
        %1656 = vmatprep.subr.mxu0 0.0
        %1657 = vmatpush1.msra.mxu0 0.0
        %1658 = vmatprep.subr.mxu0 0.0
        %1659 = vmatpush1.msra.mxu0 0.0
        %1660 = vmatprep.subr.mxu0 0.0
        %1661 = vmatpush1.msra.mxu0 0.0
        %1662 = vmatprep.subr.mxu0 0.0
        %1663 = vmatpush1.msra.mxu0 0.0
        %1664 = vmatprep.subr.mxu0 0.0
        %1665 = vmatpush1.msra.mxu0 0.0
        %1666 = vmatprep.subr.mxu0 0.0
        %1667 = vmatpush1.msra.mxu0 0.0
        %1668 = vmatprep.subr.mxu0 0.0
        %1669 = vmatpush1.msra.mxu0 0.0
        %1670 = vmatprep.subr.mxu0 0.0
        %1671 = vmatpush1.msra.mxu0 0.0
        %1672 = vmatprep.subr.mxu0 0.0
        %1673 = vmatpush1.msra.mxu0 0.0
        %1674 = vmatprep.subr.mxu0 0.0
        %1675 = vmatpush1.msra.mxu0 0.0
        %1676 = vmatprep.subr.mxu0 0.0
        %1677 = vmatpush1.msra.mxu0 0.0
        %1678 = vmatprep.subr.mxu0 0.0
        %1679 = vmatpush1.msra.mxu0 0.0
        %1680 = vmatprep.mubr.f32.mxu0 0.0
        %1681 = vmatmul.mubr.f32.gmra.mrb[0].mxu0 %v1150
        %v1682 = vpop.f32.mrb[0].mxu0
        %v1683 = vadd.f32 %v1613, %v1682
        %v1684 = vpop.f32.mrb[0].mxu0
        %1685 = vdwg.mxu0
        %1686 = vrot.lane.b32.xlu0 %v1506, 121
        %v1687 = vpop.permute.xlu0 %1686
        %v1689 = vsel %vm1508, %v1687, 0.0
        %1690 = vrot.lane.b32.xlu0 %v1506, 119
        %v1691 = vpop.permute.xlu0 %1690
        %v1693 = vsel %vm1520, %v1691, 0.0
        %1694 = vrot.lane.b32.xlu0 %v1506, 120
        %v1695 = vpop.permute.xlu0 %1694
        %1697 = vmatprep.subr.mxu0 0.0
        %1698 = vmatpush1.msra.mxu0 %v1689
        %1699 = vmatprep.subr.mxu0 0.0
        %1700 = vmatpush1.msra.mxu0 %v1695
        %1701 = vmatprep.subr.mxu0 0.0
        %1702 = vmatpush1.msra.mxu0 %v1693
        %1703 = vmatprep.subr.mxu0 0.0
        %1704 = vmatpush1.msra.mxu0 0.0
        %1705 = vmatprep.subr.mxu0 0.0
        %1706 = vmatpush1.msra.mxu0 0.0
        %1707 = vmatprep.subr.mxu0 0.0
        %1708 = vmatpush1.msra.mxu0 0.0
        %1709 = vmatprep.subr.mxu0 0.0
        %1710 = vmatpush1.msra.mxu0 0.0
        %1711 = vmatprep.subr.mxu0 0.0
        %1712 = vmatpush1.msra.mxu0 0.0
        %1713 = vmatprep.subr.mxu0 0.0
        %1714 = vmatpush1.msra.mxu0 0.0
        %1715 = vmatprep.subr.mxu0 0.0
        %1716 = vmatpush1.msra.mxu0 0.0
        %1717 = vmatprep.subr.mxu0 0.0
        %1718 = vmatpush1.msra.mxu0 0.0
        %1719 = vmatprep.subr.mxu0 0.0
        %1720 = vmatpush1.msra.mxu0 0.0
        %1721 = vmatprep.subr.mxu0 0.0
        %1722 = vmatpush1.msra.mxu0 0.0
        %1723 = vmatprep.subr.mxu0 0.0
        %1724 = vmatpush1.msra.mxu0 0.0
        %1725 = vmatprep.subr.mxu0 0.0
        %1726 = vmatpush1.msra.mxu0 0.0
        %1727 = vmatprep.subr.mxu0 0.0
        %1728 = vmatpush1.msra.mxu0 0.0
        %1729 = vmatprep.subr.mxu0 0.0
        %1730 = vmatpush1.msra.mxu0 0.0
        %1731 = vmatprep.subr.mxu0 0.0
        %1732 = vmatpush1.msra.mxu0 0.0
        %1733 = vmatprep.subr.mxu0 0.0
        %1734 = vmatpush1.msra.mxu0 0.0
        %1735 = vmatprep.subr.mxu0 0.0
        %1736 = vmatpush1.msra.mxu0 0.0
        %1737 = vmatprep.subr.mxu0 0.0
        %1738 = vmatpush1.msra.mxu0 0.0
        %1739 = vmatprep.subr.mxu0 0.0
        %1740 = vmatpush1.msra.mxu0 0.0
        %1741 = vmatprep.subr.mxu0 0.0
        %1742 = vmatpush1.msra.mxu0 0.0
        %1743 = vmatprep.subr.mxu0 0.0
        %1744 = vmatpush1.msra.mxu0 0.0
        %1745 = vmatprep.subr.mxu0 0.0
        %1746 = vmatpush1.msra.mxu0 0.0
        %1747 = vmatprep.subr.mxu0 0.0
        %1748 = vmatpush1.msra.mxu0 0.0
        %1749 = vmatprep.subr.mxu0 0.0
        %1750 = vmatpush1.msra.mxu0 0.0
        %1751 = vmatprep.subr.mxu0 0.0
        %1752 = vmatpush1.msra.mxu0 0.0
        %1753 = vmatprep.subr.mxu0 0.0
        %1754 = vmatpush1.msra.mxu0 0.0
        %1755 = vmatprep.subr.mxu0 0.0
        %1756 = vmatpush1.msra.mxu0 0.0
        %1757 = vmatprep.subr.mxu0 0.0
        %1758 = vmatpush1.msra.mxu0 0.0
        %1759 = vmatprep.subr.mxu0 0.0
        %1760 = vmatpush1.msra.mxu0 0.0
        %1761 = vmatprep.mubr.f32.mxu0 0.0
        %1762 = vmatmul.mubr.f32.gmra.mrb[0].mxu0 %v1261
        %v1763 = vpop.f32.mrb[0].mxu0
        %v1764 = vadd.f32 0.0, %v1763
        %v1765 = vpop.f32.mrb[0].mxu0
        %1766 = vdwg.mxu0
        %v1767 = vadd.f32 %v1683, %v1764
        %v1768 = vmul.f32 %v1767, %v1339
        %v1769 = vadd.f32 %v1768, %v1346
        %vm1770 = vcmp.gt.f32.partialorder %v1769, 0.0
        %v1771 = vmul.f32 %v1769, 0.1
        %v1772 = vsel %vm1770, %v1769, %v1771
        %1773 = vmatprep.subr.mxu0 0.0
        %1774 = vmatpush1.msra.mxu0 %v1772
        %1775 = vmatprep.subr.mxu0 0.0
        %1776 = vmatpush1.msra.mxu0 0.0
        %1777 = vmatprep.subr.mxu0 0.0
        %1778 = vmatpush1.msra.mxu0 0.0
        %1779 = vmatprep.subr.mxu0 0.0
        %1780 = vmatpush1.msra.mxu0 0.0
        %1781 = vmatprep.subr.mxu0 0.0
        %1782 = vmatpush1.msra.mxu0 0.0
        %1783 = vmatprep.subr.mxu0 0.0
        %1784 = vmatpush1.msra.mxu0 0.0
        %1785 = vmatprep.subr.mxu0 0.0
        %1786 = vmatpush1.msra.mxu0 0.0
        %1787 = vmatprep.subr.mxu0 0.0
        %1788 = vmatpush1.msra.mxu0 0.0
        %1789 = vmatprep.subr.mxu0 0.0
        %1790 = vmatpush1.msra.mxu0 0.0
        %1791 = vmatprep.subr.mxu0 0.0
        %1792 = vmatpush1.msra.mxu0 0.0
        %1793 = vmatprep.subr.mxu0 0.0
        %1794 = vmatpush1.msra.mxu0 0.0
        %1795 = vmatprep.subr.mxu0 0.0
        %1796 = vmatpush1.msra.mxu0 0.0
        %1797 = vmatprep.subr.mxu0 0.0
        %1798 = vmatpush1.msra.mxu0 0.0
        %1799 = vmatprep.subr.mxu0 0.0
        %1800 = vmatpush1.msra.mxu0 0.0
        %1801 = vmatprep.subr.mxu0 0.0
        %1802 = vmatpush1.msra.mxu0 0.0
        %1803 = vmatprep.subr.mxu0 0.0
        %1804 = vmatpush1.msra.mxu0 0.0
        %1805 = vmatprep.subr.mxu0 0.0
        %1806 = vmatpush1.msra.mxu0 0.0
        %1807 = vmatprep.subr.mxu0 0.0
        %1808 = vmatpush1.msra.mxu0 0.0
        %1809 = vmatprep.subr.mxu0 0.0
        %1810 = vmatpush1.msra.mxu0 0.0
        %1811 = vmatprep.subr.mxu0 0.0
        %1812 = vmatpush1.msra.mxu0 0.0
        %1813 = vmatprep.subr.mxu0 0.0
        %1814 = vmatpush1.msra.mxu0 0.0
        %1815 = vmatprep.subr.mxu0 0.0
        %1816 = vmatpush1.msra.mxu0 0.0
        %1817 = vmatprep.subr.mxu0 0.0
        %1818 = vmatpush1.msra.mxu0 0.0
        %1819 = vmatprep.subr.mxu0 0.0
        %1820 = vmatpush1.msra.mxu0 0.0
        %1821 = vmatprep.subr.mxu0 0.0
        %1822 = vmatpush1.msra.mxu0 0.0
        %1823 = vmatprep.subr.mxu0 0.0
        %1824 = vmatpush1.msra.mxu0 0.0
        %1825 = vmatprep.subr.mxu0 0.0
        %1826 = vmatpush1.msra.mxu0 0.0
        %1827 = vmatprep.subr.mxu0 0.0
        %1828 = vmatpush1.msra.mxu0 0.0
        %1829 = vmatprep.subr.mxu0 0.0
        %1830 = vmatpush1.msra.mxu0 0.0
        %1831 = vmatprep.subr.mxu0 0.0
        %1832 = vmatpush1.msra.mxu0 0.0
        %1833 = vmatprep.subr.mxu0 0.0
        %1834 = vmatpush1.msra.mxu0 0.0
        %1835 = vmatprep.subr.mxu0 0.0
        %1836 = vmatpush1.msra.mxu0 0.0
        %1837 = vmatprep.mubr.f32.mxu0 0.0
        %1838 = vmatmul.mubr.f32.gmra.mrb[0].mxu0 %v1378
        %v1839 = vpop.f32.mrb[0].mxu0
        %v1840 = vadd.f32 %v1359, %v1839
        %v1841 = vpop.f32.mrb[0].mxu0
        %1842 = vmatprep.mubr.f32.mxu0 0.0
        %1843 = vmatmul.mubr.f32.gmra.mrb[0].mxu0 %v1381
        %v1844 = vpop.f32.mrb[0].mxu0
        %v1845 = vadd.f32 %v1364, %v1844
        %v1846 = vpop.f32.mrb[0].mxu0
        %1847 = vmatprep.mubr.f32.mxu0 0.0
        %1848 = vmatmul.mubr.f32.gmra.mrb[0].mxu0 %v1384
        %v1849 = vpop.f32.mrb[0].mxu0
        %v1850 = vadd.f32 %v1369, %v1849
        %v1851 = vpop.f32.mrb[0].mxu0
        %1852 = vmatprep.mubr.f32.mxu0 0.0
        %1853 = vmatmul.mubr.f32.gmra.mrb[0].mxu0 %v1387
        %v1854 = vpop.f32.mrb[0].mxu0
        %v1855 = vadd.f32 %v1374, %v1854
        %v1856 = vpop.f32.mrb[0].mxu0
        %1857 = vdwg.mxu0
        %1858 = vst.msk [vmem:[%s901] sm:$0xff] %vm1501, %v1840
        %1859 = vst.msk [vmem:[%s901 + $0x8] sm:$0xff] %vm1501, %v1845
        %1860 = vst.msk [vmem:[%s901 + $0x10] sm:$0xff] %vm1501, %v1850
        %vm1861 = vcmask 521216
        %1862 = vst.msk [vmem:[%s901 + $0x18] sm:$0x3f] %vm1861, %v1855
        %vm1863 = vcmp.lt.s32.totalorder %v960, 0
        %v1864 = vsub.s32 0, %v960
        %v1865 = vsel %vm1863, %v1864, %v960
        %v1866 = vshrl.u32 %v1865, 2
        %v1867 = vand.u32 %v1865, 3
        %v1868 = vsub.s32 0, %v1867
        %v1869 = vsel %vm1863, %v1868, %v1867
        %vm1870 = vcmp.ne.s32.totalorder %v1869, 0
        %vm1871 = vcmp.lt.s32.totalorder %v1869, 0
        %vm1872 = vmand %vm1871, %vm1870
        %v1873 = vadd.s32 %v1869, 4
        %v1874 = vsel %vm1872, %v1873, %v1869
        %vm1875 = vcmp.gt.s32.totalorder %v1874, 0
        %vm1876 = vcmp.lt.s32.totalorder %v1874, 3
        %v1877 = vld [vmem:[%s765] sm:$0xff]
        %1878 = vst.msk [vmem:[#allocation2 + $0x8] sm:$0xff] %vm1041, %v1877
        %vm1879 = vcmask 171136
        %1880 = vst.msk [vmem:[#allocation2 + $0x8] sm:$0xff] %vm1879, 0.0
        %v1881 = vld [vmem:[#allocation2] sm:$0xff]
        %v1882 = vld [vmem:[#allocation2 + $0x8] sm:$0xff]
        %v1883 = vsel %vm1875, 1, 0
        %vm1884 = vcmp.eq.s32.totalorder %v1883, 1
        %1887 = vrot.lane.b32.xlu0 %v1881, 5
        %v1888 = vpop.permute.xlu0 %1887
        %1889 = vrot.lane.b32.xlu0 %v1882, 5
        %v1890 = vpop.permute.xlu0 %1889
        %vm1891 = vcmask 39936
        %v1892 = vsel %vm1891, %v1888, %v1890
        %v1894 = vsel %vm1884, %v1892, 0.0
        %v1895 = vsel %vm1876, 1, 0
        %vm1896 = vcmp.eq.s32.totalorder %v1895, 1
        %1897 = vrot.lane.b32.xlu0 %v1881, 3
        %v1898 = vpop.permute.xlu0 %1897
        %1899 = vrot.lane.b32.xlu0 %v1882, 3
        %v1900 = vpop.permute.xlu0 %1899
        %vm1901 = vcmask 23552
        %v1902 = vsel %vm1901, %v1898, %v1900
        %v1904 = vsel %vm1896, %v1902, 0.0
        %1905 = vrot.lane.b32.xlu0 %v1881, 4
        %v1906 = vpop.permute.xlu0 %1905
        %1907 = vrot.lane.b32.xlu0 %v1882, 4
        %v1908 = vpop.permute.xlu0 %1907
        %vm1909 = vcmask 31744
        %v1910 = vsel %vm1909, %v1906, %v1908
        %1912 = vrot.lane.b32.xlu0 %v1881, 1
        %v1913 = vpop.permute.xlu0 %1912
        %1914 = vrot.lane.b32.xlu0 %v1882, 1
        %v1915 = vpop.permute.xlu0 %1914
        %v1916 = vsel %vm1052, %v1913, %v1915
        %v1918 = vsel %vm1884, %v1916, 0.0
        %1919 = vrot.lane.b32.xlu0 %v1882, 127
        %v1920 = vpop.permute.xlu0 %1919
        %v1922 = vsel %vm1896, %v1920, 0.0
        %1923 = vmatprep.subr.mxu0 0.0
        %1924 = vmatpush1.msra.mxu0 %v1918
        %1925 = vmatprep.subr.mxu0 0.0
        %1926 = vmatpush1.msra.mxu0 %v1882
        %1927 = vmatprep.subr.mxu0 0.0
        %1928 = vmatpush1.msra.mxu0 %v1922
        %1929 = vmatprep.subr.mxu0 0.0
        %1930 = vmatpush1.msra.mxu0 0.0
        %1931 = vmatprep.subr.mxu0 0.0
        %1932 = vmatpush1.msra.mxu0 0.0
        %1933 = vmatprep.subr.mxu0 0.0
        %1934 = vmatpush1.msra.mxu0 0.0
        %1935 = vmatprep.subr.mxu0 0.0
        %1936 = vmatpush1.msra.mxu0 0.0
        %1937 = vmatprep.subr.mxu0 0.0
        %1938 = vmatpush1.msra.mxu0 0.0
        %1939 = vmatprep.subr.mxu0 0.0
        %1940 = vmatpush1.msra.mxu0 0.0
        %1941 = vmatprep.subr.mxu0 0.0
        %1942 = vmatpush1.msra.mxu0 0.0
        %1943 = vmatprep.subr.mxu0 0.0
        %1944 = vmatpush1.msra.mxu0 0.0
        %1945 = vmatprep.subr.mxu0 0.0
        %1946 = vmatpush1.msra.mxu0 0.0
        %1947 = vmatprep.subr.mxu0 0.0
        %1948 = vmatpush1.msra.mxu0 0.0
        %1949 = vmatprep.subr.mxu0 0.0
        %1950 = vmatpush1.msra.mxu0 0.0
        %1951 = vmatprep.subr.mxu0 0.0
        %1952 = vmatpush1.msra.mxu0 0.0
        %1953 = vmatprep.subr.mxu0 0.0
        %1954 = vmatpush1.msra.mxu0 0.0
        %1955 = vmatprep.subr.mxu0 0.0
        %1956 = vmatpush1.msra.mxu0 0.0
        %1957 = vmatprep.subr.mxu0 0.0
        %1958 = vmatpush1.msra.mxu0 0.0
        %1959 = vmatprep.subr.mxu0 0.0
        %1960 = vmatpush1.msra.mxu0 0.0
        %1961 = vmatprep.subr.mxu0 0.0
        %1962 = vmatpush1.msra.mxu0 0.0
        %1963 = vmatprep.subr.mxu0 0.0
        %1964 = vmatpush1.msra.mxu0 0.0
        %1965 = vmatprep.subr.mxu0 0.0
        %1966 = vmatpush1.msra.mxu0 0.0
        %1967 = vmatprep.subr.mxu0 0.0
        %1968 = vmatpush1.msra.mxu0 0.0
        %1969 = vmatprep.subr.mxu0 0.0
        %1970 = vmatpush1.msra.mxu0 0.0
        %1971 = vmatprep.subr.mxu0 0.0
        %1972 = vmatpush1.msra.mxu0 0.0
        %1973 = vmatprep.subr.mxu0 0.0
        %1974 = vmatpush1.msra.mxu0 0.0
        %1975 = vmatprep.subr.mxu0 0.0
        %1976 = vmatpush1.msra.mxu0 0.0
        %1977 = vmatprep.subr.mxu0 0.0
        %1978 = vmatpush1.msra.mxu0 0.0
        %1979 = vmatprep.subr.mxu0 0.0
        %1980 = vmatpush1.msra.mxu0 0.0
        %1981 = vmatprep.subr.mxu0 0.0
        %1982 = vmatpush1.msra.mxu0 0.0
        %1983 = vmatprep.subr.mxu0 0.0
        %1984 = vmatpush1.msra.mxu0 0.0
        %1985 = vmatprep.subr.mxu0 0.0
        %1986 = vmatpush1.msra.mxu0 0.0
        %1987 = vmatprep.mubr.f32.mxu0 0.0
        %1988 = vmatmul.mubr.f32.gmra.mrb[0].mxu0 %v1076
        %v1989 = vpop.f32.mrb[0].mxu0
        %v1990 = vadd.f32 0.0, %v1989
        %v1991 = vpop.f32.mrb[0].mxu0
        %1992 = vdwg.mxu0
        %1993 = vmatprep.subr.mxu0 0.0
        %1994 = vmatpush1.msra.mxu0 %v1894
        %1995 = vmatprep.subr.mxu0 0.0
        %1996 = vmatpush1.msra.mxu0 %v1910
        %1997 = vmatprep.subr.mxu0 0.0
        %1998 = vmatpush1.msra.mxu0 %v1904
        %1999 = vmatprep.subr.mxu0 0.0
        %2000 = vmatpush1.msra.mxu0 0.0
        %2001 = vmatprep.subr.mxu0 0.0
        %2002 = vmatpush1.msra.mxu0 0.0
        %2003 = vmatprep.subr.mxu0 0.0
        %2004 = vmatpush1.msra.mxu0 0.0
        %2005 = vmatprep.subr.mxu0 0.0
        %2006 = vmatpush1.msra.mxu0 0.0
        %2007 = vmatprep.subr.mxu0 0.0
        %2008 = vmatpush1.msra.mxu0 0.0
        %2009 = vmatprep.subr.mxu0 0.0
        %2010 = vmatpush1.msra.mxu0 0.0
        %2011 = vmatprep.subr.mxu0 0.0
        %2012 = vmatpush1.msra.mxu0 0.0
        %2013 = vmatprep.subr.mxu0 0.0
        %2014 = vmatpush1.msra.mxu0 0.0
        %2015 = vmatprep.subr.mxu0 0.0
        %2016 = vmatpush1.msra.mxu0 0.0
        %2017 = vmatprep.subr.mxu0 0.0
        %2018 = vmatpush1.msra.mxu0 0.0
        %2019 = vmatprep.subr.mxu0 0.0
        %2020 = vmatpush1.msra.mxu0 0.0
        %2021 = vmatprep.subr.mxu0 0.0
        %2022 = vmatpush1.msra.mxu0 0.0
        %2023 = vmatprep.subr.mxu0 0.0
        %2024 = vmatpush1.msra.mxu0 0.0
        %2025 = vmatprep.subr.mxu0 0.0
        %2026 = vmatpush1.msra.mxu0 0.0
        %2027 = vmatprep.subr.mxu0 0.0
        %2028 = vmatpush1.msra.mxu0 0.0
        %2029 = vmatprep.subr.mxu0 0.0
        %2030 = vmatpush1.msra.mxu0 0.0
        %2031 = vmatprep.subr.mxu0 0.0
        %2032 = vmatpush1.msra.mxu0 0.0
        %2033 = vmatprep.subr.mxu0 0.0
        %2034 = vmatpush1.msra.mxu0 0.0
        %2035 = vmatprep.subr.mxu0 0.0
        %2036 = vmatpush1.msra.mxu0 0.0
        %2037 = vmatprep.subr.mxu0 0.0
        %2038 = vmatpush1.msra.mxu0 0.0
        %2039 = vmatprep.subr.mxu0 0.0
        %2040 = vmatpush1.msra.mxu0 0.0
        %2041 = vmatprep.subr.mxu0 0.0
        %2042 = vmatpush1.msra.mxu0 0.0
        %2043 = vmatprep.subr.mxu0 0.0
        %2044 = vmatpush1.msra.mxu0 0.0
        %2045 = vmatprep.subr.mxu0 0.0
        %2046 = vmatpush1.msra.mxu0 0.0
        %2047 = vmatprep.subr.mxu0 0.0
        %2048 = vmatpush1.msra.mxu0 0.0
        %2049 = vmatprep.subr.mxu0 0.0
        %2050 = vmatpush1.msra.mxu0 0.0
        %2051 = vmatprep.subr.mxu0 0.0
        %2052 = vmatpush1.msra.mxu0 0.0
        %2053 = vmatprep.subr.mxu0 0.0
        %2054 = vmatpush1.msra.mxu0 0.0
        %2055 = vmatprep.subr.mxu0 0.0
        %2056 = vmatpush1.msra.mxu0 0.0
        %2057 = vmatprep.mubr.f32.mxu0 0.0
        %2058 = vmatmul.mubr.f32.gmra.mrb[0].mxu0 %v1150
        %v2059 = vpop.f32.mrb[0].mxu0
        %v2060 = vadd.f32 %v1990, %v2059
        %v2061 = vpop.f32.mrb[0].mxu0
        %2062 = vdwg.mxu0
        %2063 = vrot.lane.b32.xlu0 %v1882, 125
        %v2064 = vpop.permute.xlu0 %2063
        %v2066 = vsel %vm1884, %v2064, 0.0
        %2067 = vrot.lane.b32.xlu0 %v1882, 123
        %v2068 = vpop.permute.xlu0 %2067
        %v2070 = vsel %vm1896, %v2068, 0.0
        %2071 = vrot.lane.b32.xlu0 %v1882, 124
        %v2072 = vpop.permute.xlu0 %2071
        %2074 = vmatprep.subr.mxu0 0.0
        %2075 = vmatpush1.msra.mxu0 %v2066
        %2076 = vmatprep.subr.mxu0 0.0
        %2077 = vmatpush1.msra.mxu0 %v2072
        %2078 = vmatprep.subr.mxu0 0.0
        %2079 = vmatpush1.msra.mxu0 %v2070
        %2080 = vmatprep.subr.mxu0 0.0
        %2081 = vmatpush1.msra.mxu0 0.0
        %2082 = vmatprep.subr.mxu0 0.0
        %2083 = vmatpush1.msra.mxu0 0.0
        %2084 = vmatprep.subr.mxu0 0.0
        %2085 = vmatpush1.msra.mxu0 0.0
        %2086 = vmatprep.subr.mxu0 0.0
        %2087 = vmatpush1.msra.mxu0 0.0
        %2088 = vmatprep.subr.mxu0 0.0
        %2089 = vmatpush1.msra.mxu0 0.0
        %2090 = vmatprep.subr.mxu0 0.0
        %2091 = vmatpush1.msra.mxu0 0.0
        %2092 = vmatprep.subr.mxu0 0.0
        %2093 = vmatpush1.msra.mxu0 0.0
        %2094 = vmatprep.subr.mxu0 0.0
        %2095 = vmatpush1.msra.mxu0 0.0
        %2096 = vmatprep.subr.mxu0 0.0
        %2097 = vmatpush1.msra.mxu0 0.0
        %2098 = vmatprep.subr.mxu0 0.0
        %2099 = vmatpush1.msra.mxu0 0.0
        %2100 = vmatprep.subr.mxu0 0.0
        %2101 = vmatpush1.msra.mxu0 0.0
        %2102 = vmatprep.subr.mxu0 0.0
        %2103 = vmatpush1.msra.mxu0 0.0
        %2104 = vmatprep.subr.mxu0 0.0
        %2105 = vmatpush1.msra.mxu0 0.0
        %2106 = vmatprep.subr.mxu0 0.0
        %2107 = vmatpush1.msra.mxu0 0.0
        %2108 = vmatprep.subr.mxu0 0.0
        %2109 = vmatpush1.msra.mxu0 0.0
        %2110 = vmatprep.subr.mxu0 0.0
        %2111 = vmatpush1.msra.mxu0 0.0
        %2112 = vmatprep.subr.mxu0 0.0
        %2113 = vmatpush1.msra.mxu0 0.0
        %2114 = vmatprep.subr.mxu0 0.0
        %2115 = vmatpush1.msra.mxu0 0.0
        %2116 = vmatprep.subr.mxu0 0.0
        %2117 = vmatpush1.msra.mxu0 0.0
        %2118 = vmatprep.subr.mxu0 0.0
        %2119 = vmatpush1.msra.mxu0 0.0
        %2120 = vmatprep.subr.mxu0 0.0
        %2121 = vmatpush1.msra.mxu0 0.0
        %2122 = vmatprep.subr.mxu0 0.0
        %2123 = vmatpush1.msra.mxu0 0.0
        %2124 = vmatprep.subr.mxu0 0.0
        %2125 = vmatpush1.msra.mxu0 0.0
        %2126 = vmatprep.subr.mxu0 0.0
        %2127 = vmatpush1.msra.mxu0 0.0
        %2128 = vmatprep.subr.mxu0 0.0
        %2129 = vmatpush1.msra.mxu0 0.0
        %2130 = vmatprep.subr.mxu0 0.0
        %2131 = vmatpush1.msra.mxu0 0.0
        %2132 = vmatprep.subr.mxu0 0.0
        %2133 = vmatpush1.msra.mxu0 0.0
        %2134 = vmatprep.subr.mxu0 0.0
        %2135 = vmatpush1.msra.mxu0 0.0
        %2136 = vmatprep.subr.mxu0 0.0
        %2137 = vmatpush1.msra.mxu0 0.0
        %2138 = vmatprep.mubr.f32.mxu0 0.0
        %2139 = vmatmul.mubr.f32.gmra.mrb[0].mxu0 %v1261
        %v2140 = vpop.f32.mrb[0].mxu0
        %v2141 = vadd.f32 0.0, %v2140
        %v2142 = vpop.f32.mrb[0].mxu0
        %2143 = vdwg.mxu0
        %v2144 = vadd.f32 %v2060, %v2141
        %v2145 = vmul.f32 %v2144, %v1339
        %v2146 = vadd.f32 %v2145, %v1346
        %vm2147 = vcmp.gt.f32.partialorder %v2146, 0.0
        %v2148 = vmul.f32 %v2146, 0.1
        %v2149 = vsel %vm2147, %v2146, %v2148
        %2150 = vmatprep.subr.mxu0 0.0
        %2151 = vmatpush1.msra.mxu0 %v2149
        %2152 = vmatprep.subr.mxu0 0.0
        %2153 = vmatpush1.msra.mxu0 0.0
        %2154 = vmatprep.subr.mxu0 0.0
        %2155 = vmatpush1.msra.mxu0 0.0
        %2156 = vmatprep.subr.mxu0 0.0
        %2157 = vmatpush1.msra.mxu0 0.0
        %2158 = vmatprep.subr.mxu0 0.0
        %2159 = vmatpush1.msra.mxu0 0.0
        %2160 = vmatprep.subr.mxu0 0.0
        %2161 = vmatpush1.msra.mxu0 0.0
        %2162 = vmatprep.subr.mxu0 0.0
        %2163 = vmatpush1.msra.mxu0 0.0
        %2164 = vmatprep.subr.mxu0 0.0
        %2165 = vmatpush1.msra.mxu0 0.0
        %2166 = vmatprep.subr.mxu0 0.0
        %2167 = vmatpush1.msra.mxu0 0.0
        %2168 = vmatprep.subr.mxu0 0.0
        %2169 = vmatpush1.msra.mxu0 0.0
        %2170 = vmatprep.subr.mxu0 0.0
        %2171 = vmatpush1.msra.mxu0 0.0
        %2172 = vmatprep.subr.mxu0 0.0
        %2173 = vmatpush1.msra.mxu0 0.0
        %2174 = vmatprep.subr.mxu0 0.0
        %2175 = vmatpush1.msra.mxu0 0.0
        %2176 = vmatprep.subr.mxu0 0.0
        %2177 = vmatpush1.msra.mxu0 0.0
        %2178 = vmatprep.subr.mxu0 0.0
        %2179 = vmatpush1.msra.mxu0 0.0
        %2180 = vmatprep.subr.mxu0 0.0
        %2181 = vmatpush1.msra.mxu0 0.0
        %2182 = vmatprep.subr.mxu0 0.0
        %2183 = vmatpush1.msra.mxu0 0.0
        %2184 = vmatprep.subr.mxu0 0.0
        %2185 = vmatpush1.msra.mxu0 0.0
        %2186 = vmatprep.subr.mxu0 0.0
        %2187 = vmatpush1.msra.mxu0 0.0
        %2188 = vmatprep.subr.mxu0 0.0
        %2189 = vmatpush1.msra.mxu0 0.0
        %2190 = vmatprep.subr.mxu0 0.0
        %2191 = vmatpush1.msra.mxu0 0.0
        %2192 = vmatprep.subr.mxu0 0.0
        %2193 = vmatpush1.msra.mxu0 0.0
        %2194 = vmatprep.subr.mxu0 0.0
        %2195 = vmatpush1.msra.mxu0 0.0
        %2196 = vmatprep.subr.mxu0 0.0
        %2197 = vmatpush1.msra.mxu0 0.0
        %2198 = vmatprep.subr.mxu0 0.0
        %2199 = vmatpush1.msra.mxu0 0.0
        %2200 = vmatprep.subr.mxu0 0.0
        %2201 = vmatpush1.msra.mxu0 0.0
        %2202 = vmatprep.subr.mxu0 0.0
        %2203 = vmatpush1.msra.mxu0 0.0
        %2204 = vmatprep.subr.mxu0 0.0
        %2205 = vmatpush1.msra.mxu0 0.0
        %2206 = vmatprep.subr.mxu0 0.0
        %2207 = vmatpush1.msra.mxu0 0.0
        %2208 = vmatprep.subr.mxu0 0.0
        %2209 = vmatpush1.msra.mxu0 0.0
        %2210 = vmatprep.subr.mxu0 0.0
        %2211 = vmatpush1.msra.mxu0 0.0
        %2212 = vmatprep.subr.mxu0 0.0
        %2213 = vmatpush1.msra.mxu0 0.0
        %2214 = vmatprep.mubr.f32.mxu0 0.0
        %2215 = vmatmul.mubr.f32.gmra.mrb[0].mxu0 %v1378
        %v2216 = vpop.f32.mrb[0].mxu0
        %v2217 = vadd.f32 %v1359, %v2216
        %v2218 = vpop.f32.mrb[0].mxu0
        %2219 = vmatprep.mubr.f32.mxu0 0.0
        %2220 = vmatmul.mubr.f32.gmra.mrb[0].mxu0 %v1381
        %v2221 = vpop.f32.mrb[0].mxu0
        %v2222 = vadd.f32 %v1364, %v2221
        %v2223 = vpop.f32.mrb[0].mxu0
        %2224 = vmatprep.mubr.f32.mxu0 0.0
        %2225 = vmatmul.mubr.f32.gmra.mrb[0].mxu0 %v1384
        %v2226 = vpop.f32.mrb[0].mxu0
        %v2227 = vadd.f32 %v1369, %v2226
        %v2228 = vpop.f32.mrb[0].mxu0
        %2229 = vmatprep.mubr.f32.mxu0 0.0
        %2230 = vmatmul.mubr.f32.gmra.mrb[0].mxu0 %v1387
        %v2231 = vpop.f32.mrb[0].mxu0
        %v2232 = vadd.f32 %v1374, %v2231
        %v2233 = vpop.f32.mrb[0].mxu0
        %2234 = vdwg.mxu0
        %2235 = vst.msk [vmem:[%s906] sm:$0xff] %vm1041, %v2217
        %2236 = vst.msk [vmem:[%s906 + $0x8] sm:$0xff] %vm1041, %v2222
        %2237 = vst.msk [vmem:[%s906 + $0x10] sm:$0xff] %vm1041, %v2227
        %vm2238 = vcmask 128000
        %2239 = vst.msk [vmem:[%s906 + $0x18] sm:$0x3f] %vm2238, %v2232
        %vm2240 = vcmp.lt.s32.totalorder %v960, 0
        %v2241 = vsub.s32 0, %v960
        %v2242 = vsel %vm2240, %v2241, %v960
        %v2243 = vshrl.u32 %v2242, 1
        %v2244 = vand.u32 %v2242, 1
        %v2245 = vsub.s32 0, %v2244
        %v2246 = vsel %vm2240, %v2245, %v2244
        %vm2247 = vcmp.ne.s32.totalorder %v2246, 0
        %vm2248 = vcmp.lt.s32.totalorder %v2246, 0
        %vm2249 = vmand %vm2248, %vm2247
        %v2250 = vadd.s32 %v2246, 2
        %v2251 = vsel %vm2249, %v2250, %v2246
        %vm2252 = vcmp.gt.s32.totalorder %v2251, 0
        %vm2253 = vcmp.lt.s32.totalorder %v2251, 1
        %v2254 = vld [vmem:[%s891] sm:$0xff]
        %2255 = vst.msk [vmem:[#allocation2 + $0x8] sm:$0xff] %vm1909, %v2254
        %vm2256 = vcmask 56352
        %2257 = vst.msk [vmem:[#allocation2 + $0x8] sm:$0xff] %vm2256, 0.0
        %v2258 = vld [vmem:[#allocation2] sm:$0xff]
        %v2259 = vld [vmem:[#allocation2 + $0x8] sm:$0xff]
        %v2260 = vsel %vm2252, 1, 0
        %vm2261 = vcmp.eq.s32.totalorder %v2260, 1
        %2264 = vrot.lane.b32.xlu0 %v2258, 3
        %v2265 = vpop.permute.xlu0 %2264
        %2266 = vrot.lane.b32.xlu0 %v2259, 3
        %v2267 = vpop.permute.xlu0 %2266
        %v2268 = vsel %vm1901, %v2265, %v2267
        %v2270 = vsel %vm2261, %v2268, 0.0
        %v2271 = vsel %vm2253, 1, 0
        %vm2272 = vcmp.eq.s32.totalorder %v2271, 1
        %2273 = vrot.lane.b32.xlu0 %v2258, 1
        %v2274 = vpop.permute.xlu0 %2273
        %2275 = vrot.lane.b32.xlu0 %v2259, 1
        %v2276 = vpop.permute.xlu0 %2275
        %v2277 = vsel %vm1052, %v2274, %v2276
        %v2279 = vsel %vm2272, %v2277, 0.0
        %2280 = vrot.lane.b32.xlu0 %v2258, 2
        %v2281 = vpop.permute.xlu0 %2280
        %2282 = vrot.lane.b32.xlu0 %v2259, 2
        %v2283 = vpop.permute.xlu0 %2282
        %vm2284 = vcmask 15360
        %v2285 = vsel %vm2284, %v2281, %v2283
        %v2287 = vsel %vm2261, %v2277, 0.0
        %2288 = vrot.lane.b32.xlu0 %v2259, 127
        %v2289 = vpop.permute.xlu0 %2288
        %v2291 = vsel %vm2272, %v2289, 0.0
        %2292 = vmatprep.subr.mxu0 0.0
        %2293 = vmatpush1.msra.mxu0 %v2287
        %2294 = vmatprep.subr.mxu0 0.0
        %2295 = vmatpush1.msra.mxu0 %v2259
        %2296 = vmatprep.subr.mxu0 0.0
        %2297 = vmatpush1.msra.mxu0 %v2291
        %2298 = vmatprep.subr.mxu0 0.0
        %2299 = vmatpush1.msra.mxu0 0.0
        %2300 = vmatprep.subr.mxu0 0.0
        %2301 = vmatpush1.msra.mxu0 0.0
        %2302 = vmatprep.subr.mxu0 0.0
        %2303 = vmatpush1.msra.mxu0 0.0
        %2304 = vmatprep.subr.mxu0 0.0
        %2305 = vmatpush1.msra.mxu0 0.0
        %2306 = vmatprep.subr.mxu0 0.0
        %2307 = vmatpush1.msra.mxu0 0.0
        %2308 = vmatprep.subr.mxu0 0.0
        %2309 = vmatpush1.msra.mxu0 0.0
        %2310 = vmatprep.subr.mxu0 0.0
        %2311 = vmatpush1.msra.mxu0 0.0
        %2312 = vmatprep.subr.mxu0 0.0
        %2313 = vmatpush1.msra.mxu0 0.0
        %2314 = vmatprep.subr.mxu0 0.0
        %2315 = vmatpush1.msra.mxu0 0.0
        %2316 = vmatprep.subr.mxu0 0.0
        %2317 = vmatpush1.msra.mxu0 0.0
        %2318 = vmatprep.subr.mxu0 0.0
        %2319 = vmatpush1.msra.mxu0 0.0
        %2320 = vmatprep.subr.mxu0 0.0
        %2321 = vmatpush1.msra.mxu0 0.0
        %2322 = vmatprep.subr.mxu0 0.0
        %2323 = vmatpush1.msra.mxu0 0.0
        %2324 = vmatprep.subr.mxu0 0.0
        %2325 = vmatpush1.msra.mxu0 0.0
        %2326 = vmatprep.subr.mxu0 0.0
        %2327 = vmatpush1.msra.mxu0 0.0
        %2328 = vmatprep.subr.mxu0 0.0
        %2329 = vmatpush1.msra.mxu0 0.0
        %2330 = vmatprep.subr.mxu0 0.0
        %2331 = vmatpush1.msra.mxu0 0.0
        %2332 = vmatprep.subr.mxu0 0.0
        %2333 = vmatpush1.msra.mxu0 0.0
        %2334 = vmatprep.subr.mxu0 0.0
        %2335 = vmatpush1.msra.mxu0 0.0
        %2336 = vmatprep.subr.mxu0 0.0
        %2337 = vmatpush1.msra.mxu0 0.0
        %2338 = vmatprep.subr.mxu0 0.0
        %2339 = vmatpush1.msra.mxu0 0.0
        %2340 = vmatprep.subr.mxu0 0.0
        %2341 = vmatpush1.msra.mxu0 0.0
        %2342 = vmatprep.subr.mxu0 0.0
        %2343 = vmatpush1.msra.mxu0 0.0
        %2344 = vmatprep.subr.mxu0 0.0
        %2345 = vmatpush1.msra.mxu0 0.0
        %2346 = vmatprep.subr.mxu0 0.0
        %2347 = vmatpush1.msra.mxu0 0.0
        %2348 = vmatprep.subr.mxu0 0.0
        %2349 = vmatpush1.msra.mxu0 0.0
        %2350 = vmatprep.subr.mxu0 0.0
        %2351 = vmatpush1.msra.mxu0 0.0
        %2352 = vmatprep.subr.mxu0 0.0
        %2353 = vmatpush1.msra.mxu0 0.0
        %2354 = vmatprep.subr.mxu0 0.0
        %2355 = vmatpush1.msra.mxu0 0.0
        %2356 = vmatprep.mubr.f32.mxu0 0.0
        %2357 = vmatmul.mubr.f32.gmra.mrb[0].mxu0 %v1076
        %v2358 = vpop.f32.mrb[0].mxu0
        %v2359 = vadd.f32 0.0, %v2358
        %v2360 = vpop.f32.mrb[0].mxu0
        %2361 = vdwg.mxu0
        %2362 = vmatprep.subr.mxu0 0.0
        %2363 = vmatpush1.msra.mxu0 %v2270
        %2364 = vmatprep.subr.mxu0 0.0
        %2365 = vmatpush1.msra.mxu0 %v2285
        %2366 = vmatprep.subr.mxu0 0.0
        %2367 = vmatpush1.msra.mxu0 %v2279
        %2368 = vmatprep.subr.mxu0 0.0
        %2369 = vmatpush1.msra.mxu0 0.0
        %2370 = vmatprep.subr.mxu0 0.0
        %2371 = vmatpush1.msra.mxu0 0.0
        %2372 = vmatprep.subr.mxu0 0.0
        %2373 = vmatpush1.msra.mxu0 0.0
        %2374 = vmatprep.subr.mxu0 0.0
        %2375 = vmatpush1.msra.mxu0 0.0
        %2376 = vmatprep.subr.mxu0 0.0
        %2377 = vmatpush1.msra.mxu0 0.0
        %2378 = vmatprep.subr.mxu0 0.0
        %2379 = vmatpush1.msra.mxu0 0.0
        %2380 = vmatprep.subr.mxu0 0.0
        %2381 = vmatpush1.msra.mxu0 0.0
        %2382 = vmatprep.subr.mxu0 0.0
        %2383 = vmatpush1.msra.mxu0 0.0
        %2384 = vmatprep.subr.mxu0 0.0
        %2385 = vmatpush1.msra.mxu0 0.0
        %2386 = vmatprep.subr.mxu0 0.0
        %2387 = vmatpush1.msra.mxu0 0.0
        %2388 = vmatprep.subr.mxu0 0.0
        %2389 = vmatpush1.msra.mxu0 0.0
        %2390 = vmatprep.subr.mxu0 0.0
        %2391 = vmatpush1.msra.mxu0 0.0
        %2392 = vmatprep.subr.mxu0 0.0
        %2393 = vmatpush1.msra.mxu0 0.0
        %2394 = vmatprep.subr.mxu0 0.0
        %2395 = vmatpush1.msra.mxu0 0.0
        %2396 = vmatprep.subr.mxu0 0.0
        %2397 = vmatpush1.msra.mxu0 0.0
        %2398 = vmatprep.subr.mxu0 0.0
        %2399 = vmatpush1.msra.mxu0 0.0
        %2400 = vmatprep.subr.mxu0 0.0
        %2401 = vmatpush1.msra.mxu0 0.0
        %2402 = vmatprep.subr.mxu0 0.0
        %2403 = vmatpush1.msra.mxu0 0.0
        %2404 = vmatprep.subr.mxu0 0.0
        %2405 = vmatpush1.msra.mxu0 0.0
        %2406 = vmatprep.subr.mxu0 0.0
        %2407 = vmatpush1.msra.mxu0 0.0
        %2408 = vmatprep.subr.mxu0 0.0
        %2409 = vmatpush1.msra.mxu0 0.0
        %2410 = vmatprep.subr.mxu0 0.0
        %2411 = vmatpush1.msra.mxu0 0.0
        %2412 = vmatprep.subr.mxu0 0.0
        %2413 = vmatpush1.msra.mxu0 0.0
        %2414 = vmatprep.subr.mxu0 0.0
        %2415 = vmatpush1.msra.mxu0 0.0
        %2416 = vmatprep.subr.mxu0 0.0
        %2417 = vmatpush1.msra.mxu0 0.0
        %2418 = vmatprep.subr.mxu0 0.0
        %2419 = vmatpush1.msra.mxu0 0.0
        %2420 = vmatprep.subr.mxu0 0.0
        %2421 = vmatpush1.msra.mxu0 0.0
        %2422 = vmatprep.subr.mxu0 0.0
        %2423 = vmatpush1.msra.mxu0 0.0
        %2424 = vmatprep.subr.mxu0 0.0
        %2425 = vmatpush1.msra.mxu0 0.0
        %2426 = vmatprep.mubr.f32.mxu0 0.0
        %2427 = vmatmul.mubr.f32.gmra.mrb[0].mxu0 %v1150
        %v2428 = vpop.f32.mrb[0].mxu0
        %v2429 = vadd.f32 %v2359, %v2428
        %v2430 = vpop.f32.mrb[0].mxu0
        %2431 = vdwg.mxu0
        %v2432 = vsel %vm2261, %v2289, 0.0
        %2433 = vrot.lane.b32.xlu0 %v2259, 125
        %v2434 = vpop.permute.xlu0 %2433
        %v2436 = vsel %vm2272, %v2434, 0.0
        %2437 = vrot.lane.b32.xlu0 %v2259, 126
        %v2438 = vpop.permute.xlu0 %2437
        %2440 = vmatprep.subr.mxu0 0.0
        %2441 = vmatpush1.msra.mxu0 %v2432
        %2442 = vmatprep.subr.mxu0 0.0
        %2443 = vmatpush1.msra.mxu0 %v2438
        %2444 = vmatprep.subr.mxu0 0.0
        %2445 = vmatpush1.msra.mxu0 %v2436
        %2446 = vmatprep.subr.mxu0 0.0
        %2447 = vmatpush1.msra.mxu0 0.0
        %2448 = vmatprep.subr.mxu0 0.0
        %2449 = vmatpush1.msra.mxu0 0.0
        %2450 = vmatprep.subr.mxu0 0.0
        %2451 = vmatpush1.msra.mxu0 0.0
        %2452 = vmatprep.subr.mxu0 0.0
        %2453 = vmatpush1.msra.mxu0 0.0
        %2454 = vmatprep.subr.mxu0 0.0
        %2455 = vmatpush1.msra.mxu0 0.0
        %2456 = vmatprep.subr.mxu0 0.0
        %2457 = vmatpush1.msra.mxu0 0.0
        %2458 = vmatprep.subr.mxu0 0.0
        %2459 = vmatpush1.msra.mxu0 0.0
        %2460 = vmatprep.subr.mxu0 0.0
        %2461 = vmatpush1.msra.mxu0 0.0
        %2462 = vmatprep.subr.mxu0 0.0
        %2463 = vmatpush1.msra.mxu0 0.0
        %2464 = vmatprep.subr.mxu0 0.0
        %2465 = vmatpush1.msra.mxu0 0.0
        %2466 = vmatprep.subr.mxu0 0.0
        %2467 = vmatpush1.msra.mxu0 0.0
        %2468 = vmatprep.subr.mxu0 0.0
        %2469 = vmatpush1.msra.mxu0 0.0
        %2470 = vmatprep.subr.mxu0 0.0
        %2471 = vmatpush1.msra.mxu0 0.0
        %2472 = vmatprep.subr.mxu0 0.0
        %2473 = vmatpush1.msra.mxu0 0.0
        %2474 = vmatprep.subr.mxu0 0.0
        %2475 = vmatpush1.msra.mxu0 0.0
        %2476 = vmatprep.subr.mxu0 0.0
        %2477 = vmatpush1.msra.mxu0 0.0
        %2478 = vmatprep.subr.mxu0 0.0
        %2479 = vmatpush1.msra.mxu0 0.0
        %2480 = vmatprep.subr.mxu0 0.0
        %2481 = vmatpush1.msra.mxu0 0.0
        %2482 = vmatprep.subr.mxu0 0.0
        %2483 = vmatpush1.msra.mxu0 0.0
        %2484 = vmatprep.subr.mxu0 0.0
        %2485 = vmatpush1.msra.mxu0 0.0
        %2486 = vmatprep.subr.mxu0 0.0
        %2487 = vmatpush1.msra.mxu0 0.0
        %2488 = vmatprep.subr.mxu0 0.0
        %2489 = vmatpush1.msra.mxu0 0.0
        %2490 = vmatprep.subr.mxu0 0.0
        %2491 = vmatpush1.msra.mxu0 0.0
        %2492 = vmatprep.subr.mxu0 0.0
        %2493 = vmatpush1.msra.mxu0 0.0
        %2494 = vmatprep.subr.mxu0 0.0
        %2495 = vmatpush1.msra.mxu0 0.0
        %2496 = vmatprep.subr.mxu0 0.0
        %2497 = vmatpush1.msra.mxu0 0.0
        %2498 = vmatprep.subr.mxu0 0.0
        %2499 = vmatpush1.msra.mxu0 0.0
        %2500 = vmatprep.subr.mxu0 0.0
        %2501 = vmatpush1.msra.mxu0 0.0
        %2502 = vmatprep.subr.mxu0 0.0
        %2503 = vmatpush1.msra.mxu0 0.0
        %2504 = vmatprep.mubr.f32.mxu0 0.0
        %2505 = vmatmul.mubr.f32.gmra.mrb[0].mxu0 %v1261
        %v2506 = vpop.f32.mrb[0].mxu0
        %v2507 = vadd.f32 0.0, %v2506
        %v2508 = vpop.f32.mrb[0].mxu0
        %2509 = vdwg.mxu0
        %v2510 = vadd.f32 %v2429, %v2507
        %v2511 = vmul.f32 %v2510, %v1339
        %v2512 = vadd.f32 %v2511, %v1346
        %vm2513 = vcmp.gt.f32.partialorder %v2512, 0.0
        %v2514 = vmul.f32 %v2512, 0.1
        %v2515 = vsel %vm2513, %v2512, %v2514
        %2516 = vmatprep.subr.mxu0 0.0
        %2517 = vmatpush1.msra.mxu0 %v2515
        %2518 = vmatprep.subr.mxu0 0.0
        %2519 = vmatpush1.msra.mxu0 0.0
        %2520 = vmatprep.subr.mxu0 0.0
        %2521 = vmatpush1.msra.mxu0 0.0
        %2522 = vmatprep.subr.mxu0 0.0
        %2523 = vmatpush1.msra.mxu0 0.0
        %2524 = vmatprep.subr.mxu0 0.0
        %2525 = vmatpush1.msra.mxu0 0.0
        %2526 = vmatprep.subr.mxu0 0.0
        %2527 = vmatpush1.msra.mxu0 0.0
        %2528 = vmatprep.subr.mxu0 0.0
        %2529 = vmatpush1.msra.mxu0 0.0
        %2530 = vmatprep.subr.mxu0 0.0
        %2531 = vmatpush1.msra.mxu0 0.0
        %2532 = vmatprep.subr.mxu0 0.0
        %2533 = vmatpush1.msra.mxu0 0.0
        %2534 = vmatprep.subr.mxu0 0.0
        %2535 = vmatpush1.msra.mxu0 0.0
        %2536 = vmatprep.subr.mxu0 0.0
        %2537 = vmatpush1.msra.mxu0 0.0
        %2538 = vmatprep.subr.mxu0 0.0
        %2539 = vmatpush1.msra.mxu0 0.0
        %2540 = vmatprep.subr.mxu0 0.0
        %2541 = vmatpush1.msra.mxu0 0.0
        %2542 = vmatprep.subr.mxu0 0.0
        %2543 = vmatpush1.msra.mxu0 0.0
        %2544 = vmatprep.subr.mxu0 0.0
        %2545 = vmatpush1.msra.mxu0 0.0
        %2546 = vmatprep.subr.mxu0 0.0
        %2547 = vmatpush1.msra.mxu0 0.0
        %2548 = vmatprep.subr.mxu0 0.0
        %2549 = vmatpush1.msra.mxu0 0.0
        %2550 = vmatprep.subr.mxu0 0.0
        %2551 = vmatpush1.msra.mxu0 0.0
        %2552 = vmatprep.subr.mxu0 0.0
        %2553 = vmatpush1.msra.mxu0 0.0
        %2554 = vmatprep.subr.mxu0 0.0
        %2555 = vmatpush1.msra.mxu0 0.0
        %2556 = vmatprep.subr.mxu0 0.0
        %2557 = vmatpush1.msra.mxu0 0.0
        %2558 = vmatprep.subr.mxu0 0.0
        %2559 = vmatpush1.msra.mxu0 0.0
        %2560 = vmatprep.subr.mxu0 0.0
        %2561 = vmatpush1.msra.mxu0 0.0
        %2562 = vmatprep.subr.mxu0 0.0
        %2563 = vmatpush1.msra.mxu0 0.0
        %2564 = vmatprep.subr.mxu0 0.0
        %2565 = vmatpush1.msra.mxu0 0.0
        %2566 = vmatprep.subr.mxu0 0.0
        %2567 = vmatpush1.msra.mxu0 0.0
        %2568 = vmatprep.subr.mxu0 0.0
        %2569 = vmatpush1.msra.mxu0 0.0
        %2570 = vmatprep.subr.mxu0 0.0
        %2571 = vmatpush1.msra.mxu0 0.0
        %2572 = vmatprep.subr.mxu0 0.0
        %2573 = vmatpush1.msra.mxu0 0.0
        %2574 = vmatprep.subr.mxu0 0.0
        %2575 = vmatpush1.msra.mxu0 0.0
        %2576 = vmatprep.subr.mxu0 0.0
        %2577 = vmatpush1.msra.mxu0 0.0
        %2578 = vmatprep.subr.mxu0 0.0
        %2579 = vmatpush1.msra.mxu0 0.0
        %2580 = vmatprep.mubr.f32.mxu0 0.0
        %2581 = vmatmul.mubr.f32.gmra.mrb[0].mxu0 %v1378
        %v2582 = vpop.f32.mrb[0].mxu0
        %v2583 = vadd.f32 %v1359, %v2582
        %v2584 = vpop.f32.mrb[0].mxu0
        %2585 = vmatprep.mubr.f32.mxu0 0.0
        %2586 = vmatmul.mubr.f32.gmra.mrb[0].mxu0 %v1381
        %v2587 = vpop.f32.mrb[0].mxu0
        %v2588 = vadd.f32 %v1364, %v2587
        %v2589 = vpop.f32.mrb[0].mxu0
        %2590 = vmatprep.mubr.f32.mxu0 0.0
        %2591 = vmatmul.mubr.f32.gmra.mrb[0].mxu0 %v1384
        %v2592 = vpop.f32.mrb[0].mxu0
        %v2593 = vadd.f32 %v1369, %v2592
        %v2594 = vpop.f32.mrb[0].mxu0
        %2595 = vmatprep.mubr.f32.mxu0 0.0
        %2596 = vmatmul.mubr.f32.gmra.mrb[0].mxu0 %v1387
        %v2597 = vpop.f32.mrb[0].mxu0
        %v2598 = vadd.f32 %v1374, %v2597
        %v2599 = vpop.f32.mrb[0].mxu0
        %2600 = vdwg.mxu0
        %2601 = vst.msk [vmem:[%s911] sm:$0xff] %vm1909, %v2583
        %2602 = vst.msk [vmem:[%s911 + $0x8] sm:$0xff] %vm1909, %v2588
        %2603 = vst.msk [vmem:[%s911 + $0x10] sm:$0xff] %vm1909, %v2593
        %vm2604 = vcmask 29696
        %2605 = vst.msk [vmem:[%s911 + $0x18] sm:$0x3f] %vm2604, %v2598
        %v2606 = vld [vmem:[%s883] sm:$0xff]
        %v2607 = vld [vmem:[%s883 + $0x8] sm:$0xff]
        %v2608 = vld [vmem:[%s887] sm:$0xff]
        %v2609 = vld [vmem:[%s17] sm:$0xff]
        %v2610 = vld [vmem:[%s17 + $0x8] sm:$0xff]
        %v2611 = vld [vmem:[%s17 + $0x10] sm:$0xff]
        %v2612 = vld [vmem:[%s17 + $0x18] sm:$0xff]
        %v2613 = vld [vmem:[%s17 + $0x20] sm:$0xff]
        %v2614 = vld [vmem:[%s17 + $0x28] sm:$0xff]
        %v2615 = vld [vmem:[%s17 + $0x30] sm:$0xff]
        %v2616 = vld [vmem:[%s17 + $0x38] sm:$0xff]
        %v2617 = vld [vmem:[%s17 + $0x40] sm:$0xff]
        %v2618 = vld [vmem:[%s17 + $0x48] sm:$0xff]
        %v2619 = vld [vmem:[%s17 + $0x50] sm:$0xff]
        %v2620 = vld [vmem:[%s17 + $0x58] sm:$0xff]
        %v2621 = vld [vmem:[%s17 + $0x60] sm:$0xff]
        %v2622 = vld [vmem:[%s17 + $0x68] sm:$0xff]
        %v2623 = vld [vmem:[%s17 + $0x70] sm:$0xff]
        %v2624 = vld [vmem:[%s17 + $0x78] sm:$0xff]
        %v2626 = vsel %vm1501, %v2608, 0
        %2628 = vmatprep.subr.mxu0 %v2610
        %2629 = vmatpush1.msra.mxu0 %v2609
        %2630 = vmatprep.subr.mxu0 %v2612
        %2631 = vmatpush1.msra.mxu0 %v2611
        %2632 = vmatprep.subr.mxu0 %v2614
        %2633 = vmatpush1.msra.mxu0 %v2613
        %2634 = vmatprep.subr.mxu0 %v2616
        %2635 = vmatpush1.msra.mxu0 %v2615
        %2636 = vmatprep.subr.mxu0 %v2618
        %2637 = vmatpush1.msra.mxu0 %v2617
        %2638 = vmatprep.subr.mxu0 %v2620
        %2639 = vmatpush1.msra.mxu0 %v2619
        %2640 = vmatprep.subr.mxu0 %v2622
        %2641 = vmatpush1.msra.mxu0 %v2621
        %2642 = vmatprep.subr.mxu0 %v2624
        %2643 = vmatpush1.msra.mxu0 %v2623
        %2644 = vmatprep.subr.mxu0 0.0
        %2645 = vmatpush1.msra.mxu0 0.0
        %2646 = vmatprep.subr.mxu0 0.0
        %2647 = vmatpush1.msra.mxu0 0.0
        %2648 = vmatprep.subr.mxu0 0.0
        %2649 = vmatpush1.msra.mxu0 0.0
        %2650 = vmatprep.subr.mxu0 0.0
        %2651 = vmatpush1.msra.mxu0 0.0
        %2652 = vmatprep.subr.mxu0 0.0
        %2653 = vmatpush1.msra.mxu0 0.0
        %2654 = vmatprep.subr.mxu0 0.0
        %2655 = vmatpush1.msra.mxu0 0.0
        %2656 = vmatprep.subr.mxu0 0.0
        %2657 = vmatpush1.msra.mxu0 0.0
        %2658 = vmatprep.subr.mxu0 0.0
        %2659 = vmatpush1.msra.mxu0 0.0
        %2660 = vmatprep.subr.mxu0 0.0
        %2661 = vmatpush1.msra.mxu0 0.0
        %2662 = vmatprep.subr.mxu0 0.0
        %2663 = vmatpush1.msra.mxu0 0.0
        %2664 = vmatprep.subr.mxu0 0.0
        %2665 = vmatpush1.msra.mxu0 0.0
        %2666 = vmatprep.subr.mxu0 0.0
        %2667 = vmatpush1.msra.mxu0 0.0
        %2668 = vmatprep.subr.mxu0 0.0
        %2669 = vmatpush1.msra.mxu0 0.0
        %2670 = vmatprep.subr.mxu0 0.0
        %2671 = vmatpush1.msra.mxu0 0.0
        %2672 = vmatprep.subr.mxu0 0.0
        %2673 = vmatpush1.msra.mxu0 0.0
        %2674 = vmatprep.subr.mxu0 0.0
        %2675 = vmatpush1.msra.mxu0 0.0
        %2676 = vmatprep.subr.mxu0 0.0
        %2677 = vmatpush1.msra.mxu0 0.0
        %2678 = vmatprep.subr.mxu0 0.0
        %2679 = vmatpush1.msra.mxu0 0.0
        %2680 = vmatprep.subr.mxu0 0.0
        %2681 = vmatpush1.msra.mxu0 0.0
        %2682 = vmatprep.subr.mxu0 0.0
        %2683 = vmatpush1.msra.mxu0 0.0
        %2684 = vmatprep.subr.mxu0 0.0
        %2685 = vmatpush1.msra.mxu0 0.0
        %2686 = vmatprep.subr.mxu0 0.0
        %2687 = vmatpush1.msra.mxu0 0.0
        %2688 = vmatprep.subr.mxu0 0.0
        %2689 = vmatpush1.msra.mxu0 0.0
        %2690 = vmatprep.subr.mxu0 0.0
        %2691 = vmatpush1.msra.mxu0 0.0
        %2692 = vmatprep.mubr.f32.mxu0 0.0
        %2693 = vmatmul.mubr.f32.gmra.mrb[0].mxu0 %v2626
        %v2694 = vpop.f32.mrb[0].mxu0
        %v2695 = vadd.f32 0.0, %v2694
        %v2696 = vpop.f32.mrb[0].mxu0
        %v2697 = vadd.f32 0.0, %v2696
        %2698 = vdwg.mxu0
        %v2699 = vld [vmem:[%s765] sm:$0xff]
        %v2700 = vld [vmem:[%s18] sm:$0xff]
        %v2701 = vld [vmem:[%s18 + $0x8] sm:$0xff]
        %v2702 = vld [vmem:[%s18 + $0x10] sm:$0xff]
        %v2703 = vld [vmem:[%s18 + $0x18] sm:$0xff]
        %v2705 = vsel %vm1041, %v2699, 0
        %2707 = vmatprep.subr.mxu0 %v2701
        %2708 = vmatpush1.msra.mxu0 %v2700
        %2709 = vmatprep.subr.mxu0 %v2703
        %2710 = vmatpush1.msra.mxu0 %v2702
        %2711 = vmatprep.subr.mxu0 0.0
        %2712 = vmatpush1.msra.mxu0 0.0
        %2713 = vmatprep.subr.mxu0 0.0
        %2714 = vmatpush1.msra.mxu0 0.0
        %2715 = vmatprep.subr.mxu0 0.0
        %2716 = vmatpush1.msra.mxu0 0.0
        %2717 = vmatprep.subr.mxu0 0.0
        %2718 = vmatpush1.msra.mxu0 0.0
        %2719 = vmatprep.subr.mxu0 0.0
        %2720 = vmatpush1.msra.mxu0 0.0
        %2721 = vmatprep.subr.mxu0 0.0
        %2722 = vmatpush1.msra.mxu0 0.0
        %2723 = vmatprep.subr.mxu0 0.0
        %2724 = vmatpush1.msra.mxu0 0.0
        %2725 = vmatprep.subr.mxu0 0.0
        %2726 = vmatpush1.msra.mxu0 0.0
        %2727 = vmatprep.subr.mxu0 0.0
        %2728 = vmatpush1.msra.mxu0 0.0
        %2729 = vmatprep.subr.mxu0 0.0
        %2730 = vmatpush1.msra.mxu0 0.0
        %2731 = vmatprep.subr.mxu0 0.0
        %2732 = vmatpush1.msra.mxu0 0.0
        %2733 = vmatprep.subr.mxu0 0.0
        %2734 = vmatpush1.msra.mxu0 0.0
        %2735 = vmatprep.subr.mxu0 0.0
        %2736 = vmatpush1.msra.mxu0 0.0
        %2737 = vmatprep.subr.mxu0 0.0
        %2738 = vmatpush1.msra.mxu0 0.0
        %2739 = vmatprep.subr.mxu0 0.0
        %2740 = vmatpush1.msra.mxu0 0.0
        %2741 = vmatprep.subr.mxu0 0.0
        %2742 = vmatpush1.msra.mxu0 0.0
        %2743 = vmatprep.subr.mxu0 0.0
        %2744 = vmatpush1.msra.mxu0 0.0
        %2745 = vmatprep.subr.mxu0 0.0
        %2746 = vmatpush1.msra.mxu0 0.0
        %2747 = vmatprep.subr.mxu0 0.0
        %2748 = vmatpush1.msra.mxu0 0.0
        %2749 = vmatprep.subr.mxu0 0.0
        %2750 = vmatpush1.msra.mxu0 0.0
        %2751 = vmatprep.subr.mxu0 0.0
        %2752 = vmatpush1.msra.mxu0 0.0
        %2753 = vmatprep.subr.mxu0 0.0
        %2754 = vmatpush1.msra.mxu0 0.0
        %2755 = vmatprep.subr.mxu0 0.0
        %2756 = vmatpush1.msra.mxu0 0.0
        %2757 = vmatprep.subr.mxu0 0.0
        %2758 = vmatpush1.msra.mxu0 0.0
        %2759 = vmatprep.subr.mxu0 0.0
        %2760 = vmatpush1.msra.mxu0 0.0
        %2761 = vmatprep.subr.mxu0 0.0
        %2762 = vmatpush1.msra.mxu0 0.0
        %2763 = vmatprep.subr.mxu0 0.0
        %2764 = vmatpush1.msra.mxu0 0.0
        %2765 = vmatprep.subr.mxu0 0.0
        %2766 = vmatpush1.msra.mxu0 0.0
        %2767 = vmatprep.subr.mxu0 0.0
        %2768 = vmatpush1.msra.mxu0 0.0
        %2769 = vmatprep.subr.mxu0 0.0
        %2770 = vmatpush1.msra.mxu0 0.0
        %2771 = vmatprep.mubr.f32.mxu0 0.0
        %2772 = vmatmul.mubr.f32.gmra.mrb[0].mxu0 %v2705
        %v2773 = vpop.f32.mrb[0].mxu0
        %v2774 = vadd.f32 0.0, %v2773
        %v2775 = vpop.f32.mrb[0].mxu0
        %v2776 = vadd.f32 0.0, %v2775
        %2777 = vdwg.mxu0
        %v2778 = vld [vmem:[%s891] sm:$0xff]
        %v2779 = vld [vmem:[%s19] sm:$0xff]
        %v2781 = vcombine.high %v2779, %v2779
        %v2783 = vsel %vm1909, %v2778, 0
        %vm2785 = vcmask 1043456
        %v2786 = vsel %vm2785, %v2779, 0
        %v2788 = vsel %vm2785, %v2781, 0
        %2790 = vmatprep.subr.mxu0 %v2788
        %2791 = vmatpush1.msra.mxu0 %v2786
        %2792 = vmatprep.subr.mxu0 0.0
        %2793 = vmatpush1.msra.mxu0 0.0
        %2794 = vmatprep.subr.mxu0 0.0
        %2795 = vmatpush1.msra.mxu0 0.0
        %2796 = vmatprep.subr.mxu0 0.0
        %2797 = vmatpush1.msra.mxu0 0.0
        %2798 = vmatprep.subr.mxu0 0.0
        %2799 = vmatpush1.msra.mxu0 0.0
        %2800 = vmatprep.subr.mxu0 0.0
        %2801 = vmatpush1.msra.mxu0 0.0
        %2802 = vmatprep.subr.mxu0 0.0
        %2803 = vmatpush1.msra.mxu0 0.0
        %2804 = vmatprep.subr.mxu0 0.0
        %2805 = vmatpush1.msra.mxu0 0.0
        %2806 = vmatprep.subr.mxu0 0.0
        %2807 = vmatpush1.msra.mxu0 0.0
        %2808 = vmatprep.subr.mxu0 0.0
        %2809 = vmatpush1.msra.mxu0 0.0
        %2810 = vmatprep.subr.mxu0 0.0
        %2811 = vmatpush1.msra.mxu0 0.0
        %2812 = vmatprep.subr.mxu0 0.0
        %2813 = vmatpush1.msra.mxu0 0.0
        %2814 = vmatprep.subr.mxu0 0.0
        %2815 = vmatpush1.msra.mxu0 0.0
        %2816 = vmatprep.subr.mxu0 0.0
        %2817 = vmatpush1.msra.mxu0 0.0
        %2818 = vmatprep.subr.mxu0 0.0
        %2819 = vmatpush1.msra.mxu0 0.0
        %2820 = vmatprep.subr.mxu0 0.0
        %2821 = vmatpush1.msra.mxu0 0.0
        %2822 = vmatprep.subr.mxu0 0.0
        %2823 = vmatpush1.msra.mxu0 0.0
        %2824 = vmatprep.subr.mxu0 0.0
        %2825 = vmatpush1.msra.mxu0 0.0
        %2826 = vmatprep.subr.mxu0 0.0
        %2827 = vmatpush1.msra.mxu0 0.0
        %2828 = vmatprep.subr.mxu0 0.0
        %2829 = vmatpush1.msra.mxu0 0.0
        %2830 = vmatprep.subr.mxu0 0.0
        %2831 = vmatpush1.msra.mxu0 0.0
        %2832 = vmatprep.subr.mxu0 0.0
        %2833 = vmatpush1.msra.mxu0 0.0
        %2834 = vmatprep.subr.mxu0 0.0
        %2835 = vmatpush1.msra.mxu0 0.0
        %2836 = vmatprep.subr.mxu0 0.0
        %2837 = vmatpush1.msra.mxu0 0.0
        %2838 = vmatprep.subr.mxu0 0.0
        %2839 = vmatpush1.msra.mxu0 0.0
        %2840 = vmatprep.subr.mxu0 0.0
        %2841 = vmatpush1.msra.mxu0 0.0
        %2842 = vmatprep.subr.mxu0 0.0
        %2843 = vmatpush1.msra.mxu0 0.0
        %2844 = vmatprep.subr.mxu0 0.0
        %2845 = vmatpush1.msra.mxu0 0.0
        %2846 = vmatprep.subr.mxu0 0.0
        %2847 = vmatpush1.msra.mxu0 0.0
        %2848 = vmatprep.subr.mxu0 0.0
        %2849 = vmatpush1.msra.mxu0 0.0
        %2850 = vmatprep.subr.mxu0 0.0
        %2851 = vmatpush1.msra.mxu0 0.0
        %2852 = vmatprep.subr.mxu0 0.0
        %2853 = vmatpush1.msra.mxu0 0.0
        %2854 = vmatprep.mubr.f32.mxu0 0.0
        %2855 = vmatmul.mubr.f32.gmra.mrb[0].mxu0 %v2783
        %v2856 = vpop.f32.mrb[0].mxu0
        %v2857 = vadd.f32 0.0, %v2856
        %v2858 = vpop.f32.mrb[0].mxu0
        %v2859 = vadd.f32 0.0, %v2858
        %2860 = vdwg.mxu0
        %2861 = vst [vmem:[#allocation2 + $0x8] sm:$0xff] %v2606
        %2862 = vst [vmem:[#allocation2 + $0x10] sm:$0xff] %v2607
        %2863 = vst [vmem:[#allocation2 + $0x28] sm:$0xff] %v2695
        %2864 = vst [vmem:[#allocation2 + $0x30] sm:$0xff] %v2697
        %2865 = vst [vmem:[#allocation2 + $0x48] sm:$0xff] %v2774
        %2866 = vst [vmem:[#allocation2 + $0x50] sm:$0xff] %v2776
        %2867 = vst [vmem:[#allocation2 + $0x68] sm:$0xff] %v2857
        %2868 = vst [vmem:[#allocation2 + $0x70] sm:$0xff] %v2859
        %2869 = vst.msk [vmem:[#allocation2 + $0x18] sm:$0xff] %vm994, 0.0
        %2870 = vst.msk [vmem:[#allocation2 + $0x38] sm:$0xff] %vm994, 0.0
        %2871 = vst.msk [vmem:[#allocation2 + $0x58] sm:$0xff] %vm994, 0.0
        %2872 = vst.msk [vmem:[#allocation2 + $0x78] sm:$0xff] %vm994, 0.0
        %v2873 = vld [vmem:[#allocation2] sm:$0xff]
        %v2874 = vld [vmem:[#allocation2 + $0x8] sm:$0xff]
        %v2875 = vld [vmem:[#allocation2 + $0x10] sm:$0xff]
        %v2876 = vld [vmem:[#allocation2 + $0x20] sm:$0xff]
        %v2877 = vld [vmem:[#allocation2 + $0x28] sm:$0xff]
        %v2878 = vld [vmem:[#allocation2 + $0x30] sm:$0xff]
        %v2879 = vld [vmem:[#allocation2 + $0x40] sm:$0xff]
        %v2880 = vld [vmem:[#allocation2 + $0x48] sm:$0xff]
        %v2881 = vld [vmem:[#allocation2 + $0x50] sm:$0xff]
        %v2882 = vld [vmem:[#allocation2 + $0x60] sm:$0xff]
        %v2883 = vld [vmem:[#allocation2 + $0x68] sm:$0xff]
        %v2884 = vld [vmem:[#allocation2 + $0x70] sm:$0xff]
        %2897 = vrot.lane.b32.xlu0 %v2873, 17
        %v2898 = vpop.permute.xlu0 %2897
        %2899 = vrot.lane.b32.xlu0 %v2874, 17
        %v2900 = vpop.permute.xlu0 %2899
        %2901 = vrot.lane.b32.xlu0 %v2875, 17
        %v2902 = vpop.permute.xlu0 %2901
        %2903 = vrot.lane.b32.xlu0 %v2876, 17
        %v2904 = vpop.permute.xlu0 %2903
        %2905 = vrot.lane.b32.xlu0 %v2877, 17
        %v2906 = vpop.permute.xlu0 %2905
        %2907 = vrot.lane.b32.xlu0 %v2878, 17
        %v2908 = vpop.permute.xlu0 %2907
        %2909 = vrot.lane.b32.xlu0 %v2879, 17
        %v2910 = vpop.permute.xlu0 %2909
        %2911 = vrot.lane.b32.xlu0 %v2880, 17
        %v2912 = vpop.permute.xlu0 %2911
        %2913 = vrot.lane.b32.xlu0 %v2881, 17
        %v2914 = vpop.permute.xlu0 %2913
        %2915 = vrot.lane.b32.xlu0 %v2882, 17
        %v2916 = vpop.permute.xlu0 %2915
        %2917 = vrot.lane.b32.xlu0 %v2883, 17
        %v2918 = vpop.permute.xlu0 %2917
        %2919 = vrot.lane.b32.xlu0 %v2884, 17
        %v2920 = vpop.permute.xlu0 %2919
        %v2921 = vsel %vm994, %v2898, %v2900
        %v2922 = vsel %vm994, %v2900, %v2902
        %v2923 = vsel %vm994, %v2904, %v2906
        %v2924 = vsel %vm994, %v2906, %v2908
        %v2925 = vsel %vm994, %v2910, %v2912
        %v2926 = vsel %vm994, %v2912, %v2914
        %v2927 = vsel %vm994, %v2916, %v2918
        %v2928 = vsel %vm994, %v2918, %v2920
        %v2937 = vsel %vm1001, %v2921, 0.0
        %v2938 = vsel %vm1002, %v2922, 0.0
        %v2939 = vsel %vm1001, %v2923, 0.0
        %v2940 = vsel %vm1002, %v2924, 0.0
        %v2941 = vsel %vm1001, %v2925, 0.0
        %v2942 = vsel %vm1002, %v2926, 0.0
        %v2943 = vsel %vm1001, %v2927, 0.0
        %v2944 = vsel %vm1002, %v2928, 0.0
        %2945 = vrot.lane.b32.xlu0 %v2873, 15
        %v2946 = vpop.permute.xlu0 %2945
        %2947 = vrot.lane.b32.xlu0 %v2874, 15
        %v2948 = vpop.permute.xlu0 %2947
        %2949 = vrot.lane.b32.xlu0 %v2875, 15
        %v2950 = vpop.permute.xlu0 %2949
        %2951 = vrot.lane.b32.xlu0 %v2876, 15
        %v2952 = vpop.permute.xlu0 %2951
        %2953 = vrot.lane.b32.xlu0 %v2877, 15
        %v2954 = vpop.permute.xlu0 %2953
        %2955 = vrot.lane.b32.xlu0 %v2878, 15
        %v2956 = vpop.permute.xlu0 %2955
        %2957 = vrot.lane.b32.xlu0 %v2879, 15
        %v2958 = vpop.permute.xlu0 %2957
        %2959 = vrot.lane.b32.xlu0 %v2880, 15
        %v2960 = vpop.permute.xlu0 %2959
        %2961 = vrot.lane.b32.xlu0 %v2881, 15
        %v2962 = vpop.permute.xlu0 %2961
        %2963 = vrot.lane.b32.xlu0 %v2882, 15
        %v2964 = vpop.permute.xlu0 %2963
        %2965 = vrot.lane.b32.xlu0 %v2883, 15
        %v2966 = vpop.permute.xlu0 %2965
        %2967 = vrot.lane.b32.xlu0 %v2884, 15
        %v2968 = vpop.permute.xlu0 %2967
        %v2969 = vsel %vm1028, %v2946, %v2948
        %v2970 = vsel %vm1028, %v2948, %v2950
        %v2971 = vsel %vm1028, %v2952, %v2954
        %v2972 = vsel %vm1028, %v2954, %v2956
        %v2973 = vsel %vm1028, %v2958, %v2960
        %v2974 = vsel %vm1028, %v2960, %v2962
        %v2975 = vsel %vm1028, %v2964, %v2966
        %v2976 = vsel %vm1028, %v2966, %v2968
        %v2985 = vsel %vm1020, %v2969, 0.0
        %v2986 = vsel %vm1021, %v2970, 0.0
        %v2987 = vsel %vm1020, %v2971, 0.0
        %v2988 = vsel %vm1021, %v2972, 0.0
        %v2989 = vsel %vm1020, %v2973, 0.0
        %v2990 = vsel %vm1021, %v2974, 0.0
        %v2991 = vsel %vm1020, %v2975, 0.0
        %v2992 = vsel %vm1021, %v2976, 0.0
        %2993 = vrot.lane.b32.xlu0 %v2873, 16
        %v2994 = vpop.permute.xlu0 %2993
        %2995 = vrot.lane.b32.xlu0 %v2874, 16
        %v2996 = vpop.permute.xlu0 %2995
        %2997 = vrot.lane.b32.xlu0 %v2875, 16
        %v2998 = vpop.permute.xlu0 %2997
        %2999 = vrot.lane.b32.xlu0 %v2876, 16
        %v3000 = vpop.permute.xlu0 %2999
        %3001 = vrot.lane.b32.xlu0 %v2877, 16
        %v3002 = vpop.permute.xlu0 %3001
        %3003 = vrot.lane.b32.xlu0 %v2878, 16
        %v3004 = vpop.permute.xlu0 %3003
        %3005 = vrot.lane.b32.xlu0 %v2879, 16
        %v3006 = vpop.permute.xlu0 %3005
        %3007 = vrot.lane.b32.xlu0 %v2880, 16
        %v3008 = vpop.permute.xlu0 %3007
        %3009 = vrot.lane.b32.xlu0 %v2881, 16
        %v3010 = vpop.permute.xlu0 %3009
        %3011 = vrot.lane.b32.xlu0 %v2882, 16
        %v3012 = vpop.permute.xlu0 %3011
        %3013 = vrot.lane.b32.xlu0 %v2883, 16
        %v3014 = vpop.permute.xlu0 %3013
        %3015 = vrot.lane.b32.xlu0 %v2884, 16
        %v3016 = vpop.permute.xlu0 %3015
        %v3017 = vsel %vm1041, %v2994, %v2996
        %v3018 = vsel %vm1041, %v2996, %v2998
        %v3019 = vsel %vm1041, %v3000, %v3002
        %v3020 = vsel %vm1041, %v3002, %v3004
        %v3021 = vsel %vm1041, %v3006, %v3008
        %v3022 = vsel %vm1041, %v3008, %v3010
        %v3023 = vsel %vm1041, %v3012, %v3014
        %v3024 = vsel %vm1041, %v3014, %v3016
        %3033 = vrot.lane.b32.xlu0 %v2873, 1
        %v3034 = vpop.permute.xlu0 %3033
        %3035 = vrot.lane.b32.xlu0 %v2874, 1
        %v3036 = vpop.permute.xlu0 %3035
        %3037 = vrot.lane.b32.xlu0 %v2875, 1
        %v3038 = vpop.permute.xlu0 %3037
        %3039 = vrot.lane.b32.xlu0 %v2876, 1
        %v3040 = vpop.permute.xlu0 %3039
        %3041 = vrot.lane.b32.xlu0 %v2877, 1
        %v3042 = vpop.permute.xlu0 %3041
        %3043 = vrot.lane.b32.xlu0 %v2878, 1
        %v3044 = vpop.permute.xlu0 %3043
        %3045 = vrot.lane.b32.xlu0 %v2879, 1
        %v3046 = vpop.permute.xlu0 %3045
        %3047 = vrot.lane.b32.xlu0 %v2880, 1
        %v3048 = vpop.permute.xlu0 %3047
        %3049 = vrot.lane.b32.xlu0 %v2881, 1
        %v3050 = vpop.permute.xlu0 %3049
        %3051 = vrot.lane.b32.xlu0 %v2882, 1
        %v3052 = vpop.permute.xlu0 %3051
        %3053 = vrot.lane.b32.xlu0 %v2883, 1
        %v3054 = vpop.permute.xlu0 %3053
        %3055 = vrot.lane.b32.xlu0 %v2884, 1
        %v3056 = vpop.permute.xlu0 %3055
        %v3057 = vsel %vm1052, %v3034, %v3036
        %v3058 = vsel %vm1052, %v3036, %v3038
        %v3059 = vsel %vm1052, %v3040, %v3042
        %v3060 = vsel %vm1052, %v3042, %v3044
        %v3061 = vsel %vm1052, %v3046, %v3048
        %v3062 = vsel %vm1052, %v3048, %v3050
        %v3063 = vsel %vm1052, %v3052, %v3054
        %v3064 = vsel %vm1052, %v3054, %v3056
        %v3073 = vsel %vm1001, %v3057, 0.0
        %v3074 = vsel %vm1002, %v3058, 0.0
        %v3075 = vsel %vm1001, %v3059, 0.0
        %v3076 = vsel %vm1002, %v3060, 0.0
        %v3077 = vsel %vm1001, %v3061, 0.0
        %v3078 = vsel %vm1002, %v3062, 0.0
        %v3079 = vsel %vm1001, %v3063, 0.0
        %v3080 = vsel %vm1002, %v3064, 0.0
        %v3081 = vld [vmem:[#allocation2 + $0x8] sm:$0xff]
        %v3082 = vld [vmem:[#allocation2 + $0x10] sm:$0xff]
        %v3083 = vld [vmem:[#allocation2 + $0x18] sm:$0xff]
        %v3084 = vld [vmem:[#allocation2 + $0x28] sm:$0xff]
        %v3085 = vld [vmem:[#allocation2 + $0x30] sm:$0xff]
        %v3086 = vld [vmem:[#allocation2 + $0x38] sm:$0xff]
        %v3087 = vld [vmem:[#allocation2 + $0x48] sm:$0xff]
        %v3088 = vld [vmem:[#allocation2 + $0x50] sm:$0xff]
        %v3089 = vld [vmem:[#allocation2 + $0x58] sm:$0xff]
        %v3090 = vld [vmem:[#allocation2 + $0x68] sm:$0xff]
        %v3091 = vld [vmem:[#allocation2 + $0x70] sm:$0xff]
        %v3092 = vld [vmem:[#allocation2 + $0x78] sm:$0xff]
        %3105 = vrot.lane.b32.xlu0 %v3081, 127
        %v3106 = vpop.permute.xlu0 %3105
        %3107 = vrot.lane.b32.xlu0 %v3082, 127
        %v3108 = vpop.permute.xlu0 %3107
        %3109 = vrot.lane.b32.xlu0 %v3083, 127
        %v3110 = vpop.permute.xlu0 %3109
        %3111 = vrot.lane.b32.xlu0 %v3084, 127
        %v3112 = vpop.permute.xlu0 %3111
        %3113 = vrot.lane.b32.xlu0 %v3085, 127
        %v3114 = vpop.permute.xlu0 %3113
        %3115 = vrot.lane.b32.xlu0 %v3086, 127
        %v3116 = vpop.permute.xlu0 %3115
        %3117 = vrot.lane.b32.xlu0 %v3087, 127
        %v3118 = vpop.permute.xlu0 %3117
        %3119 = vrot.lane.b32.xlu0 %v3088, 127
        %v3120 = vpop.permute.xlu0 %3119
        %3121 = vrot.lane.b32.xlu0 %v3089, 127
        %v3122 = vpop.permute.xlu0 %3121
        %3123 = vrot.lane.b32.xlu0 %v3090, 127
        %v3124 = vpop.permute.xlu0 %3123
        %3125 = vrot.lane.b32.xlu0 %v3091, 127
        %v3126 = vpop.permute.xlu0 %3125
        %3127 = vrot.lane.b32.xlu0 %v3092, 127
        %v3128 = vpop.permute.xlu0 %3127
        %v3129 = vsel %vm1067, %v3106, %v3108
        %v3130 = vsel %vm1067, %v3108, %v3110
        %v3131 = vsel %vm1067, %v3112, %v3114
        %v3132 = vsel %vm1067, %v3114, %v3116
        %v3133 = vsel %vm1067, %v3118, %v3120
        %v3134 = vsel %vm1067, %v3120, %v3122
        %v3135 = vsel %vm1067, %v3124, %v3126
        %v3136 = vsel %vm1067, %v3126, %v3128
        %v3145 = vsel %vm1020, %v3129, 0.0
        %v3146 = vsel %vm1021, %v3130, 0.0
        %v3147 = vsel %vm1020, %v3131, 0.0
        %v3148 = vsel %vm1021, %v3132, 0.0
        %v3149 = vsel %vm1020, %v3133, 0.0
        %v3150 = vsel %vm1021, %v3134, 0.0
        %v3151 = vsel %vm1020, %v3135, 0.0
        %v3152 = vsel %vm1021, %v3136, 0.0
        %vm3153 = vcmask 785408
        %v3155 = vsel %vm3153, %v945, 0
        %3157 = vmatprep.subr.mxu0 %v3074
        %3158 = vmatpush1.msra.mxu0 %v3073
        %3159 = vmatprep.subr.mxu0 %v3076
        %3160 = vmatpush1.msra.mxu0 %v3075
        %3161 = vmatprep.subr.mxu0 %v3078
        %3162 = vmatpush1.msra.mxu0 %v3077
        %3163 = vmatprep.subr.mxu0 %v3080
        %3164 = vmatpush1.msra.mxu0 %v3079
        %3165 = vmatprep.subr.mxu0 %v2875
        %3166 = vmatpush1.msra.mxu0 %v2874
        %3167 = vmatprep.subr.mxu0 %v2878
        %3168 = vmatpush1.msra.mxu0 %v2877
        %3169 = vmatprep.subr.mxu0 %v2881
        %3170 = vmatpush1.msra.mxu0 %v2880
        %3171 = vmatprep.subr.mxu0 %v2884
        %3172 = vmatpush1.msra.mxu0 %v2883
        %3173 = vmatprep.subr.mxu0 %v3146
        %3174 = vmatpush1.msra.mxu0 %v3145
        %3175 = vmatprep.subr.mxu0 %v3148
        %3176 = vmatpush1.msra.mxu0 %v3147
        %3177 = vmatprep.subr.mxu0 %v3150
        %3178 = vmatpush1.msra.mxu0 %v3149
        %3179 = vmatprep.subr.mxu0 %v3152
        %3180 = vmatpush1.msra.mxu0 %v3151
        %3181 = vmatprep.subr.mxu0 0.0
        %3182 = vmatpush1.msra.mxu0 0.0
        %3183 = vmatprep.subr.mxu0 0.0
        %3184 = vmatpush1.msra.mxu0 0.0
        %3185 = vmatprep.subr.mxu0 0.0
        %3186 = vmatpush1.msra.mxu0 0.0
        %3187 = vmatprep.subr.mxu0 0.0
        %3188 = vmatpush1.msra.mxu0 0.0
        %3189 = vmatprep.subr.mxu0 0.0
        %3190 = vmatpush1.msra.mxu0 0.0
        %3191 = vmatprep.subr.mxu0 0.0
        %3192 = vmatpush1.msra.mxu0 0.0
        %3193 = vmatprep.subr.mxu0 0.0
        %3194 = vmatpush1.msra.mxu0 0.0
        %3195 = vmatprep.subr.mxu0 0.0
        %3196 = vmatpush1.msra.mxu0 0.0
        %3197 = vmatprep.subr.mxu0 0.0
        %3198 = vmatpush1.msra.mxu0 0.0
        %3199 = vmatprep.subr.mxu0 0.0
        %3200 = vmatpush1.msra.mxu0 0.0
        %3201 = vmatprep.subr.mxu0 0.0
        %3202 = vmatpush1.msra.mxu0 0.0
        %3203 = vmatprep.subr.mxu0 0.0
        %3204 = vmatpush1.msra.mxu0 0.0
        %3205 = vmatprep.subr.mxu0 0.0
        %3206 = vmatpush1.msra.mxu0 0.0
        %3207 = vmatprep.subr.mxu0 0.0
        %3208 = vmatpush1.msra.mxu0 0.0
        %3209 = vmatprep.subr.mxu0 0.0
        %3210 = vmatpush1.msra.mxu0 0.0
        %3211 = vmatprep.subr.mxu0 0.0
        %3212 = vmatpush1.msra.mxu0 0.0
        %3213 = vmatprep.subr.mxu0 0.0
        %3214 = vmatpush1.msra.mxu0 0.0
        %3215 = vmatprep.subr.mxu0 0.0
        %3216 = vmatpush1.msra.mxu0 0.0
        %3217 = vmatprep.subr.mxu0 0.0
        %3218 = vmatpush1.msra.mxu0 0.0
        %3219 = vmatprep.subr.mxu0 0.0
        %3220 = vmatpush1.msra.mxu0 0.0
        %3221 = vmatprep.mubr.f32.mxu0 0.0
        %3222 = vmatmul.mubr.f32.gmra.mrb[0].mxu0 %v3155
        %v3223 = vpop.f32.mrb[0].mxu0
        %v3224 = vadd.f32 0.0, %v3223
        %v3225 = vpop.f32.mrb[0].mxu0
        %v3226 = vadd.f32 0.0, %v3225
        %3227 = vdwg.mxu0
        %v3229 = vsel %vm3153, %v943, 0
        %3231 = vmatprep.subr.mxu0 %v2938
        %3232 = vmatpush1.msra.mxu0 %v2937
        %3233 = vmatprep.subr.mxu0 %v2940
        %3234 = vmatpush1.msra.mxu0 %v2939
        %3235 = vmatprep.subr.mxu0 %v2942
        %3236 = vmatpush1.msra.mxu0 %v2941
        %3237 = vmatprep.subr.mxu0 %v2944
        %3238 = vmatpush1.msra.mxu0 %v2943
        %3239 = vmatprep.subr.mxu0 %v3018
        %3240 = vmatpush1.msra.mxu0 %v3017
        %3241 = vmatprep.subr.mxu0 %v3020
        %3242 = vmatpush1.msra.mxu0 %v3019
        %3243 = vmatprep.subr.mxu0 %v3022
        %3244 = vmatpush1.msra.mxu0 %v3021
        %3245 = vmatprep.subr.mxu0 %v3024
        %3246 = vmatpush1.msra.mxu0 %v3023
        %3247 = vmatprep.subr.mxu0 %v2986
        %3248 = vmatpush1.msra.mxu0 %v2985
        %3249 = vmatprep.subr.mxu0 %v2988
        %3250 = vmatpush1.msra.mxu0 %v2987
        %3251 = vmatprep.subr.mxu0 %v2990
        %3252 = vmatpush1.msra.mxu0 %v2989
        %3253 = vmatprep.subr.mxu0 %v2992
        %3254 = vmatpush1.msra.mxu0 %v2991
        %3255 = vmatprep.subr.mxu0 0.0
        %3256 = vmatpush1.msra.mxu0 0.0
        %3257 = vmatprep.subr.mxu0 0.0
        %3258 = vmatpush1.msra.mxu0 0.0
        %3259 = vmatprep.subr.mxu0 0.0
        %3260 = vmatpush1.msra.mxu0 0.0
        %3261 = vmatprep.subr.mxu0 0.0
        %3262 = vmatpush1.msra.mxu0 0.0
        %3263 = vmatprep.subr.mxu0 0.0
        %3264 = vmatpush1.msra.mxu0 0.0
        %3265 = vmatprep.subr.mxu0 0.0
        %3266 = vmatpush1.msra.mxu0 0.0
        %3267 = vmatprep.subr.mxu0 0.0
        %3268 = vmatpush1.msra.mxu0 0.0
        %3269 = vmatprep.subr.mxu0 0.0
        %3270 = vmatpush1.msra.mxu0 0.0
        %3271 = vmatprep.subr.mxu0 0.0
        %3272 = vmatpush1.msra.mxu0 0.0
        %3273 = vmatprep.subr.mxu0 0.0
        %3274 = vmatpush1.msra.mxu0 0.0
        %3275 = vmatprep.subr.mxu0 0.0
        %3276 = vmatpush1.msra.mxu0 0.0
        %3277 = vmatprep.subr.mxu0 0.0
        %3278 = vmatpush1.msra.mxu0 0.0
        %3279 = vmatprep.subr.mxu0 0.0
        %3280 = vmatpush1.msra.mxu0 0.0
        %3281 = vmatprep.subr.mxu0 0.0
        %3282 = vmatpush1.msra.mxu0 0.0
        %3283 = vmatprep.subr.mxu0 0.0
        %3284 = vmatpush1.msra.mxu0 0.0
        %3285 = vmatprep.subr.mxu0 0.0
        %3286 = vmatpush1.msra.mxu0 0.0
        %3287 = vmatprep.subr.mxu0 0.0
        %3288 = vmatpush1.msra.mxu0 0.0
        %3289 = vmatprep.subr.mxu0 0.0
        %3290 = vmatpush1.msra.mxu0 0.0
        %3291 = vmatprep.subr.mxu0 0.0
        %3292 = vmatpush1.msra.mxu0 0.0
        %3293 = vmatprep.subr.mxu0 0.0
        %3294 = vmatpush1.msra.mxu0 0.0
        %3295 = vmatprep.mubr.f32.mxu0 0.0
        %3296 = vmatmul.mubr.f32.gmra.mrb[0].mxu0 %v3229
        %v3297 = vpop.f32.mrb[0].mxu0
        %v3298 = vadd.f32 %v3224, %v3297
        %v3299 = vpop.f32.mrb[0].mxu0
        %v3300 = vadd.f32 %v3226, %v3299
        %3301 = vdwg.mxu0
        %3302 = vrot.lane.b32.xlu0 %v3081, 113
        %v3303 = vpop.permute.xlu0 %3302
        %3304 = vrot.lane.b32.xlu0 %v3082, 113
        %v3305 = vpop.permute.xlu0 %3304
        %3306 = vrot.lane.b32.xlu0 %v3083, 113
        %v3307 = vpop.permute.xlu0 %3306
        %3308 = vrot.lane.b32.xlu0 %v3084, 113
        %v3309 = vpop.permute.xlu0 %3308
        %3310 = vrot.lane.b32.xlu0 %v3085, 113
        %v3311 = vpop.permute.xlu0 %3310
        %3312 = vrot.lane.b32.xlu0 %v3086, 113
        %v3313 = vpop.permute.xlu0 %3312
        %3314 = vrot.lane.b32.xlu0 %v3087, 113
        %v3315 = vpop.permute.xlu0 %3314
        %3316 = vrot.lane.b32.xlu0 %v3088, 113
        %v3317 = vpop.permute.xlu0 %3316
        %3318 = vrot.lane.b32.xlu0 %v3089, 113
        %v3319 = vpop.permute.xlu0 %3318
        %3320 = vrot.lane.b32.xlu0 %v3090, 113
        %v3321 = vpop.permute.xlu0 %3320
        %3322 = vrot.lane.b32.xlu0 %v3091, 113
        %v3323 = vpop.permute.xlu0 %3322
        %3324 = vrot.lane.b32.xlu0 %v3092, 113
        %v3325 = vpop.permute.xlu0 %3324
        %v3326 = vsel %vm1229, %v3303, %v3305
        %v3327 = vsel %vm1229, %v3305, %v3307
        %v3328 = vsel %vm1229, %v3309, %v3311
        %v3329 = vsel %vm1229, %v3311, %v3313
        %v3330 = vsel %vm1229, %v3315, %v3317
        %v3331 = vsel %vm1229, %v3317, %v3319
        %v3332 = vsel %vm1229, %v3321, %v3323
        %v3333 = vsel %vm1229, %v3323, %v3325
        %v3342 = vsel %vm1001, %v3326, 0.0
        %v3343 = vsel %vm1002, %v3327, 0.0
        %v3344 = vsel %vm1001, %v3328, 0.0
        %v3345 = vsel %vm1002, %v3329, 0.0
        %v3346 = vsel %vm1001, %v3330, 0.0
        %v3347 = vsel %vm1002, %v3331, 0.0
        %v3348 = vsel %vm1001, %v3332, 0.0
        %v3349 = vsel %vm1002, %v3333, 0.0
        %3350 = vrot.lane.b32.xlu0 %v3081, 111
        %v3351 = vpop.permute.xlu0 %3350
        %3352 = vrot.lane.b32.xlu0 %v3082, 111
        %v3353 = vpop.permute.xlu0 %3352
        %3354 = vrot.lane.b32.xlu0 %v3083, 111
        %v3355 = vpop.permute.xlu0 %3354
        %3356 = vrot.lane.b32.xlu0 %v3084, 111
        %v3357 = vpop.permute.xlu0 %3356
        %3358 = vrot.lane.b32.xlu0 %v3085, 111
        %v3359 = vpop.permute.xlu0 %3358
        %3360 = vrot.lane.b32.xlu0 %v3086, 111
        %v3361 = vpop.permute.xlu0 %3360
        %3362 = vrot.lane.b32.xlu0 %v3087, 111
        %v3363 = vpop.permute.xlu0 %3362
        %3364 = vrot.lane.b32.xlu0 %v3088, 111
        %v3365 = vpop.permute.xlu0 %3364
        %3366 = vrot.lane.b32.xlu0 %v3089, 111
        %v3367 = vpop.permute.xlu0 %3366
        %3368 = vrot.lane.b32.xlu0 %v3090, 111
        %v3369 = vpop.permute.xlu0 %3368
        %3370 = vrot.lane.b32.xlu0 %v3091, 111
        %v3371 = vpop.permute.xlu0 %3370
        %3372 = vrot.lane.b32.xlu0 %v3092, 111
        %v3373 = vpop.permute.xlu0 %3372
        %v3374 = vsel %vm1242, %v3351, %v3353
        %v3375 = vsel %vm1242, %v3353, %v3355
        %v3376 = vsel %vm1242, %v3357, %v3359
        %v3377 = vsel %vm1242, %v3359, %v3361
        %v3378 = vsel %vm1242, %v3363, %v3365
        %v3379 = vsel %vm1242, %v3365, %v3367
        %v3380 = vsel %vm1242, %v3369, %v3371
        %v3381 = vsel %vm1242, %v3371, %v3373
        %v3390 = vsel %vm1020, %v3374, 0.0
        %v3391 = vsel %vm1021, %v3375, 0.0
        %v3392 = vsel %vm1020, %v3376, 0.0
        %v3393 = vsel %vm1021, %v3377, 0.0
        %v3394 = vsel %vm1020, %v3378, 0.0
        %v3395 = vsel %vm1021, %v3379, 0.0
        %v3396 = vsel %vm1020, %v3380, 0.0
        %v3397 = vsel %vm1021, %v3381, 0.0
        %3398 = vrot.lane.b32.xlu0 %v3081, 112
        %v3399 = vpop.permute.xlu0 %3398
        %3400 = vrot.lane.b32.xlu0 %v3082, 112
        %v3401 = vpop.permute.xlu0 %3400
        %3402 = vrot.lane.b32.xlu0 %v3083, 112
        %v3403 = vpop.permute.xlu0 %3402
        %3404 = vrot.lane.b32.xlu0 %v3084, 112
        %v3405 = vpop.permute.xlu0 %3404
        %3406 = vrot.lane.b32.xlu0 %v3085, 112
        %v3407 = vpop.permute.xlu0 %3406
        %3408 = vrot.lane.b32.xlu0 %v3086, 112
        %v3409 = vpop.permute.xlu0 %3408
        %3410 = vrot.lane.b32.xlu0 %v3087, 112
        %v3411 = vpop.permute.xlu0 %3410
        %3412 = vrot.lane.b32.xlu0 %v3088, 112
        %v3413 = vpop.permute.xlu0 %3412
        %3414 = vrot.lane.b32.xlu0 %v3089, 112
        %v3415 = vpop.permute.xlu0 %3414
        %3416 = vrot.lane.b32.xlu0 %v3090, 112
        %v3417 = vpop.permute.xlu0 %3416
        %3418 = vrot.lane.b32.xlu0 %v3091, 112
        %v3419 = vpop.permute.xlu0 %3418
        %3420 = vrot.lane.b32.xlu0 %v3092, 112
        %v3421 = vpop.permute.xlu0 %3420
        %v3422 = vsel %vm1255, %v3399, %v3401
        %v3423 = vsel %vm1255, %v3401, %v3403
        %v3424 = vsel %vm1255, %v3405, %v3407
        %v3425 = vsel %vm1255, %v3407, %v3409
        %v3426 = vsel %vm1255, %v3411, %v3413
        %v3427 = vsel %vm1255, %v3413, %v3415
        %v3428 = vsel %vm1255, %v3417, %v3419
        %v3429 = vsel %vm1255, %v3419, %v3421
        %v3439 = vsel %vm3153, %v947, 0
        %3441 = vmatprep.subr.mxu0 %v3343
        %3442 = vmatpush1.msra.mxu0 %v3342
        %3443 = vmatprep.subr.mxu0 %v3345
        %3444 = vmatpush1.msra.mxu0 %v3344
        %3445 = vmatprep.subr.mxu0 %v3347
        %3446 = vmatpush1.msra.mxu0 %v3346
        %3447 = vmatprep.subr.mxu0 %v3349
        %3448 = vmatpush1.msra.mxu0 %v3348
        %3449 = vmatprep.subr.mxu0 %v3423
        %3450 = vmatpush1.msra.mxu0 %v3422
        %3451 = vmatprep.subr.mxu0 %v3425
        %3452 = vmatpush1.msra.mxu0 %v3424
        %3453 = vmatprep.subr.mxu0 %v3427
        %3454 = vmatpush1.msra.mxu0 %v3426
        %3455 = vmatprep.subr.mxu0 %v3429
        %3456 = vmatpush1.msra.mxu0 %v3428
        %3457 = vmatprep.subr.mxu0 %v3391
        %3458 = vmatpush1.msra.mxu0 %v3390
        %3459 = vmatprep.subr.mxu0 %v3393
        %3460 = vmatpush1.msra.mxu0 %v3392
        %3461 = vmatprep.subr.mxu0 %v3395
        %3462 = vmatpush1.msra.mxu0 %v3394
        %3463 = vmatprep.subr.mxu0 %v3397
        %3464 = vmatpush1.msra.mxu0 %v3396
        %3465 = vmatprep.subr.mxu0 0.0
        %3466 = vmatpush1.msra.mxu0 0.0
        %3467 = vmatprep.subr.mxu0 0.0
        %3468 = vmatpush1.msra.mxu0 0.0
        %3469 = vmatprep.subr.mxu0 0.0
        %3470 = vmatpush1.msra.mxu0 0.0
        %3471 = vmatprep.subr.mxu0 0.0
        %3472 = vmatpush1.msra.mxu0 0.0
        %3473 = vmatprep.subr.mxu0 0.0
        %3474 = vmatpush1.msra.mxu0 0.0
        %3475 = vmatprep.subr.mxu0 0.0
        %3476 = vmatpush1.msra.mxu0 0.0
        %3477 = vmatprep.subr.mxu0 0.0
        %3478 = vmatpush1.msra.mxu0 0.0
        %3479 = vmatprep.subr.mxu0 0.0
        %3480 = vmatpush1.msra.mxu0 0.0
        %3481 = vmatprep.subr.mxu0 0.0
        %3482 = vmatpush1.msra.mxu0 0.0
        %3483 = vmatprep.subr.mxu0 0.0
        %3484 = vmatpush1.msra.mxu0 0.0
        %3485 = vmatprep.subr.mxu0 0.0
        %3486 = vmatpush1.msra.mxu0 0.0
        %3487 = vmatprep.subr.mxu0 0.0
        %3488 = vmatpush1.msra.mxu0 0.0
        %3489 = vmatprep.subr.mxu0 0.0
        %3490 = vmatpush1.msra.mxu0 0.0
        %3491 = vmatprep.subr.mxu0 0.0
        %3492 = vmatpush1.msra.mxu0 0.0
        %3493 = vmatprep.subr.mxu0 0.0
        %3494 = vmatpush1.msra.mxu0 0.0
        %3495 = vmatprep.subr.mxu0 0.0
        %3496 = vmatpush1.msra.mxu0 0.0
        %3497 = vmatprep.subr.mxu0 0.0
        %3498 = vmatpush1.msra.mxu0 0.0
        %3499 = vmatprep.subr.mxu0 0.0
        %3500 = vmatpush1.msra.mxu0 0.0
        %3501 = vmatprep.subr.mxu0 0.0
        %3502 = vmatpush1.msra.mxu0 0.0
        %3503 = vmatprep.subr.mxu0 0.0
        %3504 = vmatpush1.msra.mxu0 0.0
        %3505 = vmatprep.mubr.f32.mxu0 0.0
        %3506 = vmatmul.mubr.f32.gmra.mrb[0].mxu0 %v3439
        %v3507 = vpop.f32.mrb[0].mxu0
        %v3508 = vadd.f32 0.0, %v3507
        %v3509 = vpop.f32.mrb[0].mxu0
        %v3510 = vadd.f32 0.0, %v3509
        %3511 = vdwg.mxu0
        %v3512 = vadd.f32 %v3298, %v3508
        %v3513 = vadd.f32 %v3300, %v3510
        %3515 = vset.pattern.permute.xlu0 0
        %3516 = vperm.xlu0 %3515, %v948
        %v3517 = vpop.permute.xlu0 %3516
        %v3519 = vmul.f32 %v3512, %v3517
        %v3520 = vmul.f32 %v3513, %v3517
        %3522 = vset.pattern.permute.xlu0 0
        %3523 = vperm.xlu0 %3522, %v949
        %v3524 = vpop.permute.xlu0 %3523
        %v3526 = vadd.f32 %v3519, %v3524
        %v3527 = vadd.f32 %v3520, %v3524
        %vm3528 = vcmp.gt.f32.partialorder %v3526, 0.0
        %vm3529 = vcmp.gt.f32.partialorder %v3527, 0.0
        %v3530 = vmul.f32 %v3526, 0.1
        %v3531 = vmul.f32 %v3527, 0.1
        %v3532 = vsel %vm3528, %v3526, %v3530
        %v3533 = vsel %vm3529, %v3527, %v3531
        %3534 = vst [vmem:[#allocation2 + $0x8] sm:$0xff] %v3532
        %3535 = vst [vmem:[#allocation2 + $0x10] sm:$0xff] %v3533
        %3536 = vst.msk [vmem:[#allocation2 + $0x18] sm:$0xff] %vm994, 0.0
        %v3537 = vld [vmem:[#allocation2] sm:$0xff]
        %v3538 = vld [vmem:[#allocation2 + $0x8] sm:$0xff]
        %v3539 = vld [vmem:[#allocation2 + $0x10] sm:$0xff]
        %3543 = vrot.lane.b32.xlu0 %v3537, 17
        %v3544 = vpop.permute.xlu0 %3543
        %3545 = vrot.lane.b32.xlu0 %v3538, 17
        %v3546 = vpop.permute.xlu0 %3545
        %3547 = vrot.lane.b32.xlu0 %v3539, 17
        %v3548 = vpop.permute.xlu0 %3547
        %v3549 = vsel %vm994, %v3544, %v3546
        %v3550 = vsel %vm994, %v3546, %v3548
        %v3553 = vsel %vm1001, %v3549, 0.0
        %v3554 = vsel %vm1002, %v3550, 0.0
        %3555 = vrot.lane.b32.xlu0 %v3537, 15
        %v3556 = vpop.permute.xlu0 %3555
        %3557 = vrot.lane.b32.xlu0 %v3538, 15
        %v3558 = vpop.permute.xlu0 %3557
        %3559 = vrot.lane.b32.xlu0 %v3539, 15
        %v3560 = vpop.permute.xlu0 %3559
        %v3561 = vsel %vm1028, %v3556, %v3558
        %v3562 = vsel %vm1028, %v3558, %v3560
        %v3565 = vsel %vm1020, %v3561, 0.0
        %v3566 = vsel %vm1021, %v3562, 0.0
        %3567 = vrot.lane.b32.xlu0 %v3537, 16
        %v3568 = vpop.permute.xlu0 %3567
        %3569 = vrot.lane.b32.xlu0 %v3538, 16
        %v3570 = vpop.permute.xlu0 %3569
        %3571 = vrot.lane.b32.xlu0 %v3539, 16
        %v3572 = vpop.permute.xlu0 %3571
        %v3573 = vsel %vm1041, %v3568, %v3570
        %v3574 = vsel %vm1041, %v3570, %v3572
        %3577 = vrot.lane.b32.xlu0 %v3537, 1
        %v3578 = vpop.permute.xlu0 %3577
        %3579 = vrot.lane.b32.xlu0 %v3538, 1
        %v3580 = vpop.permute.xlu0 %3579
        %3581 = vrot.lane.b32.xlu0 %v3539, 1
        %v3582 = vpop.permute.xlu0 %3581
        %v3583 = vsel %vm1052, %v3578, %v3580
        %v3584 = vsel %vm1052, %v3580, %v3582
        %v3587 = vsel %vm1001, %v3583, 0.0
        %v3588 = vsel %vm1002, %v3584, 0.0
        %v3589 = vld [vmem:[#allocation2 + $0x18] sm:$0xff]
        %3591 = vrot.lane.b32.xlu0 %v3538, 127
        %v3592 = vpop.permute.xlu0 %3591
        %3593 = vrot.lane.b32.xlu0 %v3539, 127
        %v3594 = vpop.permute.xlu0 %3593
        %3595 = vrot.lane.b32.xlu0 %v3589, 127
        %v3596 = vpop.permute.xlu0 %3595
        %v3597 = vsel %vm1067, %v3592, %v3594
        %v3598 = vsel %vm1067, %v3594, %v3596
        %v3601 = vsel %vm1020, %v3597, 0.0
        %v3602 = vsel %vm1021, %v3598, 0.0
        %v3604 = vsel %vm1074, %v952, 0
        %3606 = vmatprep.subr.mxu0 %v3588
        %3607 = vmatpush1.msra.mxu0 %v3587
        %3608 = vmatprep.subr.mxu0 %v3539
        %3609 = vmatpush1.msra.mxu0 %v3538
        %3610 = vmatprep.subr.mxu0 %v3602
        %3611 = vmatpush1.msra.mxu0 %v3601
        %3612 = vmatprep.subr.mxu0 0.0
        %3613 = vmatpush1.msra.mxu0 0.0
        %3614 = vmatprep.subr.mxu0 0.0
        %3615 = vmatpush1.msra.mxu0 0.0
        %3616 = vmatprep.subr.mxu0 0.0
        %3617 = vmatpush1.msra.mxu0 0.0
        %3618 = vmatprep.subr.mxu0 0.0
        %3619 = vmatpush1.msra.mxu0 0.0
        %3620 = vmatprep.subr.mxu0 0.0
        %3621 = vmatpush1.msra.mxu0 0.0
        %3622 = vmatprep.subr.mxu0 0.0
        %3623 = vmatpush1.msra.mxu0 0.0
        %3624 = vmatprep.subr.mxu0 0.0
        %3625 = vmatpush1.msra.mxu0 0.0
        %3626 = vmatprep.subr.mxu0 0.0
        %3627 = vmatpush1.msra.mxu0 0.0
        %3628 = vmatprep.subr.mxu0 0.0
        %3629 = vmatpush1.msra.mxu0 0.0
        %3630 = vmatprep.subr.mxu0 0.0
        %3631 = vmatpush1.msra.mxu0 0.0
        %3632 = vmatprep.subr.mxu0 0.0
        %3633 = vmatpush1.msra.mxu0 0.0
        %3634 = vmatprep.subr.mxu0 0.0
        %3635 = vmatpush1.msra.mxu0 0.0
        %3636 = vmatprep.subr.mxu0 0.0
        %3637 = vmatpush1.msra.mxu0 0.0
        %3638 = vmatprep.subr.mxu0 0.0
        %3639 = vmatpush1.msra.mxu0 0.0
        %3640 = vmatprep.subr.mxu0 0.0
        %3641 = vmatpush1.msra.mxu0 0.0
        %3642 = vmatprep.subr.mxu0 0.0
        %3643 = vmatpush1.msra.mxu0 0.0
        %3644 = vmatprep.subr.mxu0 0.0
        %3645 = vmatpush1.msra.mxu0 0.0
        %3646 = vmatprep.subr.mxu0 0.0
        %3647 = vmatpush1.msra.mxu0 0.0
        %3648 = vmatprep.subr.mxu0 0.0
        %3649 = vmatpush1.msra.mxu0 0.0
        %3650 = vmatprep.subr.mxu0 0.0
        %3651 = vmatpush1.msra.mxu0 0.0
        %3652 = vmatprep.subr.mxu0 0.0
        %3653 = vmatpush1.msra.mxu0 0.0
        %3654 = vmatprep.subr.mxu0 0.0
        %3655 = vmatpush1.msra.mxu0 0.0
        %3656 = vmatprep.subr.mxu0 0.0
        %3657 = vmatpush1.msra.mxu0 0.0
        %3658 = vmatprep.subr.mxu0 0.0
        %3659 = vmatpush1.msra.mxu0 0.0
        %3660 = vmatprep.subr.mxu0 0.0
        %3661 = vmatpush1.msra.mxu0 0.0
        %3662 = vmatprep.subr.mxu0 0.0
        %3663 = vmatpush1.msra.mxu0 0.0
        %3664 = vmatprep.subr.mxu0 0.0
        %3665 = vmatpush1.msra.mxu0 0.0
        %3666 = vmatprep.subr.mxu0 0.0
        %3667 = vmatpush1.msra.mxu0 0.0
        %3668 = vmatprep.subr.mxu0 0.0
        %3669 = vmatpush1.msra.mxu0 0.0
        %3670 = vmatprep.mubr.f32.mxu0 0.0
        %3671 = vmatmul.mubr.f32.gmra.mrb[0].mxu0 %v3604
        %v3672 = vpop.f32.mrb[0].mxu0
        %v3673 = vadd.f32 0.0, %v3672
        %v3674 = vpop.f32.mrb[0].mxu0
        %v3675 = vadd.f32 0.0, %v3674
        %3676 = vdwg.mxu0
        %v3678 = vsel %vm1074, %v950, 0
        %3680 = vmatprep.subr.mxu0 %v3554
        %3681 = vmatpush1.msra.mxu0 %v3553
        %3682 = vmatprep.subr.mxu0 %v3574
        %3683 = vmatpush1.msra.mxu0 %v3573
        %3684 = vmatprep.subr.mxu0 %v3566
        %3685 = vmatpush1.msra.mxu0 %v3565
        %3686 = vmatprep.subr.mxu0 0.0
        %3687 = vmatpush1.msra.mxu0 0.0
        %3688 = vmatprep.subr.mxu0 0.0
        %3689 = vmatpush1.msra.mxu0 0.0
        %3690 = vmatprep.subr.mxu0 0.0
        %3691 = vmatpush1.msra.mxu0 0.0
        %3692 = vmatprep.subr.mxu0 0.0
        %3693 = vmatpush1.msra.mxu0 0.0
        %3694 = vmatprep.subr.mxu0 0.0
        %3695 = vmatpush1.msra.mxu0 0.0
        %3696 = vmatprep.subr.mxu0 0.0
        %3697 = vmatpush1.msra.mxu0 0.0
        %3698 = vmatprep.subr.mxu0 0.0
        %3699 = vmatpush1.msra.mxu0 0.0
        %3700 = vmatprep.subr.mxu0 0.0
        %3701 = vmatpush1.msra.mxu0 0.0
        %3702 = vmatprep.subr.mxu0 0.0
        %3703 = vmatpush1.msra.mxu0 0.0
        %3704 = vmatprep.subr.mxu0 0.0
        %3705 = vmatpush1.msra.mxu0 0.0
        %3706 = vmatprep.subr.mxu0 0.0
        %3707 = vmatpush1.msra.mxu0 0.0
        %3708 = vmatprep.subr.mxu0 0.0
        %3709 = vmatpush1.msra.mxu0 0.0
        %3710 = vmatprep.subr.mxu0 0.0
        %3711 = vmatpush1.msra.mxu0 0.0
        %3712 = vmatprep.subr.mxu0 0.0
        %3713 = vmatpush1.msra.mxu0 0.0
        %3714 = vmatprep.subr.mxu0 0.0
        %3715 = vmatpush1.msra.mxu0 0.0
        %3716 = vmatprep.subr.mxu0 0.0
        %3717 = vmatpush1.msra.mxu0 0.0
        %3718 = vmatprep.subr.mxu0 0.0
        %3719 = vmatpush1.msra.mxu0 0.0
        %3720 = vmatprep.subr.mxu0 0.0
        %3721 = vmatpush1.msra.mxu0 0.0
        %3722 = vmatprep.subr.mxu0 0.0
        %3723 = vmatpush1.msra.mxu0 0.0
        %3724 = vmatprep.subr.mxu0 0.0
        %3725 = vmatpush1.msra.mxu0 0.0
        %3726 = vmatprep.subr.mxu0 0.0
        %3727 = vmatpush1.msra.mxu0 0.0
        %3728 = vmatprep.subr.mxu0 0.0
        %3729 = vmatpush1.msra.mxu0 0.0
        %3730 = vmatprep.subr.mxu0 0.0
        %3731 = vmatpush1.msra.mxu0 0.0
        %3732 = vmatprep.subr.mxu0 0.0
        %3733 = vmatpush1.msra.mxu0 0.0
        %3734 = vmatprep.subr.mxu0 0.0
        %3735 = vmatpush1.msra.mxu0 0.0
        %3736 = vmatprep.subr.mxu0 0.0
        %3737 = vmatpush1.msra.mxu0 0.0
        %3738 = vmatprep.subr.mxu0 0.0
        %3739 = vmatpush1.msra.mxu0 0.0
        %3740 = vmatprep.subr.mxu0 0.0
        %3741 = vmatpush1.msra.mxu0 0.0
        %3742 = vmatprep.subr.mxu0 0.0
        %3743 = vmatpush1.msra.mxu0 0.0
        %3744 = vmatprep.mubr.f32.mxu0 0.0
        %3745 = vmatmul.mubr.f32.gmra.mrb[0].mxu0 %v3678
        %v3746 = vpop.f32.mrb[0].mxu0
        %v3747 = vadd.f32 %v3673, %v3746
        %v3748 = vpop.f32.mrb[0].mxu0
        %v3749 = vadd.f32 %v3675, %v3748
        %3750 = vdwg.mxu0
        %3751 = vrot.lane.b32.xlu0 %v3538, 113
        %v3752 = vpop.permute.xlu0 %3751
        %3753 = vrot.lane.b32.xlu0 %v3539, 113
        %v3754 = vpop.permute.xlu0 %3753
        %3755 = vrot.lane.b32.xlu0 %v3589, 113
        %v3756 = vpop.permute.xlu0 %3755
        %v3757 = vsel %vm1229, %v3752, %v3754
        %v3758 = vsel %vm1229, %v3754, %v3756
        %v3761 = vsel %vm1001, %v3757, 0.0
        %v3762 = vsel %vm1002, %v3758, 0.0
        %3763 = vrot.lane.b32.xlu0 %v3538, 111
        %v3764 = vpop.permute.xlu0 %3763
        %3765 = vrot.lane.b32.xlu0 %v3539, 111
        %v3766 = vpop.permute.xlu0 %3765
        %3767 = vrot.lane.b32.xlu0 %v3589, 111
        %v3768 = vpop.permute.xlu0 %3767
        %v3769 = vsel %vm1242, %v3764, %v3766
        %v3770 = vsel %vm1242, %v3766, %v3768
        %v3773 = vsel %vm1020, %v3769, 0.0
        %v3774 = vsel %vm1021, %v3770, 0.0
        %3775 = vrot.lane.b32.xlu0 %v3538, 112
        %v3776 = vpop.permute.xlu0 %3775
        %3777 = vrot.lane.b32.xlu0 %v3539, 112
        %v3778 = vpop.permute.xlu0 %3777
        %3779 = vrot.lane.b32.xlu0 %v3589, 112
        %v3780 = vpop.permute.xlu0 %3779
        %v3781 = vsel %vm1255, %v3776, %v3778
        %v3782 = vsel %vm1255, %v3778, %v3780
        %v3786 = vsel %vm1074, %v954, 0
        %3788 = vmatprep.subr.mxu0 %v3762
        %3789 = vmatpush1.msra.mxu0 %v3761
        %3790 = vmatprep.subr.mxu0 %v3782
        %3791 = vmatpush1.msra.mxu0 %v3781
        %3792 = vmatprep.subr.mxu0 %v3774
        %3793 = vmatpush1.msra.mxu0 %v3773
        %3794 = vmatprep.subr.mxu0 0.0
        %3795 = vmatpush1.msra.mxu0 0.0
        %3796 = vmatprep.subr.mxu0 0.0
        %3797 = vmatpush1.msra.mxu0 0.0
        %3798 = vmatprep.subr.mxu0 0.0
        %3799 = vmatpush1.msra.mxu0 0.0
        %3800 = vmatprep.subr.mxu0 0.0
        %3801 = vmatpush1.msra.mxu0 0.0
        %3802 = vmatprep.subr.mxu0 0.0
        %3803 = vmatpush1.msra.mxu0 0.0
        %3804 = vmatprep.subr.mxu0 0.0
        %3805 = vmatpush1.msra.mxu0 0.0
        %3806 = vmatprep.subr.mxu0 0.0
        %3807 = vmatpush1.msra.mxu0 0.0
        %3808 = vmatprep.subr.mxu0 0.0
        %3809 = vmatpush1.msra.mxu0 0.0
        %3810 = vmatprep.subr.mxu0 0.0
        %3811 = vmatpush1.msra.mxu0 0.0
        %3812 = vmatprep.subr.mxu0 0.0
        %3813 = vmatpush1.msra.mxu0 0.0
        %3814 = vmatprep.subr.mxu0 0.0
        %3815 = vmatpush1.msra.mxu0 0.0
        %3816 = vmatprep.subr.mxu0 0.0
        %3817 = vmatpush1.msra.mxu0 0.0
        %3818 = vmatprep.subr.mxu0 0.0
        %3819 = vmatpush1.msra.mxu0 0.0
        %3820 = vmatprep.subr.mxu0 0.0
        %3821 = vmatpush1.msra.mxu0 0.0
        %3822 = vmatprep.subr.mxu0 0.0
        %3823 = vmatpush1.msra.mxu0 0.0
        %3824 = vmatprep.subr.mxu0 0.0
        %3825 = vmatpush1.msra.mxu0 0.0
        %3826 = vmatprep.subr.mxu0 0.0
        %3827 = vmatpush1.msra.mxu0 0.0
        %3828 = vmatprep.subr.mxu0 0.0
        %3829 = vmatpush1.msra.mxu0 0.0
        %3830 = vmatprep.subr.mxu0 0.0
        %3831 = vmatpush1.msra.mxu0 0.0
        %3832 = vmatprep.subr.mxu0 0.0
        %3833 = vmatpush1.msra.mxu0 0.0
        %3834 = vmatprep.subr.mxu0 0.0
        %3835 = vmatpush1.msra.mxu0 0.0
        %3836 = vmatprep.subr.mxu0 0.0
        %3837 = vmatpush1.msra.mxu0 0.0
        %3838 = vmatprep.subr.mxu0 0.0
        %3839 = vmatpush1.msra.mxu0 0.0
        %3840 = vmatprep.subr.mxu0 0.0
        %3841 = vmatpush1.msra.mxu0 0.0
        %3842 = vmatprep.subr.mxu0 0.0
        %3843 = vmatpush1.msra.mxu0 0.0
        %3844 = vmatprep.subr.mxu0 0.0
        %3845 = vmatpush1.msra.mxu0 0.0
        %3846 = vmatprep.subr.mxu0 0.0
        %3847 = vmatpush1.msra.mxu0 0.0
        %3848 = vmatprep.subr.mxu0 0.0
        %3849 = vmatpush1.msra.mxu0 0.0
        %3850 = vmatprep.subr.mxu0 0.0
        %3851 = vmatpush1.msra.mxu0 0.0
        %3852 = vmatprep.mubr.f32.mxu0 0.0
        %3853 = vmatmul.mubr.f32.gmra.mrb[0].mxu0 %v3786
        %v3854 = vpop.f32.mrb[0].mxu0
        %v3855 = vadd.f32 0.0, %v3854
        %v3856 = vpop.f32.mrb[0].mxu0
        %v3857 = vadd.f32 0.0, %v3856
        %3858 = vdwg.mxu0
        %v3859 = vadd.f32 %v3747, %v3855
        %v3860 = vadd.f32 %v3749, %v3857
        %3862 = vset.pattern.permute.xlu0 0
        %3863 = vperm.xlu0 %3862, %v955
        %v3864 = vpop.permute.xlu0 %3863
        %v3866 = vmul.f32 %v3859, %v3864
        %v3867 = vmul.f32 %v3860, %v3864
        %3869 = vset.pattern.permute.xlu0 0
        %3870 = vperm.xlu0 %3869, %v956
        %v3871 = vpop.permute.xlu0 %3870
        %v3873 = vadd.f32 %v3866, %v3871
        %v3874 = vadd.f32 %v3867, %v3871
        %vm3875 = vcmp.gt.f32.partialorder %v3873, 0.0
        %vm3876 = vcmp.gt.f32.partialorder %v3874, 0.0
        %v3877 = vmul.f32 %v3873, 0.1
        %v3878 = vmul.f32 %v3874, 0.1
        %v3879 = vsel %vm3875, %v3873, %v3877
        %v3880 = vsel %vm3876, %v3874, %v3878
        %3882 = vset.pattern.permute.xlu0 0
        %3883 = vperm.xlu0 %3882, %v958
        %v3884 = vpop.permute.xlu0 %3883
        %v3887 = vsel %vm1909, %v957, 0
        %v3890 = vsel %vm2785, %v3879, 0
        %v3893 = vsel %vm2785, %v3880, 0
        %3895 = vmatprep.subr.mxu0 %v3893
        %3896 = vmatpush1.msra.mxu0 %v3890
        %3897 = vmatprep.subr.mxu0 0.0
        %3898 = vmatpush1.msra.mxu0 0.0
        %3899 = vmatprep.subr.mxu0 0.0
        %3900 = vmatpush1.msra.mxu0 0.0
        %3901 = vmatprep.subr.mxu0 0.0
        %3902 = vmatpush1.msra.mxu0 0.0
        %3903 = vmatprep.subr.mxu0 0.0
        %3904 = vmatpush1.msra.mxu0 0.0
        %3905 = vmatprep.subr.mxu0 0.0
        %3906 = vmatpush1.msra.mxu0 0.0
        %3907 = vmatprep.subr.mxu0 0.0
        %3908 = vmatpush1.msra.mxu0 0.0
        %3909 = vmatprep.subr.mxu0 0.0
        %3910 = vmatpush1.msra.mxu0 0.0
        %3911 = vmatprep.subr.mxu0 0.0
        %3912 = vmatpush1.msra.mxu0 0.0
        %3913 = vmatprep.subr.mxu0 0.0
        %3914 = vmatpush1.msra.mxu0 0.0
        %3915 = vmatprep.subr.mxu0 0.0
        %3916 = vmatpush1.msra.mxu0 0.0
        %3917 = vmatprep.subr.mxu0 0.0
        %3918 = vmatpush1.msra.mxu0 0.0
        %3919 = vmatprep.subr.mxu0 0.0
        %3920 = vmatpush1.msra.mxu0 0.0
        %3921 = vmatprep.subr.mxu0 0.0
        %3922 = vmatpush1.msra.mxu0 0.0
        %3923 = vmatprep.subr.mxu0 0.0
        %3924 = vmatpush1.msra.mxu0 0.0
        %3925 = vmatprep.subr.mxu0 0.0
        %3926 = vmatpush1.msra.mxu0 0.0
        %3927 = vmatprep.subr.mxu0 0.0
        %3928 = vmatpush1.msra.mxu0 0.0
        %3929 = vmatprep.subr.mxu0 0.0
        %3930 = vmatpush1.msra.mxu0 0.0
        %3931 = vmatprep.subr.mxu0 0.0
        %3932 = vmatpush1.msra.mxu0 0.0
        %3933 = vmatprep.subr.mxu0 0.0
        %3934 = vmatpush1.msra.mxu0 0.0
        %3935 = vmatprep.subr.mxu0 0.0
        %3936 = vmatpush1.msra.mxu0 0.0
        %3937 = vmatprep.subr.mxu0 0.0
        %3938 = vmatpush1.msra.mxu0 0.0
        %3939 = vmatprep.subr.mxu0 0.0
        %3940 = vmatpush1.msra.mxu0 0.0
        %3941 = vmatprep.subr.mxu0 0.0
        %3942 = vmatpush1.msra.mxu0 0.0
        %3943 = vmatprep.subr.mxu0 0.0
        %3944 = vmatpush1.msra.mxu0 0.0
        %3945 = vmatprep.subr.mxu0 0.0
        %3946 = vmatpush1.msra.mxu0 0.0
        %3947 = vmatprep.subr.mxu0 0.0
        %3948 = vmatpush1.msra.mxu0 0.0
        %3949 = vmatprep.subr.mxu0 0.0
        %3950 = vmatpush1.msra.mxu0 0.0
        %3951 = vmatprep.subr.mxu0 0.0
        %3952 = vmatpush1.msra.mxu0 0.0
        %3953 = vmatprep.subr.mxu0 0.0
        %3954 = vmatpush1.msra.mxu0 0.0
        %3955 = vmatprep.subr.mxu0 0.0
        %3956 = vmatpush1.msra.mxu0 0.0
        %3957 = vmatprep.subr.mxu0 0.0
        %3958 = vmatpush1.msra.mxu0 0.0
        %3959 = vmatprep.mubr.f32.mxu0 0.0
        %3960 = vmatmul.mubr.f32.gmra.mrb[0].mxu0 %v3887
        %v3961 = vpop.f32.mrb[0].mxu0
        %v3962 = vadd.f32 %v3884, %v3961
        %v3963 = vpop.f32.mrb[0].mxu0
        %v3964 = vadd.f32 %v3884, %v3963
        %3965 = vdwg.mxu0
        %v3968 = vcombine.low %v3962, %v3964
        %3970 = vst [vmem:[%s878] sm:$0xff] %v3968
        %p3971 = scmp.lt.s32.totalorder %s44, 1
        %s3972 = scalar_select %p3971, %s44, 1
        %s3973 = smul.addr %s3972, 8
        %s3974 = smul.addr %s3973, 8
        %s3975 = scalar_lea.vmem %s20, %s3974
        %p3976 = scmp.lt.s32.totalorder %s44, 1
        %s3977 = scalar_select %p3976, %s44, 1
        %s3978 = smul.addr %s3977, 4
        %s3979 = smul.addr %s3978, 8
        %s3980 = scalar_lea.vmem %s21, %s3979
        %p3981 = scmp.lt.s32.totalorder %s44, 1
        %s3982 = scalar_select %p3981, %s44, 1
        %s3983 = smul.addr %s3982, 4
        %s3984 = smul.addr %s3983, 8
        %s3985 = scalar_lea.vmem %s22, %s3984
        %p3986 = scmp.lt.s32.totalorder %s44, 1
        %s3987 = scalar_select %p3986, %s44, 1
        %s3988 = smul.addr %s3987, 4
        %s3989 = smul.addr %s3988, 8
        %s3990 = scalar_lea.vmem %s23, %s3989
        %s3991 = sand.u32 %s596, 1
        %s3992 = scalar_lea.sflag [#allocation5], %s3991
        %s3993 = sand.u32 %s596, 1
        %s3994 = smul.addr %s3993, 8
        %s3995 = scalar_lea.vmem [#allocation12], %s3994
        // Predicated region
        $region121: #{tpu_custom_call.1} parent=99 // pred_check
          %p3996 = pneg %p502
        $region122: #{tpu_custom_call.1} parent=99 // pred_check_branch
          %3998 = sbr.rel (%p3996) target = $region124
        $region123: #{tpu_custom_call.1} parent=99 // pred_region
          _
        $region124: #{tpu_custom_call.1} parent=99 // pred_fallthru
          _
        // Predicated region
        $region125: #{tpu_custom_call.1} parent=99 // pred_check
          %p3999 = pneg %p528
        $region126: #{tpu_custom_call.1} parent=99 // pred_check_branch
          %4001 = sbr.rel (%p3999) target = $region128
        $region127: #{tpu_custom_call.1} parent=99 // pred_region
          _
        $region128: #{tpu_custom_call.1} parent=99 // pred_fallthru
          _
        // Predicated region
        $region129: #{tpu_custom_call.1} parent=99 // pred_check
          %p4002 = pneg %p554
        $region130: #{tpu_custom_call.1} parent=99 // pred_check_branch
          %4004 = sbr.rel (%p4002) target = $region132
        $region131: #{tpu_custom_call.1} parent=99 // pred_region
          _
        $region132: #{tpu_custom_call.1} parent=99 // pred_fallthru
          _
        // Predicated region
        $region133: #{tpu_custom_call.1} parent=99 // pred_check
          %p4005 = pneg %p580
        $region134: #{tpu_custom_call.1} parent=99 // pred_check_branch
          %4007 = sbr.rel (%p4005) target = $region136
        $region135: #{tpu_custom_call.1} parent=99 // pred_region
          _
        $region136: #{tpu_custom_call.1} parent=99 // pred_fallthru
          _
        // Predicated region
        $region137: #{tpu_custom_call.1} parent=99 // pred_check
          %p4008 = pneg %p606
        $region138: #{tpu_custom_call.1} parent=99 // pred_check_branch
          %4010 = sbr.rel (%p4008) target = $region140
        $region139: #{tpu_custom_call.1} parent=99 // pred_region
          %s4012 = ssub.s32 128, 128
          %4013 = vsyncadd %s3992, %s4012
          %s4014 = smul.addr %s44, 2
          %s4015 = smul.addr %s4014, 64
          %s4016 = scalar_lea.hbm %s24, %s4015
          %s4018 = sshll.u32 %s3995, 4
          %s4019 = int_to_ptr.vmem [resolvable:$true] %s4018
          %4021 = dma.vmem_to_hbm [thread:$0]  %s4019, 128, %s4016, %s3992
        $region140: #{tpu_custom_call.1} parent=99 // pred_fallthru
          _
      $region100: #{tpu_custom_call.1} parent=5 // pred_fallthru
        _
      %p4022 = scmp.le.s32.totalorder 2, %s39
      // Predicated region
      $region141: #{tpu_custom_call.1} parent=5 // pred_check
        %p4023 = pneg %p4022
      $region142: #{tpu_custom_call.1} parent=5 // pred_check_branch
        %4025 = sbr.rel (%p4023) target = $region144
      $region143: #{tpu_custom_call.1} parent=5 // pred_region
        %s4026 = ssub.s32 %s39, 2
        // Predicated region
        $region145: #{tpu_custom_call.1} parent=143 // pred_check
          %p4027 = pneg %p508
        $region146: #{tpu_custom_call.1} parent=143 // pred_check_branch
          %4029 = sbr.rel (%p4027) target = $region148
        $region147: #{tpu_custom_call.1} parent=143 // pred_region
          %p4030 = scmp.lt.s32.totalorder %s45, 1
          %s4031 = scalar_select %p4030, %s45, 1
          %s4032 = smul.addr %s4031, 8
          %s4033 = smul.addr %s4032, 8
          %s4034 = scalar_lea.vmem %s20, %s4033
        $region148: #{tpu_custom_call.1} parent=143 // pred_fallthru
          _
        // Predicated region
        $region149: #{tpu_custom_call.1} parent=143 // pred_check
          %p4035 = pneg %p534
        $region150: #{tpu_custom_call.1} parent=143 // pred_check_branch
          %4037 = sbr.rel (%p4035) target = $region152
        $region151: #{tpu_custom_call.1} parent=143 // pred_region
          %p4038 = scmp.lt.s32.totalorder %s45, 1
          %s4039 = scalar_select %p4038, %s45, 1
          %s4040 = smul.addr %s4039, 4
          %s4041 = smul.addr %s4040, 8
          %s4042 = scalar_lea.vmem %s21, %s4041
        $region152: #{tpu_custom_call.1} parent=143 // pred_fallthru
          _
        // Predicated region
        $region153: #{tpu_custom_call.1} parent=143 // pred_check
          %p4043 = pneg %p560
        $region154: #{tpu_custom_call.1} parent=143 // pred_check_branch
          %4045 = sbr.rel (%p4043) target = $region156
        $region155: #{tpu_custom_call.1} parent=143 // pred_region
          %p4046 = scmp.lt.s32.totalorder %s45, 1
          %s4047 = scalar_select %p4046, %s45, 1
          %s4048 = smul.addr %s4047, 4
          %s4049 = smul.addr %s4048, 8
          %s4050 = scalar_lea.vmem %s22, %s4049
        $region156: #{tpu_custom_call.1} parent=143 // pred_fallthru
          _
        // Predicated region
        $region157: #{tpu_custom_call.1} parent=143 // pred_check
          %p4051 = pneg %p586
        $region158: #{tpu_custom_call.1} parent=143 // pred_check_branch
          %4053 = sbr.rel (%p4051) target = $region160
        $region159: #{tpu_custom_call.1} parent=143 // pred_region
          %p4054 = scmp.lt.s32.totalorder %s45, 1
          %s4055 = scalar_select %p4054, %s45, 1
          %s4056 = smul.addr %s4055, 4
          %s4057 = smul.addr %s4056, 8
          %s4058 = scalar_lea.vmem %s23, %s4057
        $region160: #{tpu_custom_call.1} parent=143 // pred_fallthru
          _
        // Predicated region
        $region161: #{tpu_custom_call.1} parent=143 // pred_check
          %p4059 = pneg %p612
        $region162: #{tpu_custom_call.1} parent=143 // pred_check_branch
          %4061 = sbr.rel (%p4059) target = $region164
        $region163: #{tpu_custom_call.1} parent=143 // pred_region
          %s4062 = sand.u32 %s597, 1
          %s4063 = scalar_lea.sflag [#allocation5], %s4062
          %s4064 = sand.u32 %s597, 1
          %s4065 = smul.addr %s4064, 8
          %s4066 = scalar_lea.vmem [#allocation12], %s4065
          %4067 = dma.done %s4063, 128
        $region164: #{tpu_custom_call.1} parent=143 // pred_fallthru
          _
      $region144: #{tpu_custom_call.1} parent=5 // pred_fallthru
        _
    $region6: #{tpu_custom_call.1} parent=1 // loop_footer
      %s43 = sadd.s32 1, %s39
    $region7: #{tpu_custom_call.1} parent=1 // loop_footer_branch
      %38 = sbr.rel target = $region3
    $region8: #{tpu_custom_call.1} parent=1 // loop_exit
      _
    %4068 = vsyncpa [#allocation4], 1
    %s4069 = scalar_lea.sflag [#allocation4], 1
    %4070 = vsyncpa %s4069, 1
    %4071 = vsyncpa [#allocation7], 1
    %4072 = vsyncpa [#allocation10], 1
    %4073 = vsyncpa [#allocation5], 1
    %s4074 = scalar_lea.sflag [#allocation5], 1
    %4075 = vsyncpa %s4074, 1

</llo_original>
